<compile_context>
chip_gen: v6e
topology: v6e:2x2x1
jax: 0.10.0
libtpu: 0.0.40
codegen_flags: <defaults>
</compile_context>

<pallas_src>
import math

import jax
import jax.numpy as jnp
from jax import lax
from jax.experimental import pallas as pl
from jax.experimental.pallas import tpu as pltpu


def incidence_kernel(ab_ref, x_ref, sel_ref, o_ref):
    # ab_ref : SMEM (2,) f32 -> [alpha, beta] (collapsed affine MLP)
    # x_ref  : VMEM (TR, WIDTH) f32, lane-dense; each row packs G instances of length L
    # sel_ref: VMEM (WIDTH, G) f32 one-hot segment selector (sel[w, g] = 1 iff w//L == g)
    # o_ref  : VMEM (TR, G) f32, one value per instance
    alpha = ab_ref[0]
    beta = ab_ref[1]

    x = x_ref[...]                                           # (TR, WIDTH)
    sel = sel_ref[...]                                       # (WIDTH, G)

    # Segment sums on the MXU (exact f32 via HIGHEST precision); VPU does x*x only.
    s = jnp.dot(x, sel, precision=lax.Precision.HIGHEST,
                preferred_element_type=jnp.float32)          # (TR, G): sum(x) per instance
    q = jnp.dot(x * x, sel, precision=lax.Precision.HIGHEST,
                preferred_element_type=jnp.float32)          # (TR, G): sum(x^2) per instance

    # out = sum((alpha*norm + beta) * norm) = alpha * q / s^2 + beta   (sum(norm) == 1)
    o_ref[...] = alpha * (q / (s * s)) + beta


def _group_width(L):
    """Instances packed per lane-dense row: smallest G with G*L % 128 == 0, then
    widened (up to G<=64) so the per-instance (TR, G) math wastes fewer lanes."""
    g = 128 // math.gcd(L, 128)
    while g * L < 512 and g < 64:
        g *= 2
    return g


def _choose_tile_rows(R, width):
    """Rows per block, sized by a byte budget (review: 2-8 MiB raw per step)."""
    target_bytes = 6 << 20            # ~6 MiB of raw input per grid step
    vmem_budget = 24 << 20            # 2 x (input + lane-padded output) buffers, < 32 MiB limit
    per_row = 2 * (width + 128) * 4   # double-buffered input row + 128-lane-padded output row
    tr = int(min(target_bytes // (width * 4), vmem_budget // per_row))
    tr = max(8, tr)
    if tr >= R:
        # Single (or near-single) block; keep the matmul sublane-aligned.
        return R if R % 8 == 0 else (R // 8) * 8
    tr = (tr // 8) * 8
    # Prefer an even number of grid steps so v7x megacore splits evenly across 2 TCs.
    steps = pl.cdiv(R, tr)
    if steps > 1 and steps % 2 == 1:
        steps += 1
        tr = max(8, ((pl.cdiv(R, steps) + 7) // 8) * 8)
    return tr


def incidence_convolution(inc_m, params):
    """inc_m: (B, N, 1, L) float32 -> (B, N) float32."""
    B, N, _, L = inc_m.shape
    M = B * N
    W1, b1, W2, b2, W3, b3, W4, b4 = params
    hp = lax.Precision.HIGHEST

    # (1) Collapse the 4 affine layers: weight(z) = alpha*z + beta (exact, no activations).
    A = jnp.dot(W2, W1, precision=hp)
    A = jnp.dot(W3, A, precision=hp)
    alpha = jnp.dot(W4, A, precision=hp)[0, 0]
    t = jnp.dot(W2, b1, precision=hp) + b2
    t = jnp.dot(W3, t, precision=hp) + b3
    beta = (jnp.dot(W4, t, precision=hp) + b4)[0]
    ab = jnp.stack([alpha, beta]).astype(jnp.float32)        # (2,) -> SMEM

    # (2) Lane-dense grouped view of the natural row-major data: G instances per
    #     row of width G*L (multiple of 128).  Pure reshape when M % G == 0.
    G = _group_width(L)
    width = G * L
    Mp = ((M + G - 1) // G) * G
    Mp = max(Mp, 8 * G)                                      # >= 8 rows keeps MXU shapes aligned
    x = inc_m.astype(jnp.float32).reshape(M, L)              # TODO(synk): stream bf16 if producer allows
    if Mp != M:
        # Pad instances with 1.0 (finite outputs), sliced off below.  This
        # materializes a copy; producers should keep B*N a multiple of G.
        x = jnp.pad(x, ((0, Mp - M), (0, 0)), constant_values=1.0)
    R = Mp // G
    x = x.reshape(R, width)

    # One-hot segment selector: column g sums the L lanes of instance g in a row.
    sel = (jnp.arange(width, dtype=jnp.int32)[:, None] // L
           == jnp.arange(G, dtype=jnp.int32)[None, :]).astype(jnp.float32)

    tr = _choose_tile_rows(R, width)
    grid = (pl.cdiv(R, tr),)                                 # partial last block is fine

    cost = pl.CostEstimate(
        flops=int(4 * R * width * G + 3 * R * width),
        transcendentals=0,
        bytes_accessed=int(R * width * 4 + R * G * 4 + width * G * 4 + 8),
    )

    out = pl.pallas_call(
        incidence_kernel,
        out_shape=jax.ShapeDtypeStruct((R, G), jnp.float32),
        grid_spec=pltpu.PrefetchScalarGridSpec(
            num_scalar_prefetch=0,
            grid=grid,
            in_specs=[
                # alpha/beta live in SMEM for the whole call.
                pl.BlockSpec(memory_space=pltpu.MemorySpace.SMEM),
                # Lane-dense, HBM-contiguous data rows.
                pl.BlockSpec((tr, width), lambda i: (i, 0)),
                # Tiny resident selector (constant block index).
                pl.BlockSpec((width, G), lambda i: (0, 0)),
            ],
            out_specs=pl.BlockSpec((tr, G), lambda i: (i, 0)),
        ),
        compiler_params=pltpu.CompilerParams(
            dimension_semantics=("parallel",),
            vmem_limit_bytes=32 * 1024 * 1024,
        ),
        cost_estimate=cost,
    )(ab, x, sel)

    return out.reshape(-1)[:M].reshape(B, N)


def reference(inc_m, params):
    """Pure-JAX re-statement of the PyTorch forward (full 4-layer MLP)."""
    hp = lax.Precision.HIGHEST
    W1, b1, W2, b2, W3, b3, W4, b4 = params
    l = inc_m[:, :, 0, :]                                    # (B, N, L)
    norm = l / jnp.sum(l, axis=-1, keepdims=True)
    z = norm[..., None]                                      # (B, N, L, 1)
    h = jnp.dot(z, W1.T, precision=hp) + b1
    h = jnp.dot(h, W2.T, precision=hp) + b2
    h = jnp.dot(h, W3.T, precision=hp) + b3
    w = (jnp.dot(h, W4.T, precision=hp) + b4)[..., 0]        # (B, N, L)
    return jnp.sum(w * norm, axis=-1)                        # (B, N)


if __name__ == "__main__":
    # opt.num_feat -> N, opt.hidden -> H
    B, N, L, H = 2, 8, 16, 32

    key = jax.random.PRNGKey(0)
    k_in, k1, k2, k3, k4, k5, k6, k7, k8 = jax.random.split(key, 9)

    # Positive entries so each row behaves like an (unnormalized) distribution.
    inc_m = jax.random.uniform(k_in, (B, N, 1, L), jnp.float32, 0.1, 1.0)

    def linear_init(kw, kb, fan_in, fan_out):
        bound = 1.0 / (fan_in ** 0.5)
        Wm = jax.random.uniform(kw, (fan_out, fan_in), jnp.float32, -bound, bound)
        bv = jax.random.uniform(kb, (fan_out,), jnp.float32, -bound, bound)
        return Wm, bv

    W1, b1 = linear_init(k1, k2, 1, H)     # func1: Linear(1, H)
    W2, b2 = linear_init(k3, k4, H, H)     # func2: Linear(H, H)
    W3, b3 = linear_init(k5, k6, H, H)     # func3: Linear(H, H)
    W4, b4 = linear_init(k7, k8, H, 1)     # func4: Linear(H, 1)
    params = (W1, b1, W2, b2, W3, b3, W4, b4)

    out = jax.block_until_ready(incidence_convolution(inc_m, params))
    ref = jax.block_until_ready(reference(inc_m, params))

    assert out.shape == (B, N)
    if not jnp.allclose(out, ref, atol=1e-4, rtol=1e-4):
        raise AssertionError(f"mismatch: max abs err {jnp.max(jnp.abs(out - ref))}")

    print("KERNEL_OK")
</pallas_src>

<mosaic_0001>
module attributes {stable_mosaic.version = 11 : i64} {
  func.func @incidence_kernel(%arg0: i32, %arg1: memref<2xf32, #tpu.memory_space<smem>>, %arg2: memref<8x512xf32, #tpu.memory_space<vmem>>, %arg3: memref<512x32xf32, #tpu.memory_space<vmem>>, %arg4: memref<8x32xf32, #tpu.memory_space<vmem>>) attributes {dimension_semantics = [#tpu.dimension_semantics<parallel>], iteration_bounds = array<i64: 1>, scalar_prefetch = 0 : i64, scratch_operands = 0 : i64, tpu.core_type = #tpu.core_type<tc>, window_params = [{transform_indices = @transform_0, window_bounds = array<i64: 2>}, {transform_indices = @transform_1, window_bounds = array<i64: 8, 512>}, {pipeline_mode = #tpu.pipeline_mode<synchronous>, transform_indices = @transform_2, window_bounds = array<i64: 512, 32>}, {transform_indices = @transform_3, window_bounds = array<i64: 8, 32>}]} {
    %c0 = arith.constant 0 : index
    %0 = memref.load %arg1[%c0] : memref<2xf32, #tpu.memory_space<smem>>
    %c1 = arith.constant 1 : index
    %1 = memref.load %arg1[%c1] : memref<2xf32, #tpu.memory_space<smem>>
    %c0_0 = arith.constant 0 : index
    %c0_1 = arith.constant 0 : index
    %2 = vector.load %arg2[%c0_0, %c0_1] : memref<8x512xf32, #tpu.memory_space<vmem>>, vector<8x512xf32>
    %c0_2 = arith.constant 0 : index
    %c0_3 = arith.constant 0 : index
    %3 = vector.load %arg3[%c0_2, %c0_3] : memref<512x32xf32, #tpu.memory_space<vmem>>, vector<512x32xf32>
    %cst = arith.constant dense<0.000000e+00> : vector<8x32xf32>
    %4 = tpu.matmul %2, %3, %cst {dimension_numbers = #tpu.dot_dimension_numbers<[1], [0], [0], [1], [0, 0, 1, 1], [], []>, precision = #tpu.contract_precision<fp32>} : vector<8x512xf32>, vector<512x32xf32>, vector<8x32xf32> -> vector<8x32xf32>
    %5 = arith.mulf %2, %2 : vector<8x512xf32>
    %cst_4 = arith.constant dense<0.000000e+00> : vector<8x32xf32>
    %6 = tpu.matmul %5, %3, %cst_4 {dimension_numbers = #tpu.dot_dimension_numbers<[1], [0], [0], [1], [0, 0, 1, 1], [], []>, precision = #tpu.contract_precision<fp32>} : vector<8x512xf32>, vector<512x32xf32>, vector<8x32xf32> -> vector<8x32xf32>
    %7 = arith.mulf %4, %4 : vector<8x32xf32>
    %8 = arith.divf %6, %7 : vector<8x32xf32>
    %9 = vector.broadcast %0 : f32 to vector<8x32xf32>
    %10 = arith.mulf %9, %8 : vector<8x32xf32>
    %11 = vector.broadcast %1 : f32 to vector<8x32xf32>
    %12 = arith.addf %10, %11 : vector<8x32xf32>
    %c0_5 = arith.constant 0 : index
    %c0_6 = arith.constant 0 : index
    %13 = vector.load %arg4[%c0_5, %c0_6] : memref<8x32xf32, #tpu.memory_space<vmem>>, vector<8x32xf32>
    tpu.vector_store %arg4[%c0_5, %c0_6], %12 {strides = array<i32>} : memref<8x32xf32, #tpu.memory_space<vmem>>, vector<8x32xf32>,
    return
  }
  func.func @transform_0(%arg0: i32) -> i32 {
    %c0_i32 = arith.constant 0 : i32
    %c0_i32_0 = arith.constant 0 : i32
    return %c0_i32 : i32
  }
  func.func @transform_1(%arg0: i32) -> (i32, i32) {
    %c0_i32 = arith.constant 0 : i32
    %c0_i32_0 = arith.constant 0 : i32
    return %arg0, %c0_i32 : i32, i32
  }
  func.func @transform_2(%arg0: i32) -> (i32, i32) {
    %c0_i32 = arith.constant 0 : i32
    %c0_i32_0 = arith.constant 0 : i32
    %c0_i32_1 = arith.constant 0 : i32
    return %c0_i32, %c0_i32_0 : i32, i32
  }
  func.func @transform_3(%arg0: i32) -> (i32, i32) {
    %c0_i32 = arith.constant 0 : i32
    %c0_i32_0 = arith.constant 0 : i32
    return %arg0, %c0_i32 : i32, i32
  }
}

</mosaic_0001>

<llo_original>
// kernel: tpu_custom_call.1
$region0: #{tpu_custom_call.1}
  #allocation0 [shape = 'u32[]', space=smem, size = 0x4, offset = 0x4, fixed_abs, tag = 'smem constant byte address 0x4 - core index']
  #allocation1 [shape = 'u32[144,128]{1,0:T(1,128)}', space=vmem, size = 0x12000, scoped, tag = 'internal scratch']
  %s0 = inlined_call_operand.vmem [shape: f32[2], index: 0, kind: input, shape index: {}]
  %s1 = inlined_call_operand.vmem [shape: f32[8,512], index: 1, kind: input, shape index: {}]
  %s2 = inlined_call_operand.vmem [shape: f32[512,32], index: 2, kind: input, shape index: {}]
  %s3 = inlined_call_operand.hbm [shape: f32[8,32], index: 3, kind: output, shape index: {}]
  %s4 = sld [smem:[#allocation0]]
  $region26: #{tpu_custom_call.1} parent=0
    _
  %s6 = ssub.s32 1, %s4
  %s7 = scalar_select 0, %s6, %s4
  $region1: #{tpu_custom_call.1} parent=0
    #allocation2 [shape = 'u8[512]{0}', space=smem, size = 0x200, scoped, tag = 'input window, operand 0, single buffered']
    #allocation3 [shape = 's32[1]{0}', space=sflag, size = 0x4, scoped, tag = 'scoped memory for tpu_custom_call.1']
    #allocation4 [shape = 's32[1]{0}', space=sflag, size = 0x4, scoped, tag = 'scoped memory for tpu_custom_call.1']
    #allocation5 [shape = 'u8[4096]{0}', space=vmem, size = 0x1000, scoped, tag = 'output window, operand 0, single buffered']
    %8 = vsyncpa [#allocation4], 0
    %9 = vsyncpa [#allocation3], 0
    // Predicated region
    $region2: #{tpu_custom_call.1} parent=1 // pred_check
      _
    $region3: #{tpu_custom_call.1} parent=1 // pred_check_branch
      %11 = sbr.rel (0) target = $region5
    $region4: #{tpu_custom_call.1} parent=1 // pred_region
      %s13 = ssub.s32 16, 16
      %14 = vsyncadd [#allocation4], %s13
      %s16 = sshll.u32 %s0, 4
      %s17 = int_to_ptr.vmem [resolvable:$true] %s16
      %19 = dma.vmem_to_smem %s17, 16, [#allocation2], [#allocation4]
    $region5: #{tpu_custom_call.1} parent=1 // pred_fallthru
      _
    // Predicated region
    $region6: #{tpu_custom_call.1} parent=1 // pred_check
      _
    $region7: #{tpu_custom_call.1} parent=1 // pred_check_branch
      %21 = sbr.rel (0) target = $region9
    $region8: #{tpu_custom_call.1} parent=1 // pred_region
      _
    $region9: #{tpu_custom_call.1} parent=1 // pred_fallthru
      _
    // Predicated region
    $region10: #{tpu_custom_call.1} parent=1 // pred_check
      _
    $region11: #{tpu_custom_call.1} parent=1 // pred_check_branch
      %23 = sbr.rel (0) target = $region13
    $region12: #{tpu_custom_call.1} parent=1 // pred_region
      _
    $region13: #{tpu_custom_call.1} parent=1 // pred_fallthru
      _
    // Predicated region
    $region14: #{tpu_custom_call.1} parent=1 // pred_check
      _
    $region15: #{tpu_custom_call.1} parent=1 // pred_check_branch
      %25 = sbr.rel (0) target = $region17
    $region16: #{tpu_custom_call.1} parent=1 // pred_region
      %26 = dma.done [#allocation4], 16
    $region17: #{tpu_custom_call.1} parent=1 // pred_fallthru
      _
    %27 = sfence
    %s28 = sld [smem:[#allocation2]]
    %s29 = sld [smem:[#allocation2 + $0x1]]
    %v30 = vld [vmem:[%s1] sm:$0xff]
    %v31 = vld [vmem:[%s1 + $0x8] sm:$0xff]
    %v32 = vld [vmem:[%s1 + $0x10] sm:$0xff]
    %v33 = vld [vmem:[%s1 + $0x18] sm:$0xff]
    %v34 = vld [vmem:[%s2] sm:$0xff]
    %v35 = vld [vmem:[%s2 + $0x8] sm:$0xff]
    %v36 = vld [vmem:[%s2 + $0x10] sm:$0xff]
    %v37 = vld [vmem:[%s2 + $0x18] sm:$0xff]
    %v38 = vld [vmem:[%s2 + $0x20] sm:$0xff]
    %v39 = vld [vmem:[%s2 + $0x28] sm:$0xff]
    %v40 = vld [vmem:[%s2 + $0x30] sm:$0xff]
    %v41 = vld [vmem:[%s2 + $0x38] sm:$0xff]
    %v42 = vld [vmem:[%s2 + $0x40] sm:$0xff]
    %v43 = vld [vmem:[%s2 + $0x48] sm:$0xff]
    %v44 = vld [vmem:[%s2 + $0x50] sm:$0xff]
    %v45 = vld [vmem:[%s2 + $0x58] sm:$0xff]
    %v46 = vld [vmem:[%s2 + $0x60] sm:$0xff]
    %v47 = vld [vmem:[%s2 + $0x68] sm:$0xff]
    %v48 = vld [vmem:[%s2 + $0x70] sm:$0xff]
    %v49 = vld [vmem:[%s2 + $0x78] sm:$0xff]
    %v50 = vld [vmem:[%s2 + $0x80] sm:$0xff]
    %v51 = vld [vmem:[%s2 + $0x88] sm:$0xff]
    %v52 = vld [vmem:[%s2 + $0x90] sm:$0xff]
    %v53 = vld [vmem:[%s2 + $0x98] sm:$0xff]
    %v54 = vld [vmem:[%s2 + $0xa0] sm:$0xff]
    %v55 = vld [vmem:[%s2 + $0xa8] sm:$0xff]
    %v56 = vld [vmem:[%s2 + $0xb0] sm:$0xff]
    %v57 = vld [vmem:[%s2 + $0xb8] sm:$0xff]
    %v58 = vld [vmem:[%s2 + $0xc0] sm:$0xff]
    %v59 = vld [vmem:[%s2 + $0xc8] sm:$0xff]
    %v60 = vld [vmem:[%s2 + $0xd0] sm:$0xff]
    %v61 = vld [vmem:[%s2 + $0xd8] sm:$0xff]
    %v62 = vld [vmem:[%s2 + $0xe0] sm:$0xff]
    %v63 = vld [vmem:[%s2 + $0xe8] sm:$0xff]
    %v64 = vld [vmem:[%s2 + $0xf0] sm:$0xff]
    %v65 = vld [vmem:[%s2 + $0xf8] sm:$0xff]
    %v66 = vld [vmem:[%s2 + $0x100] sm:$0xff]
    %v67 = vld [vmem:[%s2 + $0x108] sm:$0xff]
    %v68 = vld [vmem:[%s2 + $0x110] sm:$0xff]
    %v69 = vld [vmem:[%s2 + $0x118] sm:$0xff]
    %v70 = vld [vmem:[%s2 + $0x120] sm:$0xff]
    %v71 = vld [vmem:[%s2 + $0x128] sm:$0xff]
    %v72 = vld [vmem:[%s2 + $0x130] sm:$0xff]
    %v73 = vld [vmem:[%s2 + $0x138] sm:$0xff]
    %v74 = vld [vmem:[%s2 + $0x140] sm:$0xff]
    %v75 = vld [vmem:[%s2 + $0x148] sm:$0xff]
    %v76 = vld [vmem:[%s2 + $0x150] sm:$0xff]
    %v77 = vld [vmem:[%s2 + $0x158] sm:$0xff]
    %v78 = vld [vmem:[%s2 + $0x160] sm:$0xff]
    %v79 = vld [vmem:[%s2 + $0x168] sm:$0xff]
    %v80 = vld [vmem:[%s2 + $0x170] sm:$0xff]
    %v81 = vld [vmem:[%s2 + $0x178] sm:$0xff]
    %v82 = vld [vmem:[%s2 + $0x180] sm:$0xff]
    %v83 = vld [vmem:[%s2 + $0x188] sm:$0xff]
    %v84 = vld [vmem:[%s2 + $0x190] sm:$0xff]
    %v85 = vld [vmem:[%s2 + $0x198] sm:$0xff]
    %v86 = vld [vmem:[%s2 + $0x1a0] sm:$0xff]
    %v87 = vld [vmem:[%s2 + $0x1a8] sm:$0xff]
    %v88 = vld [vmem:[%s2 + $0x1b0] sm:$0xff]
    %v89 = vld [vmem:[%s2 + $0x1b8] sm:$0xff]
    %v90 = vld [vmem:[%s2 + $0x1c0] sm:$0xff]
    %v91 = vld [vmem:[%s2 + $0x1c8] sm:$0xff]
    %v92 = vld [vmem:[%s2 + $0x1d0] sm:$0xff]
    %v93 = vld [vmem:[%s2 + $0x1d8] sm:$0xff]
    %v94 = vld [vmem:[%s2 + $0x1e0] sm:$0xff]
    %v95 = vld [vmem:[%s2 + $0x1e8] sm:$0xff]
    %v96 = vld [vmem:[%s2 + $0x1f0] sm:$0xff]
    %v97 = vld [vmem:[%s2 + $0x1f8] sm:$0xff]
    %98 = vmatprep.subr.mxu0 0.0
    %v99 = vand.u32 %v49, 4294901760
    %100 = vmatpush1.msra.mxu0 %v99
    %101 = vmatprep.subr.mxu0 0.0
    %v102 = vand.u32 %v48, 4294901760
    %103 = vmatpush1.msra.mxu0 %v102
    %104 = vmatprep.subr.mxu0 0.0
    %v105 = vand.u32 %v47, 4294901760
    %106 = vmatpush1.msra.mxu0 %v105
    %107 = vmatprep.subr.mxu0 0.0
    %v108 = vand.u32 %v46, 4294901760
    %109 = vmatpush1.msra.mxu0 %v108
    %110 = vmatprep.subr.mxu0 0.0
    %v111 = vand.u32 %v45, 4294901760
    %112 = vmatpush1.msra.mxu0 %v111
    %113 = vmatprep.subr.mxu0 0.0
    %v114 = vand.u32 %v44, 4294901760
    %115 = vmatpush1.msra.mxu0 %v114
    %116 = vmatprep.subr.mxu0 0.0
    %v117 = vand.u32 %v43, 4294901760
    %118 = vmatpush1.msra.mxu0 %v117
    %119 = vmatprep.subr.mxu0 0.0
    %v120 = vand.u32 %v42, 4294901760
    %121 = vmatpush1.msra.mxu0 %v120
    %122 = vmatprep.subr.mxu0 0.0
    %v123 = vand.u32 %v41, 4294901760
    %124 = vmatpush1.msra.mxu0 %v123
    %125 = vmatprep.subr.mxu0 0.0
    %v126 = vand.u32 %v40, 4294901760
    %127 = vmatpush1.msra.mxu0 %v126
    %128 = vmatprep.subr.mxu0 0.0
    %v129 = vand.u32 %v39, 4294901760
    %130 = vmatpush1.msra.mxu0 %v129
    %131 = vmatprep.subr.mxu0 0.0
    %v132 = vand.u32 %v38, 4294901760
    %133 = vmatpush1.msra.mxu0 %v132
    %134 = vmatprep.subr.mxu0 0.0
    %v135 = vand.u32 %v37, 4294901760
    %136 = vmatpush1.msra.mxu0 %v135
    %137 = vmatprep.subr.mxu0 0.0
    %v138 = vand.u32 %v36, 4294901760
    %139 = vmatpush1.msra.mxu0 %v138
    %140 = vmatprep.subr.mxu0 0.0
    %v141 = vand.u32 %v35, 4294901760
    %142 = vmatpush1.msra.mxu0 %v141
    %143 = vmatprep.subr.mxu0 0.0
    %v144 = vand.u32 %v34, 4294901760
    %145 = vmatpush1.msra.mxu0 %v144
    %146 = vmatprep.subr.mxu0 0.0
    %v147 = vand.u32 %v65, 4294901760
    %148 = vmatpush2.msra.mxu0 %v147
    %149 = vmatprep.subr.mxu0 0.0
    %v150 = vand.u32 %v64, 4294901760
    %151 = vmatpush2.msra.mxu0 %v150
    %152 = vmatprep.subr.mxu0 0.0
    %v153 = vand.u32 %v63, 4294901760
    %154 = vmatpush2.msra.mxu0 %v153
    %155 = vmatprep.subr.mxu0 0.0
    %v156 = vand.u32 %v62, 4294901760
    %157 = vmatpush2.msra.mxu0 %v156
    %158 = vmatprep.subr.mxu0 0.0
    %v159 = vand.u32 %v61, 4294901760
    %160 = vmatpush2.msra.mxu0 %v159
    %161 = vmatprep.subr.mxu0 0.0
    %v162 = vand.u32 %v60, 4294901760
    %163 = vmatpush2.msra.mxu0 %v162
    %164 = vmatprep.subr.mxu0 0.0
    %v165 = vand.u32 %v59, 4294901760
    %166 = vmatpush2.msra.mxu0 %v165
    %167 = vmatprep.subr.mxu0 0.0
    %v168 = vand.u32 %v58, 4294901760
    %169 = vmatpush2.msra.mxu0 %v168
    %170 = vmatprep.subr.mxu0 0.0
    %v171 = vand.u32 %v57, 4294901760
    %172 = vmatpush2.msra.mxu0 %v171
    %173 = vmatprep.subr.mxu0 0.0
    %v174 = vand.u32 %v56, 4294901760
    %175 = vmatpush2.msra.mxu0 %v174
    %176 = vmatprep.subr.mxu0 0.0
    %v177 = vand.u32 %v55, 4294901760
    %178 = vmatpush2.msra.mxu0 %v177
    %179 = vmatprep.subr.mxu0 0.0
    %v180 = vand.u32 %v54, 4294901760
    %181 = vmatpush2.msra.mxu0 %v180
    %182 = vmatprep.subr.mxu0 0.0
    %v183 = vand.u32 %v53, 4294901760
    %184 = vmatpush2.msra.mxu0 %v183
    %185 = vmatprep.subr.mxu0 0.0
    %v186 = vand.u32 %v52, 4294901760
    %187 = vmatpush2.msra.mxu0 %v186
    %188 = vmatprep.subr.mxu0 0.0
    %v189 = vand.u32 %v51, 4294901760
    %190 = vmatpush2.msra.mxu0 %v189
    %191 = vmatprep.subr.mxu0 0.0
    %v192 = vand.u32 %v50, 4294901760
    %193 = vmatpush2.msra.mxu0 %v192
    %v194 = vand.u32 %v31, 4294901760
    %v195 = vsub.f32 %v31, %v194
    %v196 = vand.u32 %v195, 4294901760
    %v197 = vsub.f32 %v195, %v196
    %v198 = vand.u32 %v197, 4294901760
    %199 = vmatprep.mubr.f32.mxu0 %v198
    %v200 = vand.u32 %v30, 4294901760
    %v201 = vsub.f32 %v30, %v200
    %v202 = vand.u32 %v201, 4294901760
    %v203 = vsub.f32 %v201, %v202
    %v204 = vand.u32 %v203, 4294901760
    %205 = vmatmul.mubr.f32.gmra.mxu0 %v204
    %v206 = vpop.f32.mrf.mxu0
    %v207 = vadd.f32 0.0, %v206
    %v208 = vpop.f32.mrf.mxu0
    %209 = vdwg.mxu0
    %210 = vmatprep.subr.mxu0 0.0
    %v211 = vand.u32 %v49, 4294901760
    %v212 = vsub.f32 %v49, %v211
    %v213 = vand.u32 %v212, 4294901760
    %v214 = vsub.f32 %v212, %v213
    %v215 = vand.u32 %v214, 4294901760
    %216 = vmatpush1.msra.mxu0 %v215
    %217 = vmatprep.subr.mxu0 0.0
    %v218 = vand.u32 %v48, 4294901760
    %v219 = vsub.f32 %v48, %v218
    %v220 = vand.u32 %v219, 4294901760
    %v221 = vsub.f32 %v219, %v220
    %v222 = vand.u32 %v221, 4294901760
    %223 = vmatpush1.msra.mxu0 %v222
    %224 = vmatprep.subr.mxu0 0.0
    %v225 = vand.u32 %v47, 4294901760
    %v226 = vsub.f32 %v47, %v225
    %v227 = vand.u32 %v226, 4294901760
    %v228 = vsub.f32 %v226, %v227
    %v229 = vand.u32 %v228, 4294901760
    %230 = vmatpush1.msra.mxu0 %v229
    %231 = vmatprep.subr.mxu0 0.0
    %v232 = vand.u32 %v46, 4294901760
    %v233 = vsub.f32 %v46, %v232
    %v234 = vand.u32 %v233, 4294901760
    %v235 = vsub.f32 %v233, %v234
    %v236 = vand.u32 %v235, 4294901760
    %237 = vmatpush1.msra.mxu0 %v236
    %238 = vmatprep.subr.mxu0 0.0
    %v239 = vand.u32 %v45, 4294901760
    %v240 = vsub.f32 %v45, %v239
    %v241 = vand.u32 %v240, 4294901760
    %v242 = vsub.f32 %v240, %v241
    %v243 = vand.u32 %v242, 4294901760
    %244 = vmatpush1.msra.mxu0 %v243
    %245 = vmatprep.subr.mxu0 0.0
    %v246 = vand.u32 %v44, 4294901760
    %v247 = vsub.f32 %v44, %v246
    %v248 = vand.u32 %v247, 4294901760
    %v249 = vsub.f32 %v247, %v248
    %v250 = vand.u32 %v249, 4294901760
    %251 = vmatpush1.msra.mxu0 %v250
    %252 = vmatprep.subr.mxu0 0.0
    %v253 = vand.u32 %v43, 4294901760
    %v254 = vsub.f32 %v43, %v253
    %v255 = vand.u32 %v254, 4294901760
    %v256 = vsub.f32 %v254, %v255
    %v257 = vand.u32 %v256, 4294901760
    %258 = vmatpush1.msra.mxu0 %v257
    %259 = vmatprep.subr.mxu0 0.0
    %v260 = vand.u32 %v42, 4294901760
    %v261 = vsub.f32 %v42, %v260
    %v262 = vand.u32 %v261, 4294901760
    %v263 = vsub.f32 %v261, %v262
    %v264 = vand.u32 %v263, 4294901760
    %265 = vmatpush1.msra.mxu0 %v264
    %266 = vmatprep.subr.mxu0 0.0
    %v267 = vand.u32 %v41, 4294901760
    %v268 = vsub.f32 %v41, %v267
    %v269 = vand.u32 %v268, 4294901760
    %v270 = vsub.f32 %v268, %v269
    %v271 = vand.u32 %v270, 4294901760
    %272 = vmatpush1.msra.mxu0 %v271
    %273 = vmatprep.subr.mxu0 0.0
    %v274 = vand.u32 %v40, 4294901760
    %v275 = vsub.f32 %v40, %v274
    %v276 = vand.u32 %v275, 4294901760
    %v277 = vsub.f32 %v275, %v276
    %v278 = vand.u32 %v277, 4294901760
    %279 = vmatpush1.msra.mxu0 %v278
    %280 = vmatprep.subr.mxu0 0.0
    %v281 = vand.u32 %v39, 4294901760
    %v282 = vsub.f32 %v39, %v281
    %v283 = vand.u32 %v282, 4294901760
    %v284 = vsub.f32 %v282, %v283
    %v285 = vand.u32 %v284, 4294901760
    %286 = vmatpush1.msra.mxu0 %v285
    %287 = vmatprep.subr.mxu0 0.0
    %v288 = vand.u32 %v38, 4294901760
    %v289 = vsub.f32 %v38, %v288
    %v290 = vand.u32 %v289, 4294901760
    %v291 = vsub.f32 %v289, %v290
    %v292 = vand.u32 %v291, 4294901760
    %293 = vmatpush1.msra.mxu0 %v292
    %294 = vmatprep.subr.mxu0 0.0
    %v295 = vand.u32 %v37, 4294901760
    %v296 = vsub.f32 %v37, %v295
    %v297 = vand.u32 %v296, 4294901760
    %v298 = vsub.f32 %v296, %v297
    %v299 = vand.u32 %v298, 4294901760
    %300 = vmatpush1.msra.mxu0 %v299
    %301 = vmatprep.subr.mxu0 0.0
    %v302 = vand.u32 %v36, 4294901760
    %v303 = vsub.f32 %v36, %v302
    %v304 = vand.u32 %v303, 4294901760
    %v305 = vsub.f32 %v303, %v304
    %v306 = vand.u32 %v305, 4294901760
    %307 = vmatpush1.msra.mxu0 %v306
    %308 = vmatprep.subr.mxu0 0.0
    %v309 = vand.u32 %v35, 4294901760
    %v310 = vsub.f32 %v35, %v309
    %v311 = vand.u32 %v310, 4294901760
    %v312 = vsub.f32 %v310, %v311
    %v313 = vand.u32 %v312, 4294901760
    %314 = vmatpush1.msra.mxu0 %v313
    %315 = vmatprep.subr.mxu0 0.0
    %v316 = vand.u32 %v34, 4294901760
    %v317 = vsub.f32 %v34, %v316
    %v318 = vand.u32 %v317, 4294901760
    %v319 = vsub.f32 %v317, %v318
    %v320 = vand.u32 %v319, 4294901760
    %321 = vmatpush1.msra.mxu0 %v320
    %322 = vmatprep.subr.mxu0 0.0
    %v323 = vand.u32 %v65, 4294901760
    %v324 = vsub.f32 %v65, %v323
    %v325 = vand.u32 %v324, 4294901760
    %v326 = vsub.f32 %v324, %v325
    %v327 = vand.u32 %v326, 4294901760
    %328 = vmatpush2.msra.mxu0 %v327
    %329 = vmatprep.subr.mxu0 0.0
    %v330 = vand.u32 %v64, 4294901760
    %v331 = vsub.f32 %v64, %v330
    %v332 = vand.u32 %v331, 4294901760
    %v333 = vsub.f32 %v331, %v332
    %v334 = vand.u32 %v333, 4294901760
    %335 = vmatpush2.msra.mxu0 %v334
    %336 = vmatprep.subr.mxu0 0.0
    %v337 = vand.u32 %v63, 4294901760
    %v338 = vsub.f32 %v63, %v337
    %v339 = vand.u32 %v338, 4294901760
    %v340 = vsub.f32 %v338, %v339
    %v341 = vand.u32 %v340, 4294901760
    %342 = vmatpush2.msra.mxu0 %v341
    %343 = vmatprep.subr.mxu0 0.0
    %v344 = vand.u32 %v62, 4294901760
    %v345 = vsub.f32 %v62, %v344
    %v346 = vand.u32 %v345, 4294901760
    %v347 = vsub.f32 %v345, %v346
    %v348 = vand.u32 %v347, 4294901760
    %349 = vmatpush2.msra.mxu0 %v348
    %350 = vmatprep.subr.mxu0 0.0
    %v351 = vand.u32 %v61, 4294901760
    %v352 = vsub.f32 %v61, %v351
    %v353 = vand.u32 %v352, 4294901760
    %v354 = vsub.f32 %v352, %v353
    %v355 = vand.u32 %v354, 4294901760
    %356 = vmatpush2.msra.mxu0 %v355
    %357 = vmatprep.subr.mxu0 0.0
    %v358 = vand.u32 %v60, 4294901760
    %v359 = vsub.f32 %v60, %v358
    %v360 = vand.u32 %v359, 4294901760
    %v361 = vsub.f32 %v359, %v360
    %v362 = vand.u32 %v361, 4294901760
    %363 = vmatpush2.msra.mxu0 %v362
    %364 = vmatprep.subr.mxu0 0.0
    %v365 = vand.u32 %v59, 4294901760
    %v366 = vsub.f32 %v59, %v365
    %v367 = vand.u32 %v366, 4294901760
    %v368 = vsub.f32 %v366, %v367
    %v369 = vand.u32 %v368, 4294901760
    %370 = vmatpush2.msra.mxu0 %v369
    %371 = vmatprep.subr.mxu0 0.0
    %v372 = vand.u32 %v58, 4294901760
    %v373 = vsub.f32 %v58, %v372
    %v374 = vand.u32 %v373, 4294901760
    %v375 = vsub.f32 %v373, %v374
    %v376 = vand.u32 %v375, 4294901760
    %377 = vmatpush2.msra.mxu0 %v376
    %378 = vmatprep.subr.mxu0 0.0
    %v379 = vand.u32 %v57, 4294901760
    %v380 = vsub.f32 %v57, %v379
    %v381 = vand.u32 %v380, 4294901760
    %v382 = vsub.f32 %v380, %v381
    %v383 = vand.u32 %v382, 4294901760
    %384 = vmatpush2.msra.mxu0 %v383
    %385 = vmatprep.subr.mxu0 0.0
    %v386 = vand.u32 %v56, 4294901760
    %v387 = vsub.f32 %v56, %v386
    %v388 = vand.u32 %v387, 4294901760
    %v389 = vsub.f32 %v387, %v388
    %v390 = vand.u32 %v389, 4294901760
    %391 = vmatpush2.msra.mxu0 %v390
    %392 = vmatprep.subr.mxu0 0.0
    %v393 = vand.u32 %v55, 4294901760
    %v394 = vsub.f32 %v55, %v393
    %v395 = vand.u32 %v394, 4294901760
    %v396 = vsub.f32 %v394, %v395
    %v397 = vand.u32 %v396, 4294901760
    %398 = vmatpush2.msra.mxu0 %v397
    %399 = vmatprep.subr.mxu0 0.0
    %v400 = vand.u32 %v54, 4294901760
    %v401 = vsub.f32 %v54, %v400
    %v402 = vand.u32 %v401, 4294901760
    %v403 = vsub.f32 %v401, %v402
    %v404 = vand.u32 %v403, 4294901760
    %405 = vmatpush2.msra.mxu0 %v404
    %406 = vmatprep.subr.mxu0 0.0
    %v407 = vand.u32 %v53, 4294901760
    %v408 = vsub.f32 %v53, %v407
    %v409 = vand.u32 %v408, 4294901760
    %v410 = vsub.f32 %v408, %v409
    %v411 = vand.u32 %v410, 4294901760
    %412 = vmatpush2.msra.mxu0 %v411
    %413 = vmatprep.subr.mxu0 0.0
    %v414 = vand.u32 %v52, 4294901760
    %v415 = vsub.f32 %v52, %v414
    %v416 = vand.u32 %v415, 4294901760
    %v417 = vsub.f32 %v415, %v416
    %v418 = vand.u32 %v417, 4294901760
    %419 = vmatpush2.msra.mxu0 %v418
    %420 = vmatprep.subr.mxu0 0.0
    %v421 = vand.u32 %v51, 4294901760
    %v422 = vsub.f32 %v51, %v421
    %v423 = vand.u32 %v422, 4294901760
    %v424 = vsub.f32 %v422, %v423
    %v425 = vand.u32 %v424, 4294901760
    %426 = vmatpush2.msra.mxu0 %v425
    %427 = vmatprep.subr.mxu0 0.0
    %v428 = vand.u32 %v50, 4294901760
    %v429 = vsub.f32 %v50, %v428
    %v430 = vand.u32 %v429, 4294901760
    %v431 = vsub.f32 %v429, %v430
    %v432 = vand.u32 %v431, 4294901760
    %433 = vmatpush2.msra.mxu0 %v432
    %v434 = vand.u32 %v31, 4294901760
    %435 = vmatprep.mubr.f32.mxu0 %v434
    %v436 = vand.u32 %v30, 4294901760
    %437 = vmatmul.mubr.f32.gmra.mxu0 %v436
    %v438 = vpop.f32.mrf.mxu0
    %v439 = vadd.f32 %v207, %v438
    %v440 = vpop.f32.mrf.mxu0
    %441 = vdwg.mxu0
    %442 = vmatprep.subr.mxu0 0.0
    %v443 = vand.u32 %v49, 4294901760
    %v444 = vsub.f32 %v49, %v443
    %445 = vmatpush1.msra.mxu0 %v444
    %446 = vmatprep.subr.mxu0 0.0
    %v447 = vand.u32 %v48, 4294901760
    %v448 = vsub.f32 %v48, %v447
    %449 = vmatpush1.msra.mxu0 %v448
    %450 = vmatprep.subr.mxu0 0.0
    %v451 = vand.u32 %v47, 4294901760
    %v452 = vsub.f32 %v47, %v451
    %453 = vmatpush1.msra.mxu0 %v452
    %454 = vmatprep.subr.mxu0 0.0
    %v455 = vand.u32 %v46, 4294901760
    %v456 = vsub.f32 %v46, %v455
    %457 = vmatpush1.msra.mxu0 %v456
    %458 = vmatprep.subr.mxu0 0.0
    %v459 = vand.u32 %v45, 4294901760
    %v460 = vsub.f32 %v45, %v459
    %461 = vmatpush1.msra.mxu0 %v460
    %462 = vmatprep.subr.mxu0 0.0
    %v463 = vand.u32 %v44, 4294901760
    %v464 = vsub.f32 %v44, %v463
    %465 = vmatpush1.msra.mxu0 %v464
    %466 = vmatprep.subr.mxu0 0.0
    %v467 = vand.u32 %v43, 4294901760
    %v468 = vsub.f32 %v43, %v467
    %469 = vmatpush1.msra.mxu0 %v468
    %470 = vmatprep.subr.mxu0 0.0
    %v471 = vand.u32 %v42, 4294901760
    %v472 = vsub.f32 %v42, %v471
    %473 = vmatpush1.msra.mxu0 %v472
    %474 = vmatprep.subr.mxu0 0.0
    %v475 = vand.u32 %v41, 4294901760
    %v476 = vsub.f32 %v41, %v475
    %477 = vmatpush1.msra.mxu0 %v476
    %478 = vmatprep.subr.mxu0 0.0
    %v479 = vand.u32 %v40, 4294901760
    %v480 = vsub.f32 %v40, %v479
    %481 = vmatpush1.msra.mxu0 %v480
    %482 = vmatprep.subr.mxu0 0.0
    %v483 = vand.u32 %v39, 4294901760
    %v484 = vsub.f32 %v39, %v483
    %485 = vmatpush1.msra.mxu0 %v484
    %486 = vmatprep.subr.mxu0 0.0
    %v487 = vand.u32 %v38, 4294901760
    %v488 = vsub.f32 %v38, %v487
    %489 = vmatpush1.msra.mxu0 %v488
    %490 = vmatprep.subr.mxu0 0.0
    %v491 = vand.u32 %v37, 4294901760
    %v492 = vsub.f32 %v37, %v491
    %493 = vmatpush1.msra.mxu0 %v492
    %494 = vmatprep.subr.mxu0 0.0
    %v495 = vand.u32 %v36, 4294901760
    %v496 = vsub.f32 %v36, %v495
    %497 = vmatpush1.msra.mxu0 %v496
    %498 = vmatprep.subr.mxu0 0.0
    %v499 = vand.u32 %v35, 4294901760
    %v500 = vsub.f32 %v35, %v499
    %501 = vmatpush1.msra.mxu0 %v500
    %502 = vmatprep.subr.mxu0 0.0
    %v503 = vand.u32 %v34, 4294901760
    %v504 = vsub.f32 %v34, %v503
    %505 = vmatpush1.msra.mxu0 %v504
    %506 = vmatprep.subr.mxu0 0.0
    %v507 = vand.u32 %v65, 4294901760
    %v508 = vsub.f32 %v65, %v507
    %509 = vmatpush2.msra.mxu0 %v508
    %510 = vmatprep.subr.mxu0 0.0
    %v511 = vand.u32 %v64, 4294901760
    %v512 = vsub.f32 %v64, %v511
    %513 = vmatpush2.msra.mxu0 %v512
    %514 = vmatprep.subr.mxu0 0.0
    %v515 = vand.u32 %v63, 4294901760
    %v516 = vsub.f32 %v63, %v515
    %517 = vmatpush2.msra.mxu0 %v516
    %518 = vmatprep.subr.mxu0 0.0
    %v519 = vand.u32 %v62, 4294901760
    %v520 = vsub.f32 %v62, %v519
    %521 = vmatpush2.msra.mxu0 %v520
    %522 = vmatprep.subr.mxu0 0.0
    %v523 = vand.u32 %v61, 4294901760
    %v524 = vsub.f32 %v61, %v523
    %525 = vmatpush2.msra.mxu0 %v524
    %526 = vmatprep.subr.mxu0 0.0
    %v527 = vand.u32 %v60, 4294901760
    %v528 = vsub.f32 %v60, %v527
    %529 = vmatpush2.msra.mxu0 %v528
    %530 = vmatprep.subr.mxu0 0.0
    %v531 = vand.u32 %v59, 4294901760
    %v532 = vsub.f32 %v59, %v531
    %533 = vmatpush2.msra.mxu0 %v532
    %534 = vmatprep.subr.mxu0 0.0
    %v535 = vand.u32 %v58, 4294901760
    %v536 = vsub.f32 %v58, %v535
    %537 = vmatpush2.msra.mxu0 %v536
    %538 = vmatprep.subr.mxu0 0.0
    %v539 = vand.u32 %v57, 4294901760
    %v540 = vsub.f32 %v57, %v539
    %541 = vmatpush2.msra.mxu0 %v540
    %542 = vmatprep.subr.mxu0 0.0
    %v543 = vand.u32 %v56, 4294901760
    %v544 = vsub.f32 %v56, %v543
    %545 = vmatpush2.msra.mxu0 %v544
    %546 = vmatprep.subr.mxu0 0.0
    %v547 = vand.u32 %v55, 4294901760
    %v548 = vsub.f32 %v55, %v547
    %549 = vmatpush2.msra.mxu0 %v548
    %550 = vmatprep.subr.mxu0 0.0
    %v551 = vand.u32 %v54, 4294901760
    %v552 = vsub.f32 %v54, %v551
    %553 = vmatpush2.msra.mxu0 %v552
    %554 = vmatprep.subr.mxu0 0.0
    %v555 = vand.u32 %v53, 4294901760
    %v556 = vsub.f32 %v53, %v555
    %557 = vmatpush2.msra.mxu0 %v556
    %558 = vmatprep.subr.mxu0 0.0
    %v559 = vand.u32 %v52, 4294901760
    %v560 = vsub.f32 %v52, %v559
    %561 = vmatpush2.msra.mxu0 %v560
    %562 = vmatprep.subr.mxu0 0.0
    %v563 = vand.u32 %v51, 4294901760
    %v564 = vsub.f32 %v51, %v563
    %565 = vmatpush2.msra.mxu0 %v564
    %566 = vmatprep.subr.mxu0 0.0
    %v567 = vand.u32 %v50, 4294901760
    %v568 = vsub.f32 %v50, %v567
    %569 = vmatpush2.msra.mxu0 %v568
    %v570 = vand.u32 %v31, 4294901760
    %v571 = vsub.f32 %v31, %v570
    %572 = vmatprep.mubr.f32.mxu0 %v571
    %v573 = vand.u32 %v30, 4294901760
    %v574 = vsub.f32 %v30, %v573
    %575 = vmatmul.mubr.f32.gmra.mxu0 %v574
    %v576 = vpop.f32.mrf.mxu0
    %v577 = vadd.f32 %v439, %v576
    %v578 = vpop.f32.mrf.mxu0
    %579 = vdwg.mxu0
    %580 = vmatprep.subr.mxu0 0.0
    %v581 = vand.u32 %v49, 4294901760
    %582 = vmatpush1.msra.mxu0 %v581
    %583 = vmatprep.subr.mxu0 0.0
    %v584 = vand.u32 %v48, 4294901760
    %585 = vmatpush1.msra.mxu0 %v584
    %586 = vmatprep.subr.mxu0 0.0
    %v587 = vand.u32 %v47, 4294901760
    %588 = vmatpush1.msra.mxu0 %v587
    %589 = vmatprep.subr.mxu0 0.0
    %v590 = vand.u32 %v46, 4294901760
    %591 = vmatpush1.msra.mxu0 %v590
    %592 = vmatprep.subr.mxu0 0.0
    %v593 = vand.u32 %v45, 4294901760
    %594 = vmatpush1.msra.mxu0 %v593
    %595 = vmatprep.subr.mxu0 0.0
    %v596 = vand.u32 %v44, 4294901760
    %597 = vmatpush1.msra.mxu0 %v596
    %598 = vmatprep.subr.mxu0 0.0
    %v599 = vand.u32 %v43, 4294901760
    %600 = vmatpush1.msra.mxu0 %v599
    %601 = vmatprep.subr.mxu0 0.0
    %v602 = vand.u32 %v42, 4294901760
    %603 = vmatpush1.msra.mxu0 %v602
    %604 = vmatprep.subr.mxu0 0.0
    %v605 = vand.u32 %v41, 4294901760
    %606 = vmatpush1.msra.mxu0 %v605
    %607 = vmatprep.subr.mxu0 0.0
    %v608 = vand.u32 %v40, 4294901760
    %609 = vmatpush1.msra.mxu0 %v608
    %610 = vmatprep.subr.mxu0 0.0
    %v611 = vand.u32 %v39, 4294901760
    %612 = vmatpush1.msra.mxu0 %v611
    %613 = vmatprep.subr.mxu0 0.0
    %v614 = vand.u32 %v38, 4294901760
    %615 = vmatpush1.msra.mxu0 %v614
    %616 = vmatprep.subr.mxu0 0.0
    %v617 = vand.u32 %v37, 4294901760
    %618 = vmatpush1.msra.mxu0 %v617
    %619 = vmatprep.subr.mxu0 0.0
    %v620 = vand.u32 %v36, 4294901760
    %621 = vmatpush1.msra.mxu0 %v620
    %622 = vmatprep.subr.mxu0 0.0
    %v623 = vand.u32 %v35, 4294901760
    %624 = vmatpush1.msra.mxu0 %v623
    %625 = vmatprep.subr.mxu0 0.0
    %v626 = vand.u32 %v34, 4294901760
    %627 = vmatpush1.msra.mxu0 %v626
    %628 = vmatprep.subr.mxu0 0.0
    %v629 = vand.u32 %v65, 4294901760
    %630 = vmatpush2.msra.mxu0 %v629
    %631 = vmatprep.subr.mxu0 0.0
    %v632 = vand.u32 %v64, 4294901760
    %633 = vmatpush2.msra.mxu0 %v632
    %634 = vmatprep.subr.mxu0 0.0
    %v635 = vand.u32 %v63, 4294901760
    %636 = vmatpush2.msra.mxu0 %v635
    %637 = vmatprep.subr.mxu0 0.0
    %v638 = vand.u32 %v62, 4294901760
    %639 = vmatpush2.msra.mxu0 %v638
    %640 = vmatprep.subr.mxu0 0.0
    %v641 = vand.u32 %v61, 4294901760
    %642 = vmatpush2.msra.mxu0 %v641
    %643 = vmatprep.subr.mxu0 0.0
    %v644 = vand.u32 %v60, 4294901760
    %645 = vmatpush2.msra.mxu0 %v644
    %646 = vmatprep.subr.mxu0 0.0
    %v647 = vand.u32 %v59, 4294901760
    %648 = vmatpush2.msra.mxu0 %v647
    %649 = vmatprep.subr.mxu0 0.0
    %v650 = vand.u32 %v58, 4294901760
    %651 = vmatpush2.msra.mxu0 %v650
    %652 = vmatprep.subr.mxu0 0.0
    %v653 = vand.u32 %v57, 4294901760
    %654 = vmatpush2.msra.mxu0 %v653
    %655 = vmatprep.subr.mxu0 0.0
    %v656 = vand.u32 %v56, 4294901760
    %657 = vmatpush2.msra.mxu0 %v656
    %658 = vmatprep.subr.mxu0 0.0
    %v659 = vand.u32 %v55, 4294901760
    %660 = vmatpush2.msra.mxu0 %v659
    %661 = vmatprep.subr.mxu0 0.0
    %v662 = vand.u32 %v54, 4294901760
    %663 = vmatpush2.msra.mxu0 %v662
    %664 = vmatprep.subr.mxu0 0.0
    %v665 = vand.u32 %v53, 4294901760
    %666 = vmatpush2.msra.mxu0 %v665
    %667 = vmatprep.subr.mxu0 0.0
    %v668 = vand.u32 %v52, 4294901760
    %669 = vmatpush2.msra.mxu0 %v668
    %670 = vmatprep.subr.mxu0 0.0
    %v671 = vand.u32 %v51, 4294901760
    %672 = vmatpush2.msra.mxu0 %v671
    %673 = vmatprep.subr.mxu0 0.0
    %v674 = vand.u32 %v50, 4294901760
    %675 = vmatpush2.msra.mxu0 %v674
    %v676 = vand.u32 %v31, 4294901760
    %v677 = vsub.f32 %v31, %v676
    %v678 = vand.u32 %v677, 4294901760
    %679 = vmatprep.mubr.f32.mxu0 %v678
    %v680 = vand.u32 %v30, 4294901760
    %v681 = vsub.f32 %v30, %v680
    %v682 = vand.u32 %v681, 4294901760
    %683 = vmatmul.mubr.f32.gmra.mxu0 %v682
    %v684 = vpop.f32.mrf.mxu0
    %v685 = vadd.f32 %v577, %v684
    %v686 = vpop.f32.mrf.mxu0
    %687 = vdwg.mxu0
    %688 = vmatprep.subr.mxu0 0.0
    %v689 = vand.u32 %v49, 4294901760
    %v690 = vsub.f32 %v49, %v689
    %v691 = vand.u32 %v690, 4294901760
    %692 = vmatpush1.msra.mxu0 %v691
    %693 = vmatprep.subr.mxu0 0.0
    %v694 = vand.u32 %v48, 4294901760
    %v695 = vsub.f32 %v48, %v694
    %v696 = vand.u32 %v695, 4294901760
    %697 = vmatpush1.msra.mxu0 %v696
    %698 = vmatprep.subr.mxu0 0.0
    %v699 = vand.u32 %v47, 4294901760
    %v700 = vsub.f32 %v47, %v699
    %v701 = vand.u32 %v700, 4294901760
    %702 = vmatpush1.msra.mxu0 %v701
    %703 = vmatprep.subr.mxu0 0.0
    %v704 = vand.u32 %v46, 4294901760
    %v705 = vsub.f32 %v46, %v704
    %v706 = vand.u32 %v705, 4294901760
    %707 = vmatpush1.msra.mxu0 %v706
    %708 = vmatprep.subr.mxu0 0.0
    %v709 = vand.u32 %v45, 4294901760
    %v710 = vsub.f32 %v45, %v709
    %v711 = vand.u32 %v710, 4294901760
    %712 = vmatpush1.msra.mxu0 %v711
    %713 = vmatprep.subr.mxu0 0.0
    %v714 = vand.u32 %v44, 4294901760
    %v715 = vsub.f32 %v44, %v714
    %v716 = vand.u32 %v715, 4294901760
    %717 = vmatpush1.msra.mxu0 %v716
    %718 = vmatprep.subr.mxu0 0.0
    %v719 = vand.u32 %v43, 4294901760
    %v720 = vsub.f32 %v43, %v719
    %v721 = vand.u32 %v720, 4294901760
    %722 = vmatpush1.msra.mxu0 %v721
    %723 = vmatprep.subr.mxu0 0.0
    %v724 = vand.u32 %v42, 4294901760
    %v725 = vsub.f32 %v42, %v724
    %v726 = vand.u32 %v725, 4294901760
    %727 = vmatpush1.msra.mxu0 %v726
    %728 = vmatprep.subr.mxu0 0.0
    %v729 = vand.u32 %v41, 4294901760
    %v730 = vsub.f32 %v41, %v729
    %v731 = vand.u32 %v730, 4294901760
    %732 = vmatpush1.msra.mxu0 %v731
    %733 = vmatprep.subr.mxu0 0.0
    %v734 = vand.u32 %v40, 4294901760
    %v735 = vsub.f32 %v40, %v734
    %v736 = vand.u32 %v735, 4294901760
    %737 = vmatpush1.msra.mxu0 %v736
    %738 = vmatprep.subr.mxu0 0.0
    %v739 = vand.u32 %v39, 4294901760
    %v740 = vsub.f32 %v39, %v739
    %v741 = vand.u32 %v740, 4294901760
    %742 = vmatpush1.msra.mxu0 %v741
    %743 = vmatprep.subr.mxu0 0.0
    %v744 = vand.u32 %v38, 4294901760
    %v745 = vsub.f32 %v38, %v744
    %v746 = vand.u32 %v745, 4294901760
    %747 = vmatpush1.msra.mxu0 %v746
    %748 = vmatprep.subr.mxu0 0.0
    %v749 = vand.u32 %v37, 4294901760
    %v750 = vsub.f32 %v37, %v749
    %v751 = vand.u32 %v750, 4294901760
    %752 = vmatpush1.msra.mxu0 %v751
    %753 = vmatprep.subr.mxu0 0.0
    %v754 = vand.u32 %v36, 4294901760
    %v755 = vsub.f32 %v36, %v754
    %v756 = vand.u32 %v755, 4294901760
    %757 = vmatpush1.msra.mxu0 %v756
    %758 = vmatprep.subr.mxu0 0.0
    %v759 = vand.u32 %v35, 4294901760
    %v760 = vsub.f32 %v35, %v759
    %v761 = vand.u32 %v760, 4294901760
    %762 = vmatpush1.msra.mxu0 %v761
    %763 = vmatprep.subr.mxu0 0.0
    %v764 = vand.u32 %v34, 4294901760
    %v765 = vsub.f32 %v34, %v764
    %v766 = vand.u32 %v765, 4294901760
    %767 = vmatpush1.msra.mxu0 %v766
    %768 = vmatprep.subr.mxu0 0.0
    %v769 = vand.u32 %v65, 4294901760
    %v770 = vsub.f32 %v65, %v769
    %v771 = vand.u32 %v770, 4294901760
    %772 = vmatpush2.msra.mxu0 %v771
    %773 = vmatprep.subr.mxu0 0.0
    %v774 = vand.u32 %v64, 4294901760
    %v775 = vsub.f32 %v64, %v774
    %v776 = vand.u32 %v775, 4294901760
    %777 = vmatpush2.msra.mxu0 %v776
    %778 = vmatprep.subr.mxu0 0.0
    %v779 = vand.u32 %v63, 4294901760
    %v780 = vsub.f32 %v63, %v779
    %v781 = vand.u32 %v780, 4294901760
    %782 = vmatpush2.msra.mxu0 %v781
    %783 = vmatprep.subr.mxu0 0.0
    %v784 = vand.u32 %v62, 4294901760
    %v785 = vsub.f32 %v62, %v784
    %v786 = vand.u32 %v785, 4294901760
    %787 = vmatpush2.msra.mxu0 %v786
    %788 = vmatprep.subr.mxu0 0.0
    %v789 = vand.u32 %v61, 4294901760
    %v790 = vsub.f32 %v61, %v789
    %v791 = vand.u32 %v790, 4294901760
    %792 = vmatpush2.msra.mxu0 %v791
    %793 = vmatprep.subr.mxu0 0.0
    %v794 = vand.u32 %v60, 4294901760
    %v795 = vsub.f32 %v60, %v794
    %v796 = vand.u32 %v795, 4294901760
    %797 = vmatpush2.msra.mxu0 %v796
    %798 = vmatprep.subr.mxu0 0.0
    %v799 = vand.u32 %v59, 4294901760
    %v800 = vsub.f32 %v59, %v799
    %v801 = vand.u32 %v800, 4294901760
    %802 = vmatpush2.msra.mxu0 %v801
    %803 = vmatprep.subr.mxu0 0.0
    %v804 = vand.u32 %v58, 4294901760
    %v805 = vsub.f32 %v58, %v804
    %v806 = vand.u32 %v805, 4294901760
    %807 = vmatpush2.msra.mxu0 %v806
    %808 = vmatprep.subr.mxu0 0.0
    %v809 = vand.u32 %v57, 4294901760
    %v810 = vsub.f32 %v57, %v809
    %v811 = vand.u32 %v810, 4294901760
    %812 = vmatpush2.msra.mxu0 %v811
    %813 = vmatprep.subr.mxu0 0.0
    %v814 = vand.u32 %v56, 4294901760
    %v815 = vsub.f32 %v56, %v814
    %v816 = vand.u32 %v815, 4294901760
    %817 = vmatpush2.msra.mxu0 %v816
    %818 = vmatprep.subr.mxu0 0.0
    %v819 = vand.u32 %v55, 4294901760
    %v820 = vsub.f32 %v55, %v819
    %v821 = vand.u32 %v820, 4294901760
    %822 = vmatpush2.msra.mxu0 %v821
    %823 = vmatprep.subr.mxu0 0.0
    %v824 = vand.u32 %v54, 4294901760
    %v825 = vsub.f32 %v54, %v824
    %v826 = vand.u32 %v825, 4294901760
    %827 = vmatpush2.msra.mxu0 %v826
    %828 = vmatprep.subr.mxu0 0.0
    %v829 = vand.u32 %v53, 4294901760
    %v830 = vsub.f32 %v53, %v829
    %v831 = vand.u32 %v830, 4294901760
    %832 = vmatpush2.msra.mxu0 %v831
    %833 = vmatprep.subr.mxu0 0.0
    %v834 = vand.u32 %v52, 4294901760
    %v835 = vsub.f32 %v52, %v834
    %v836 = vand.u32 %v835, 4294901760
    %837 = vmatpush2.msra.mxu0 %v836
    %838 = vmatprep.subr.mxu0 0.0
    %v839 = vand.u32 %v51, 4294901760
    %v840 = vsub.f32 %v51, %v839
    %v841 = vand.u32 %v840, 4294901760
    %842 = vmatpush2.msra.mxu0 %v841
    %843 = vmatprep.subr.mxu0 0.0
    %v844 = vand.u32 %v50, 4294901760
    %v845 = vsub.f32 %v50, %v844
    %v846 = vand.u32 %v845, 4294901760
    %847 = vmatpush2.msra.mxu0 %v846
    %v848 = vand.u32 %v31, 4294901760
    %849 = vmatprep.mubr.f32.mxu0 %v848
    %v850 = vand.u32 %v30, 4294901760
    %851 = vmatmul.mubr.f32.gmra.mxu0 %v850
    %v852 = vpop.f32.mrf.mxu0
    %v853 = vadd.f32 %v685, %v852
    %v854 = vpop.f32.mrf.mxu0
    %855 = vdwg.mxu0
    %856 = vmatprep.subr.mxu0 0.0
    %v857 = vand.u32 %v49, 4294901760
    %858 = vmatpush1.msra.mxu0 %v857
    %859 = vmatprep.subr.mxu0 0.0
    %v860 = vand.u32 %v48, 4294901760
    %861 = vmatpush1.msra.mxu0 %v860
    %862 = vmatprep.subr.mxu0 0.0
    %v863 = vand.u32 %v47, 4294901760
    %864 = vmatpush1.msra.mxu0 %v863
    %865 = vmatprep.subr.mxu0 0.0
    %v866 = vand.u32 %v46, 4294901760
    %867 = vmatpush1.msra.mxu0 %v866
    %868 = vmatprep.subr.mxu0 0.0
    %v869 = vand.u32 %v45, 4294901760
    %870 = vmatpush1.msra.mxu0 %v869
    %871 = vmatprep.subr.mxu0 0.0
    %v872 = vand.u32 %v44, 4294901760
    %873 = vmatpush1.msra.mxu0 %v872
    %874 = vmatprep.subr.mxu0 0.0
    %v875 = vand.u32 %v43, 4294901760
    %876 = vmatpush1.msra.mxu0 %v875
    %877 = vmatprep.subr.mxu0 0.0
    %v878 = vand.u32 %v42, 4294901760
    %879 = vmatpush1.msra.mxu0 %v878
    %880 = vmatprep.subr.mxu0 0.0
    %v881 = vand.u32 %v41, 4294901760
    %882 = vmatpush1.msra.mxu0 %v881
    %883 = vmatprep.subr.mxu0 0.0
    %v884 = vand.u32 %v40, 4294901760
    %885 = vmatpush1.msra.mxu0 %v884
    %886 = vmatprep.subr.mxu0 0.0
    %v887 = vand.u32 %v39, 4294901760
    %888 = vmatpush1.msra.mxu0 %v887
    %889 = vmatprep.subr.mxu0 0.0
    %v890 = vand.u32 %v38, 4294901760
    %891 = vmatpush1.msra.mxu0 %v890
    %892 = vmatprep.subr.mxu0 0.0
    %v893 = vand.u32 %v37, 4294901760
    %894 = vmatpush1.msra.mxu0 %v893
    %895 = vmatprep.subr.mxu0 0.0
    %v896 = vand.u32 %v36, 4294901760
    %897 = vmatpush1.msra.mxu0 %v896
    %898 = vmatprep.subr.mxu0 0.0
    %v899 = vand.u32 %v35, 4294901760
    %900 = vmatpush1.msra.mxu0 %v899
    %901 = vmatprep.subr.mxu0 0.0
    %v902 = vand.u32 %v34, 4294901760
    %903 = vmatpush1.msra.mxu0 %v902
    %904 = vmatprep.subr.mxu0 0.0
    %v905 = vand.u32 %v65, 4294901760
    %906 = vmatpush2.msra.mxu0 %v905
    %907 = vmatprep.subr.mxu0 0.0
    %v908 = vand.u32 %v64, 4294901760
    %909 = vmatpush2.msra.mxu0 %v908
    %910 = vmatprep.subr.mxu0 0.0
    %v911 = vand.u32 %v63, 4294901760
    %912 = vmatpush2.msra.mxu0 %v911
    %913 = vmatprep.subr.mxu0 0.0
    %v914 = vand.u32 %v62, 4294901760
    %915 = vmatpush2.msra.mxu0 %v914
    %916 = vmatprep.subr.mxu0 0.0
    %v917 = vand.u32 %v61, 4294901760
    %918 = vmatpush2.msra.mxu0 %v917
    %919 = vmatprep.subr.mxu0 0.0
    %v920 = vand.u32 %v60, 4294901760
    %921 = vmatpush2.msra.mxu0 %v920
    %922 = vmatprep.subr.mxu0 0.0
    %v923 = vand.u32 %v59, 4294901760
    %924 = vmatpush2.msra.mxu0 %v923
    %925 = vmatprep.subr.mxu0 0.0
    %v926 = vand.u32 %v58, 4294901760
    %927 = vmatpush2.msra.mxu0 %v926
    %928 = vmatprep.subr.mxu0 0.0
    %v929 = vand.u32 %v57, 4294901760
    %930 = vmatpush2.msra.mxu0 %v929
    %931 = vmatprep.subr.mxu0 0.0
    %v932 = vand.u32 %v56, 4294901760
    %933 = vmatpush2.msra.mxu0 %v932
    %934 = vmatprep.subr.mxu0 0.0
    %v935 = vand.u32 %v55, 4294901760
    %936 = vmatpush2.msra.mxu0 %v935
    %937 = vmatprep.subr.mxu0 0.0
    %v938 = vand.u32 %v54, 4294901760
    %939 = vmatpush2.msra.mxu0 %v938
    %940 = vmatprep.subr.mxu0 0.0
    %v941 = vand.u32 %v53, 4294901760
    %942 = vmatpush2.msra.mxu0 %v941
    %943 = vmatprep.subr.mxu0 0.0
    %v944 = vand.u32 %v52, 4294901760
    %945 = vmatpush2.msra.mxu0 %v944
    %946 = vmatprep.subr.mxu0 0.0
    %v947 = vand.u32 %v51, 4294901760
    %948 = vmatpush2.msra.mxu0 %v947
    %949 = vmatprep.subr.mxu0 0.0
    %v950 = vand.u32 %v50, 4294901760
    %951 = vmatpush2.msra.mxu0 %v950
    %v952 = vand.u32 %v31, 4294901760
    %953 = vmatprep.mubr.f32.mxu0 %v952
    %v954 = vand.u32 %v30, 4294901760
    %955 = vmatmul.mubr.f32.gmra.mxu0 %v954
    %v956 = vpop.f32.mrf.mxu0
    %v957 = vadd.f32 %v853, %v956
    %v958 = vpop.f32.mrf.mxu0
    %959 = vdwg.mxu0
    %960 = vmatprep.subr.mxu0 0.0
    %v961 = vand.u32 %v81, 4294901760
    %962 = vmatpush1.msra.mxu0 %v961
    %963 = vmatprep.subr.mxu0 0.0
    %v964 = vand.u32 %v80, 4294901760
    %965 = vmatpush1.msra.mxu0 %v964
    %966 = vmatprep.subr.mxu0 0.0
    %v967 = vand.u32 %v79, 4294901760
    %968 = vmatpush1.msra.mxu0 %v967
    %969 = vmatprep.subr.mxu0 0.0
    %v970 = vand.u32 %v78, 4294901760
    %971 = vmatpush1.msra.mxu0 %v970
    %972 = vmatprep.subr.mxu0 0.0
    %v973 = vand.u32 %v77, 4294901760
    %974 = vmatpush1.msra.mxu0 %v973
    %975 = vmatprep.subr.mxu0 0.0
    %v976 = vand.u32 %v76, 4294901760
    %977 = vmatpush1.msra.mxu0 %v976
    %978 = vmatprep.subr.mxu0 0.0
    %v979 = vand.u32 %v75, 4294901760
    %980 = vmatpush1.msra.mxu0 %v979
    %981 = vmatprep.subr.mxu0 0.0
    %v982 = vand.u32 %v74, 4294901760
    %983 = vmatpush1.msra.mxu0 %v982
    %984 = vmatprep.subr.mxu0 0.0
    %v985 = vand.u32 %v73, 4294901760
    %986 = vmatpush1.msra.mxu0 %v985
    %987 = vmatprep.subr.mxu0 0.0
    %v988 = vand.u32 %v72, 4294901760
    %989 = vmatpush1.msra.mxu0 %v988
    %990 = vmatprep.subr.mxu0 0.0
    %v991 = vand.u32 %v71, 4294901760
    %992 = vmatpush1.msra.mxu0 %v991
    %993 = vmatprep.subr.mxu0 0.0
    %v994 = vand.u32 %v70, 4294901760
    %995 = vmatpush1.msra.mxu0 %v994
    %996 = vmatprep.subr.mxu0 0.0
    %v997 = vand.u32 %v69, 4294901760
    %998 = vmatpush1.msra.mxu0 %v997
    %999 = vmatprep.subr.mxu0 0.0
    %v1000 = vand.u32 %v68, 4294901760
    %1001 = vmatpush1.msra.mxu0 %v1000
    %1002 = vmatprep.subr.mxu0 0.0
    %v1003 = vand.u32 %v67, 4294901760
    %1004 = vmatpush1.msra.mxu0 %v1003
    %1005 = vmatprep.subr.mxu0 0.0
    %v1006 = vand.u32 %v66, 4294901760
    %1007 = vmatpush1.msra.mxu0 %v1006
    %1008 = vmatprep.subr.mxu0 0.0
    %v1009 = vand.u32 %v97, 4294901760
    %1010 = vmatpush2.msra.mxu0 %v1009
    %1011 = vmatprep.subr.mxu0 0.0
    %v1012 = vand.u32 %v96, 4294901760
    %1013 = vmatpush2.msra.mxu0 %v1012
    %1014 = vmatprep.subr.mxu0 0.0
    %v1015 = vand.u32 %v95, 4294901760
    %1016 = vmatpush2.msra.mxu0 %v1015
    %1017 = vmatprep.subr.mxu0 0.0
    %v1018 = vand.u32 %v94, 4294901760
    %1019 = vmatpush2.msra.mxu0 %v1018
    %1020 = vmatprep.subr.mxu0 0.0
    %v1021 = vand.u32 %v93, 4294901760
    %1022 = vmatpush2.msra.mxu0 %v1021
    %1023 = vmatprep.subr.mxu0 0.0
    %v1024 = vand.u32 %v92, 4294901760
    %1025 = vmatpush2.msra.mxu0 %v1024
    %1026 = vmatprep.subr.mxu0 0.0
    %v1027 = vand.u32 %v91, 4294901760
    %1028 = vmatpush2.msra.mxu0 %v1027
    %1029 = vmatprep.subr.mxu0 0.0
    %v1030 = vand.u32 %v90, 4294901760
    %1031 = vmatpush2.msra.mxu0 %v1030
    %1032 = vmatprep.subr.mxu0 0.0
    %v1033 = vand.u32 %v89, 4294901760
    %1034 = vmatpush2.msra.mxu0 %v1033
    %1035 = vmatprep.subr.mxu0 0.0
    %v1036 = vand.u32 %v88, 4294901760
    %1037 = vmatpush2.msra.mxu0 %v1036
    %1038 = vmatprep.subr.mxu0 0.0
    %v1039 = vand.u32 %v87, 4294901760
    %1040 = vmatpush2.msra.mxu0 %v1039
    %1041 = vmatprep.subr.mxu0 0.0
    %v1042 = vand.u32 %v86, 4294901760
    %1043 = vmatpush2.msra.mxu0 %v1042
    %1044 = vmatprep.subr.mxu0 0.0
    %v1045 = vand.u32 %v85, 4294901760
    %1046 = vmatpush2.msra.mxu0 %v1045
    %1047 = vmatprep.subr.mxu0 0.0
    %v1048 = vand.u32 %v84, 4294901760
    %1049 = vmatpush2.msra.mxu0 %v1048
    %1050 = vmatprep.subr.mxu0 0.0
    %v1051 = vand.u32 %v83, 4294901760
    %1052 = vmatpush2.msra.mxu0 %v1051
    %1053 = vmatprep.subr.mxu0 0.0
    %v1054 = vand.u32 %v82, 4294901760
    %1055 = vmatpush2.msra.mxu0 %v1054
    %v1056 = vand.u32 %v33, 4294901760
    %v1057 = vsub.f32 %v33, %v1056
    %v1058 = vand.u32 %v1057, 4294901760
    %v1059 = vsub.f32 %v1057, %v1058
    %v1060 = vand.u32 %v1059, 4294901760
    %1061 = vmatprep.mubr.f32.mxu0 %v1060
    %v1062 = vand.u32 %v32, 4294901760
    %v1063 = vsub.f32 %v32, %v1062
    %v1064 = vand.u32 %v1063, 4294901760
    %v1065 = vsub.f32 %v1063, %v1064
    %v1066 = vand.u32 %v1065, 4294901760
    %1067 = vmatmul.mubr.f32.gmra.mxu0 %v1066
    %v1068 = vpop.f32.mrf.mxu0
    %v1069 = vadd.f32 %v957, %v1068
    %v1070 = vpop.f32.mrf.mxu0
    %1071 = vdwg.mxu0
    %1072 = vmatprep.subr.mxu0 0.0
    %v1073 = vand.u32 %v81, 4294901760
    %v1074 = vsub.f32 %v81, %v1073
    %v1075 = vand.u32 %v1074, 4294901760
    %v1076 = vsub.f32 %v1074, %v1075
    %v1077 = vand.u32 %v1076, 4294901760
    %1078 = vmatpush1.msra.mxu0 %v1077
    %1079 = vmatprep.subr.mxu0 0.0
    %v1080 = vand.u32 %v80, 4294901760
    %v1081 = vsub.f32 %v80, %v1080
    %v1082 = vand.u32 %v1081, 4294901760
    %v1083 = vsub.f32 %v1081, %v1082
    %v1084 = vand.u32 %v1083, 4294901760
    %1085 = vmatpush1.msra.mxu0 %v1084
    %1086 = vmatprep.subr.mxu0 0.0
    %v1087 = vand.u32 %v79, 4294901760
    %v1088 = vsub.f32 %v79, %v1087
    %v1089 = vand.u32 %v1088, 4294901760
    %v1090 = vsub.f32 %v1088, %v1089
    %v1091 = vand.u32 %v1090, 4294901760
    %1092 = vmatpush1.msra.mxu0 %v1091
    %1093 = vmatprep.subr.mxu0 0.0
    %v1094 = vand.u32 %v78, 4294901760
    %v1095 = vsub.f32 %v78, %v1094
    %v1096 = vand.u32 %v1095, 4294901760
    %v1097 = vsub.f32 %v1095, %v1096
    %v1098 = vand.u32 %v1097, 4294901760
    %1099 = vmatpush1.msra.mxu0 %v1098
    %1100 = vmatprep.subr.mxu0 0.0
    %v1101 = vand.u32 %v77, 4294901760
    %v1102 = vsub.f32 %v77, %v1101
    %v1103 = vand.u32 %v1102, 4294901760
    %v1104 = vsub.f32 %v1102, %v1103
    %v1105 = vand.u32 %v1104, 4294901760
    %1106 = vmatpush1.msra.mxu0 %v1105
    %1107 = vmatprep.subr.mxu0 0.0
    %v1108 = vand.u32 %v76, 4294901760
    %v1109 = vsub.f32 %v76, %v1108
    %v1110 = vand.u32 %v1109, 4294901760
    %v1111 = vsub.f32 %v1109, %v1110
    %v1112 = vand.u32 %v1111, 4294901760
    %1113 = vmatpush1.msra.mxu0 %v1112
    %1114 = vmatprep.subr.mxu0 0.0
    %v1115 = vand.u32 %v75, 4294901760
    %v1116 = vsub.f32 %v75, %v1115
    %v1117 = vand.u32 %v1116, 4294901760
    %v1118 = vsub.f32 %v1116, %v1117
    %v1119 = vand.u32 %v1118, 4294901760
    %1120 = vmatpush1.msra.mxu0 %v1119
    %1121 = vmatprep.subr.mxu0 0.0
    %v1122 = vand.u32 %v74, 4294901760
    %v1123 = vsub.f32 %v74, %v1122
    %v1124 = vand.u32 %v1123, 4294901760
    %v1125 = vsub.f32 %v1123, %v1124
    %v1126 = vand.u32 %v1125, 4294901760
    %1127 = vmatpush1.msra.mxu0 %v1126
    %1128 = vmatprep.subr.mxu0 0.0
    %v1129 = vand.u32 %v73, 4294901760
    %v1130 = vsub.f32 %v73, %v1129
    %v1131 = vand.u32 %v1130, 4294901760
    %v1132 = vsub.f32 %v1130, %v1131
    %v1133 = vand.u32 %v1132, 4294901760
    %1134 = vmatpush1.msra.mxu0 %v1133
    %1135 = vmatprep.subr.mxu0 0.0
    %v1136 = vand.u32 %v72, 4294901760
    %v1137 = vsub.f32 %v72, %v1136
    %v1138 = vand.u32 %v1137, 4294901760
    %v1139 = vsub.f32 %v1137, %v1138
    %v1140 = vand.u32 %v1139, 4294901760
    %1141 = vmatpush1.msra.mxu0 %v1140
    %1142 = vmatprep.subr.mxu0 0.0
    %v1143 = vand.u32 %v71, 4294901760
    %v1144 = vsub.f32 %v71, %v1143
    %v1145 = vand.u32 %v1144, 4294901760
    %v1146 = vsub.f32 %v1144, %v1145
    %v1147 = vand.u32 %v1146, 4294901760
    %1148 = vmatpush1.msra.mxu0 %v1147
    %1149 = vmatprep.subr.mxu0 0.0
    %v1150 = vand.u32 %v70, 4294901760
    %v1151 = vsub.f32 %v70, %v1150
    %v1152 = vand.u32 %v1151, 4294901760
    %v1153 = vsub.f32 %v1151, %v1152
    %v1154 = vand.u32 %v1153, 4294901760
    %1155 = vmatpush1.msra.mxu0 %v1154
    %1156 = vmatprep.subr.mxu0 0.0
    %v1157 = vand.u32 %v69, 4294901760
    %v1158 = vsub.f32 %v69, %v1157
    %v1159 = vand.u32 %v1158, 4294901760
    %v1160 = vsub.f32 %v1158, %v1159
    %v1161 = vand.u32 %v1160, 4294901760
    %1162 = vmatpush1.msra.mxu0 %v1161
    %1163 = vmatprep.subr.mxu0 0.0
    %v1164 = vand.u32 %v68, 4294901760
    %v1165 = vsub.f32 %v68, %v1164
    %v1166 = vand.u32 %v1165, 4294901760
    %v1167 = vsub.f32 %v1165, %v1166
    %v1168 = vand.u32 %v1167, 4294901760
    %1169 = vmatpush1.msra.mxu0 %v1168
    %1170 = vmatprep.subr.mxu0 0.0
    %v1171 = vand.u32 %v67, 4294901760
    %v1172 = vsub.f32 %v67, %v1171
    %v1173 = vand.u32 %v1172, 4294901760
    %v1174 = vsub.f32 %v1172, %v1173
    %v1175 = vand.u32 %v1174, 4294901760
    %1176 = vmatpush1.msra.mxu0 %v1175
    %1177 = vmatprep.subr.mxu0 0.0
    %v1178 = vand.u32 %v66, 4294901760
    %v1179 = vsub.f32 %v66, %v1178
    %v1180 = vand.u32 %v1179, 4294901760
    %v1181 = vsub.f32 %v1179, %v1180
    %v1182 = vand.u32 %v1181, 4294901760
    %1183 = vmatpush1.msra.mxu0 %v1182
    %1184 = vmatprep.subr.mxu0 0.0
    %v1185 = vand.u32 %v97, 4294901760
    %v1186 = vsub.f32 %v97, %v1185
    %v1187 = vand.u32 %v1186, 4294901760
    %v1188 = vsub.f32 %v1186, %v1187
    %v1189 = vand.u32 %v1188, 4294901760
    %1190 = vmatpush2.msra.mxu0 %v1189
    %1191 = vmatprep.subr.mxu0 0.0
    %v1192 = vand.u32 %v96, 4294901760
    %v1193 = vsub.f32 %v96, %v1192
    %v1194 = vand.u32 %v1193, 4294901760
    %v1195 = vsub.f32 %v1193, %v1194
    %v1196 = vand.u32 %v1195, 4294901760
    %1197 = vmatpush2.msra.mxu0 %v1196
    %1198 = vmatprep.subr.mxu0 0.0
    %v1199 = vand.u32 %v95, 4294901760
    %v1200 = vsub.f32 %v95, %v1199
    %v1201 = vand.u32 %v1200, 4294901760
    %v1202 = vsub.f32 %v1200, %v1201
    %v1203 = vand.u32 %v1202, 4294901760
    %1204 = vmatpush2.msra.mxu0 %v1203
    %1205 = vmatprep.subr.mxu0 0.0
    %v1206 = vand.u32 %v94, 4294901760
    %v1207 = vsub.f32 %v94, %v1206
    %v1208 = vand.u32 %v1207, 4294901760
    %v1209 = vsub.f32 %v1207, %v1208
    %v1210 = vand.u32 %v1209, 4294901760
    %1211 = vmatpush2.msra.mxu0 %v1210
    %1212 = vmatprep.subr.mxu0 0.0
    %v1213 = vand.u32 %v93, 4294901760
    %v1214 = vsub.f32 %v93, %v1213
    %v1215 = vand.u32 %v1214, 4294901760
    %v1216 = vsub.f32 %v1214, %v1215
    %v1217 = vand.u32 %v1216, 4294901760
    %1218 = vmatpush2.msra.mxu0 %v1217
    %1219 = vmatprep.subr.mxu0 0.0
    %v1220 = vand.u32 %v92, 4294901760
    %v1221 = vsub.f32 %v92, %v1220
    %v1222 = vand.u32 %v1221, 4294901760
    %v1223 = vsub.f32 %v1221, %v1222
    %v1224 = vand.u32 %v1223, 4294901760
    %1225 = vmatpush2.msra.mxu0 %v1224
    %1226 = vmatprep.subr.mxu0 0.0
    %v1227 = vand.u32 %v91, 4294901760
    %v1228 = vsub.f32 %v91, %v1227
    %v1229 = vand.u32 %v1228, 4294901760
    %v1230 = vsub.f32 %v1228, %v1229
    %v1231 = vand.u32 %v1230, 4294901760
    %1232 = vmatpush2.msra.mxu0 %v1231
    %1233 = vmatprep.subr.mxu0 0.0
    %v1234 = vand.u32 %v90, 4294901760
    %v1235 = vsub.f32 %v90, %v1234
    %v1236 = vand.u32 %v1235, 4294901760
    %v1237 = vsub.f32 %v1235, %v1236
    %v1238 = vand.u32 %v1237, 4294901760
    %1239 = vmatpush2.msra.mxu0 %v1238
    %1240 = vmatprep.subr.mxu0 0.0
    %v1241 = vand.u32 %v89, 4294901760
    %v1242 = vsub.f32 %v89, %v1241
    %v1243 = vand.u32 %v1242, 4294901760
    %v1244 = vsub.f32 %v1242, %v1243
    %v1245 = vand.u32 %v1244, 4294901760
    %1246 = vmatpush2.msra.mxu0 %v1245
    %1247 = vmatprep.subr.mxu0 0.0
    %v1248 = vand.u32 %v88, 4294901760
    %v1249 = vsub.f32 %v88, %v1248
    %v1250 = vand.u32 %v1249, 4294901760
    %v1251 = vsub.f32 %v1249, %v1250
    %v1252 = vand.u32 %v1251, 4294901760
    %1253 = vmatpush2.msra.mxu0 %v1252
    %1254 = vmatprep.subr.mxu0 0.0
    %v1255 = vand.u32 %v87, 4294901760
    %v1256 = vsub.f32 %v87, %v1255
    %v1257 = vand.u32 %v1256, 4294901760
    %v1258 = vsub.f32 %v1256, %v1257
    %v1259 = vand.u32 %v1258, 4294901760
    %1260 = vmatpush2.msra.mxu0 %v1259
    %1261 = vmatprep.subr.mxu0 0.0
    %v1262 = vand.u32 %v86, 4294901760
    %v1263 = vsub.f32 %v86, %v1262
    %v1264 = vand.u32 %v1263, 4294901760
    %v1265 = vsub.f32 %v1263, %v1264
    %v1266 = vand.u32 %v1265, 4294901760
    %1267 = vmatpush2.msra.mxu0 %v1266
    %1268 = vmatprep.subr.mxu0 0.0
    %v1269 = vand.u32 %v85, 4294901760
    %v1270 = vsub.f32 %v85, %v1269
    %v1271 = vand.u32 %v1270, 4294901760
    %v1272 = vsub.f32 %v1270, %v1271
    %v1273 = vand.u32 %v1272, 4294901760
    %1274 = vmatpush2.msra.mxu0 %v1273
    %1275 = vmatprep.subr.mxu0 0.0
    %v1276 = vand.u32 %v84, 4294901760
    %v1277 = vsub.f32 %v84, %v1276
    %v1278 = vand.u32 %v1277, 4294901760
    %v1279 = vsub.f32 %v1277, %v1278
    %v1280 = vand.u32 %v1279, 4294901760
    %1281 = vmatpush2.msra.mxu0 %v1280
    %1282 = vmatprep.subr.mxu0 0.0
    %v1283 = vand.u32 %v83, 4294901760
    %v1284 = vsub.f32 %v83, %v1283
    %v1285 = vand.u32 %v1284, 4294901760
    %v1286 = vsub.f32 %v1284, %v1285
    %v1287 = vand.u32 %v1286, 4294901760
    %1288 = vmatpush2.msra.mxu0 %v1287
    %1289 = vmatprep.subr.mxu0 0.0
    %v1290 = vand.u32 %v82, 4294901760
    %v1291 = vsub.f32 %v82, %v1290
    %v1292 = vand.u32 %v1291, 4294901760
    %v1293 = vsub.f32 %v1291, %v1292
    %v1294 = vand.u32 %v1293, 4294901760
    %1295 = vmatpush2.msra.mxu0 %v1294
    %v1296 = vand.u32 %v33, 4294901760
    %1297 = vmatprep.mubr.f32.mxu0 %v1296
    %v1298 = vand.u32 %v32, 4294901760
    %1299 = vmatmul.mubr.f32.gmra.mxu0 %v1298
    %v1300 = vpop.f32.mrf.mxu0
    %v1301 = vadd.f32 %v1069, %v1300
    %v1302 = vpop.f32.mrf.mxu0
    %1303 = vdwg.mxu0
    %1304 = vmatprep.subr.mxu0 0.0
    %v1305 = vand.u32 %v81, 4294901760
    %v1306 = vsub.f32 %v81, %v1305
    %1307 = vmatpush1.msra.mxu0 %v1306
    %1308 = vmatprep.subr.mxu0 0.0
    %v1309 = vand.u32 %v80, 4294901760
    %v1310 = vsub.f32 %v80, %v1309
    %1311 = vmatpush1.msra.mxu0 %v1310
    %1312 = vmatprep.subr.mxu0 0.0
    %v1313 = vand.u32 %v79, 4294901760
    %v1314 = vsub.f32 %v79, %v1313
    %1315 = vmatpush1.msra.mxu0 %v1314
    %1316 = vmatprep.subr.mxu0 0.0
    %v1317 = vand.u32 %v78, 4294901760
    %v1318 = vsub.f32 %v78, %v1317
    %1319 = vmatpush1.msra.mxu0 %v1318
    %1320 = vmatprep.subr.mxu0 0.0
    %v1321 = vand.u32 %v77, 4294901760
    %v1322 = vsub.f32 %v77, %v1321
    %1323 = vmatpush1.msra.mxu0 %v1322
    %1324 = vmatprep.subr.mxu0 0.0
    %v1325 = vand.u32 %v76, 4294901760
    %v1326 = vsub.f32 %v76, %v1325
    %1327 = vmatpush1.msra.mxu0 %v1326
    %1328 = vmatprep.subr.mxu0 0.0
    %v1329 = vand.u32 %v75, 4294901760
    %v1330 = vsub.f32 %v75, %v1329
    %1331 = vmatpush1.msra.mxu0 %v1330
    %1332 = vmatprep.subr.mxu0 0.0
    %v1333 = vand.u32 %v74, 4294901760
    %v1334 = vsub.f32 %v74, %v1333
    %1335 = vmatpush1.msra.mxu0 %v1334
    %1336 = vmatprep.subr.mxu0 0.0
    %v1337 = vand.u32 %v73, 4294901760
    %v1338 = vsub.f32 %v73, %v1337
    %1339 = vmatpush1.msra.mxu0 %v1338
    %1340 = vmatprep.subr.mxu0 0.0
    %v1341 = vand.u32 %v72, 4294901760
    %v1342 = vsub.f32 %v72, %v1341
    %1343 = vmatpush1.msra.mxu0 %v1342
    %1344 = vmatprep.subr.mxu0 0.0
    %v1345 = vand.u32 %v71, 4294901760
    %v1346 = vsub.f32 %v71, %v1345
    %1347 = vmatpush1.msra.mxu0 %v1346
    %1348 = vmatprep.subr.mxu0 0.0
    %v1349 = vand.u32 %v70, 4294901760
    %v1350 = vsub.f32 %v70, %v1349
    %1351 = vmatpush1.msra.mxu0 %v1350
    %1352 = vmatprep.subr.mxu0 0.0
    %v1353 = vand.u32 %v69, 4294901760
    %v1354 = vsub.f32 %v69, %v1353
    %1355 = vmatpush1.msra.mxu0 %v1354
    %1356 = vmatprep.subr.mxu0 0.0
    %v1357 = vand.u32 %v68, 4294901760
    %v1358 = vsub.f32 %v68, %v1357
    %1359 = vmatpush1.msra.mxu0 %v1358
    %1360 = vmatprep.subr.mxu0 0.0
    %v1361 = vand.u32 %v67, 4294901760
    %v1362 = vsub.f32 %v67, %v1361
    %1363 = vmatpush1.msra.mxu0 %v1362
    %1364 = vmatprep.subr.mxu0 0.0
    %v1365 = vand.u32 %v66, 4294901760
    %v1366 = vsub.f32 %v66, %v1365
    %1367 = vmatpush1.msra.mxu0 %v1366
    %1368 = vmatprep.subr.mxu0 0.0
    %v1369 = vand.u32 %v97, 4294901760
    %v1370 = vsub.f32 %v97, %v1369
    %1371 = vmatpush2.msra.mxu0 %v1370
    %1372 = vmatprep.subr.mxu0 0.0
    %v1373 = vand.u32 %v96, 4294901760
    %v1374 = vsub.f32 %v96, %v1373
    %1375 = vmatpush2.msra.mxu0 %v1374
    %1376 = vmatprep.subr.mxu0 0.0
    %v1377 = vand.u32 %v95, 4294901760
    %v1378 = vsub.f32 %v95, %v1377
    %1379 = vmatpush2.msra.mxu0 %v1378
    %1380 = vmatprep.subr.mxu0 0.0
    %v1381 = vand.u32 %v94, 4294901760
    %v1382 = vsub.f32 %v94, %v1381
    %1383 = vmatpush2.msra.mxu0 %v1382
    %1384 = vmatprep.subr.mxu0 0.0
    %v1385 = vand.u32 %v93, 4294901760
    %v1386 = vsub.f32 %v93, %v1385
    %1387 = vmatpush2.msra.mxu0 %v1386
    %1388 = vmatprep.subr.mxu0 0.0
    %v1389 = vand.u32 %v92, 4294901760
    %v1390 = vsub.f32 %v92, %v1389
    %1391 = vmatpush2.msra.mxu0 %v1390
    %1392 = vmatprep.subr.mxu0 0.0
    %v1393 = vand.u32 %v91, 4294901760
    %v1394 = vsub.f32 %v91, %v1393
    %1395 = vmatpush2.msra.mxu0 %v1394
    %1396 = vmatprep.subr.mxu0 0.0
    %v1397 = vand.u32 %v90, 4294901760
    %v1398 = vsub.f32 %v90, %v1397
    %1399 = vmatpush2.msra.mxu0 %v1398
    %1400 = vmatprep.subr.mxu0 0.0
    %v1401 = vand.u32 %v89, 4294901760
    %v1402 = vsub.f32 %v89, %v1401
    %1403 = vmatpush2.msra.mxu0 %v1402
    %1404 = vmatprep.subr.mxu0 0.0
    %v1405 = vand.u32 %v88, 4294901760
    %v1406 = vsub.f32 %v88, %v1405
    %1407 = vmatpush2.msra.mxu0 %v1406
    %1408 = vmatprep.subr.mxu0 0.0
    %v1409 = vand.u32 %v87, 4294901760
    %v1410 = vsub.f32 %v87, %v1409
    %1411 = vmatpush2.msra.mxu0 %v1410
    %1412 = vmatprep.subr.mxu0 0.0
    %v1413 = vand.u32 %v86, 4294901760
    %v1414 = vsub.f32 %v86, %v1413
    %1415 = vmatpush2.msra.mxu0 %v1414
    %1416 = vmatprep.subr.mxu0 0.0
    %v1417 = vand.u32 %v85, 4294901760
    %v1418 = vsub.f32 %v85, %v1417
    %1419 = vmatpush2.msra.mxu0 %v1418
    %1420 = vmatprep.subr.mxu0 0.0
    %v1421 = vand.u32 %v84, 4294901760
    %v1422 = vsub.f32 %v84, %v1421
    %1423 = vmatpush2.msra.mxu0 %v1422
    %1424 = vmatprep.subr.mxu0 0.0
    %v1425 = vand.u32 %v83, 4294901760
    %v1426 = vsub.f32 %v83, %v1425
    %1427 = vmatpush2.msra.mxu0 %v1426
    %1428 = vmatprep.subr.mxu0 0.0
    %v1429 = vand.u32 %v82, 4294901760
    %v1430 = vsub.f32 %v82, %v1429
    %1431 = vmatpush2.msra.mxu0 %v1430
    %v1432 = vand.u32 %v33, 4294901760
    %v1433 = vsub.f32 %v33, %v1432
    %1434 = vmatprep.mubr.f32.mxu0 %v1433
    %v1435 = vand.u32 %v32, 4294901760
    %v1436 = vsub.f32 %v32, %v1435
    %1437 = vmatmul.mubr.f32.gmra.mxu0 %v1436
    %v1438 = vpop.f32.mrf.mxu0
    %v1439 = vadd.f32 %v1301, %v1438
    %v1440 = vpop.f32.mrf.mxu0
    %1441 = vdwg.mxu0
    %1442 = vmatprep.subr.mxu0 0.0
    %v1443 = vand.u32 %v81, 4294901760
    %1444 = vmatpush1.msra.mxu0 %v1443
    %1445 = vmatprep.subr.mxu0 0.0
    %v1446 = vand.u32 %v80, 4294901760
    %1447 = vmatpush1.msra.mxu0 %v1446
    %1448 = vmatprep.subr.mxu0 0.0
    %v1449 = vand.u32 %v79, 4294901760
    %1450 = vmatpush1.msra.mxu0 %v1449
    %1451 = vmatprep.subr.mxu0 0.0
    %v1452 = vand.u32 %v78, 4294901760
    %1453 = vmatpush1.msra.mxu0 %v1452
    %1454 = vmatprep.subr.mxu0 0.0
    %v1455 = vand.u32 %v77, 4294901760
    %1456 = vmatpush1.msra.mxu0 %v1455
    %1457 = vmatprep.subr.mxu0 0.0
    %v1458 = vand.u32 %v76, 4294901760
    %1459 = vmatpush1.msra.mxu0 %v1458
    %1460 = vmatprep.subr.mxu0 0.0
    %v1461 = vand.u32 %v75, 4294901760
    %1462 = vmatpush1.msra.mxu0 %v1461
    %1463 = vmatprep.subr.mxu0 0.0
    %v1464 = vand.u32 %v74, 4294901760
    %1465 = vmatpush1.msra.mxu0 %v1464
    %1466 = vmatprep.subr.mxu0 0.0
    %v1467 = vand.u32 %v73, 4294901760
    %1468 = vmatpush1.msra.mxu0 %v1467
    %1469 = vmatprep.subr.mxu0 0.0
    %v1470 = vand.u32 %v72, 4294901760
    %1471 = vmatpush1.msra.mxu0 %v1470
    %1472 = vmatprep.subr.mxu0 0.0
    %v1473 = vand.u32 %v71, 4294901760
    %1474 = vmatpush1.msra.mxu0 %v1473
    %1475 = vmatprep.subr.mxu0 0.0
    %v1476 = vand.u32 %v70, 4294901760
    %1477 = vmatpush1.msra.mxu0 %v1476
    %1478 = vmatprep.subr.mxu0 0.0
    %v1479 = vand.u32 %v69, 4294901760
    %1480 = vmatpush1.msra.mxu0 %v1479
    %1481 = vmatprep.subr.mxu0 0.0
    %v1482 = vand.u32 %v68, 4294901760
    %1483 = vmatpush1.msra.mxu0 %v1482
    %1484 = vmatprep.subr.mxu0 0.0
    %v1485 = vand.u32 %v67, 4294901760
    %1486 = vmatpush1.msra.mxu0 %v1485
    %1487 = vmatprep.subr.mxu0 0.0
    %v1488 = vand.u32 %v66, 4294901760
    %1489 = vmatpush1.msra.mxu0 %v1488
    %1490 = vmatprep.subr.mxu0 0.0
    %v1491 = vand.u32 %v97, 4294901760
    %1492 = vmatpush2.msra.mxu0 %v1491
    %1493 = vmatprep.subr.mxu0 0.0
    %v1494 = vand.u32 %v96, 4294901760
    %1495 = vmatpush2.msra.mxu0 %v1494
    %1496 = vmatprep.subr.mxu0 0.0
    %v1497 = vand.u32 %v95, 4294901760
    %1498 = vmatpush2.msra.mxu0 %v1497
    %1499 = vmatprep.subr.mxu0 0.0
    %v1500 = vand.u32 %v94, 4294901760
    %1501 = vmatpush2.msra.mxu0 %v1500
    %1502 = vmatprep.subr.mxu0 0.0
    %v1503 = vand.u32 %v93, 4294901760
    %1504 = vmatpush2.msra.mxu0 %v1503
    %1505 = vmatprep.subr.mxu0 0.0
    %v1506 = vand.u32 %v92, 4294901760
    %1507 = vmatpush2.msra.mxu0 %v1506
    %1508 = vmatprep.subr.mxu0 0.0
    %v1509 = vand.u32 %v91, 4294901760
    %1510 = vmatpush2.msra.mxu0 %v1509
    %1511 = vmatprep.subr.mxu0 0.0
    %v1512 = vand.u32 %v90, 4294901760
    %1513 = vmatpush2.msra.mxu0 %v1512
    %1514 = vmatprep.subr.mxu0 0.0
    %v1515 = vand.u32 %v89, 4294901760
    %1516 = vmatpush2.msra.mxu0 %v1515
    %1517 = vmatprep.subr.mxu0 0.0
    %v1518 = vand.u32 %v88, 4294901760
    %1519 = vmatpush2.msra.mxu0 %v1518
    %1520 = vmatprep.subr.mxu0 0.0
    %v1521 = vand.u32 %v87, 4294901760
    %1522 = vmatpush2.msra.mxu0 %v1521
    %1523 = vmatprep.subr.mxu0 0.0
    %v1524 = vand.u32 %v86, 4294901760
    %1525 = vmatpush2.msra.mxu0 %v1524
    %1526 = vmatprep.subr.mxu0 0.0
    %v1527 = vand.u32 %v85, 4294901760
    %1528 = vmatpush2.msra.mxu0 %v1527
    %1529 = vmatprep.subr.mxu0 0.0
    %v1530 = vand.u32 %v84, 4294901760
    %1531 = vmatpush2.msra.mxu0 %v1530
    %1532 = vmatprep.subr.mxu0 0.0
    %v1533 = vand.u32 %v83, 4294901760
    %1534 = vmatpush2.msra.mxu0 %v1533
    %1535 = vmatprep.subr.mxu0 0.0
    %v1536 = vand.u32 %v82, 4294901760
    %1537 = vmatpush2.msra.mxu0 %v1536
    %v1538 = vand.u32 %v33, 4294901760
    %v1539 = vsub.f32 %v33, %v1538
    %v1540 = vand.u32 %v1539, 4294901760
    %1541 = vmatprep.mubr.f32.mxu0 %v1540
    %v1542 = vand.u32 %v32, 4294901760
    %v1543 = vsub.f32 %v32, %v1542
    %v1544 = vand.u32 %v1543, 4294901760
    %1545 = vmatmul.mubr.f32.gmra.mxu0 %v1544
    %v1546 = vpop.f32.mrf.mxu0
    %v1547 = vadd.f32 %v1439, %v1546
    %v1548 = vpop.f32.mrf.mxu0
    %1549 = vdwg.mxu0
    %1550 = vmatprep.subr.mxu0 0.0
    %v1551 = vand.u32 %v81, 4294901760
    %v1552 = vsub.f32 %v81, %v1551
    %v1553 = vand.u32 %v1552, 4294901760
    %1554 = vmatpush1.msra.mxu0 %v1553
    %1555 = vmatprep.subr.mxu0 0.0
    %v1556 = vand.u32 %v80, 4294901760
    %v1557 = vsub.f32 %v80, %v1556
    %v1558 = vand.u32 %v1557, 4294901760
    %1559 = vmatpush1.msra.mxu0 %v1558
    %1560 = vmatprep.subr.mxu0 0.0
    %v1561 = vand.u32 %v79, 4294901760
    %v1562 = vsub.f32 %v79, %v1561
    %v1563 = vand.u32 %v1562, 4294901760
    %1564 = vmatpush1.msra.mxu0 %v1563
    %1565 = vmatprep.subr.mxu0 0.0
    %v1566 = vand.u32 %v78, 4294901760
    %v1567 = vsub.f32 %v78, %v1566
    %v1568 = vand.u32 %v1567, 4294901760
    %1569 = vmatpush1.msra.mxu0 %v1568
    %1570 = vmatprep.subr.mxu0 0.0
    %v1571 = vand.u32 %v77, 4294901760
    %v1572 = vsub.f32 %v77, %v1571
    %v1573 = vand.u32 %v1572, 4294901760
    %1574 = vmatpush1.msra.mxu0 %v1573
    %1575 = vmatprep.subr.mxu0 0.0
    %v1576 = vand.u32 %v76, 4294901760
    %v1577 = vsub.f32 %v76, %v1576
    %v1578 = vand.u32 %v1577, 4294901760
    %1579 = vmatpush1.msra.mxu0 %v1578
    %1580 = vmatprep.subr.mxu0 0.0
    %v1581 = vand.u32 %v75, 4294901760
    %v1582 = vsub.f32 %v75, %v1581
    %v1583 = vand.u32 %v1582, 4294901760
    %1584 = vmatpush1.msra.mxu0 %v1583
    %1585 = vmatprep.subr.mxu0 0.0
    %v1586 = vand.u32 %v74, 4294901760
    %v1587 = vsub.f32 %v74, %v1586
    %v1588 = vand.u32 %v1587, 4294901760
    %1589 = vmatpush1.msra.mxu0 %v1588
    %1590 = vmatprep.subr.mxu0 0.0
    %v1591 = vand.u32 %v73, 4294901760
    %v1592 = vsub.f32 %v73, %v1591
    %v1593 = vand.u32 %v1592, 4294901760
    %1594 = vmatpush1.msra.mxu0 %v1593
    %1595 = vmatprep.subr.mxu0 0.0
    %v1596 = vand.u32 %v72, 4294901760
    %v1597 = vsub.f32 %v72, %v1596
    %v1598 = vand.u32 %v1597, 4294901760
    %1599 = vmatpush1.msra.mxu0 %v1598
    %1600 = vmatprep.subr.mxu0 0.0
    %v1601 = vand.u32 %v71, 4294901760
    %v1602 = vsub.f32 %v71, %v1601
    %v1603 = vand.u32 %v1602, 4294901760
    %1604 = vmatpush1.msra.mxu0 %v1603
    %1605 = vmatprep.subr.mxu0 0.0
    %v1606 = vand.u32 %v70, 4294901760
    %v1607 = vsub.f32 %v70, %v1606
    %v1608 = vand.u32 %v1607, 4294901760
    %1609 = vmatpush1.msra.mxu0 %v1608
    %1610 = vmatprep.subr.mxu0 0.0
    %v1611 = vand.u32 %v69, 4294901760
    %v1612 = vsub.f32 %v69, %v1611
    %v1613 = vand.u32 %v1612, 4294901760
    %1614 = vmatpush1.msra.mxu0 %v1613
    %1615 = vmatprep.subr.mxu0 0.0
    %v1616 = vand.u32 %v68, 4294901760
    %v1617 = vsub.f32 %v68, %v1616
    %v1618 = vand.u32 %v1617, 4294901760
    %1619 = vmatpush1.msra.mxu0 %v1618
    %1620 = vmatprep.subr.mxu0 0.0
    %v1621 = vand.u32 %v67, 4294901760
    %v1622 = vsub.f32 %v67, %v1621
    %v1623 = vand.u32 %v1622, 4294901760
    %1624 = vmatpush1.msra.mxu0 %v1623
    %1625 = vmatprep.subr.mxu0 0.0
    %v1626 = vand.u32 %v66, 4294901760
    %v1627 = vsub.f32 %v66, %v1626
    %v1628 = vand.u32 %v1627, 4294901760
    %1629 = vmatpush1.msra.mxu0 %v1628
    %1630 = vmatprep.subr.mxu0 0.0
    %v1631 = vand.u32 %v97, 4294901760
    %v1632 = vsub.f32 %v97, %v1631
    %v1633 = vand.u32 %v1632, 4294901760
    %1634 = vmatpush2.msra.mxu0 %v1633
    %1635 = vmatprep.subr.mxu0 0.0
    %v1636 = vand.u32 %v96, 4294901760
    %v1637 = vsub.f32 %v96, %v1636
    %v1638 = vand.u32 %v1637, 4294901760
    %1639 = vmatpush2.msra.mxu0 %v1638
    %1640 = vmatprep.subr.mxu0 0.0
    %v1641 = vand.u32 %v95, 4294901760
    %v1642 = vsub.f32 %v95, %v1641
    %v1643 = vand.u32 %v1642, 4294901760
    %1644 = vmatpush2.msra.mxu0 %v1643
    %1645 = vmatprep.subr.mxu0 0.0
    %v1646 = vand.u32 %v94, 4294901760
    %v1647 = vsub.f32 %v94, %v1646
    %v1648 = vand.u32 %v1647, 4294901760
    %1649 = vmatpush2.msra.mxu0 %v1648
    %1650 = vmatprep.subr.mxu0 0.0
    %v1651 = vand.u32 %v93, 4294901760
    %v1652 = vsub.f32 %v93, %v1651
    %v1653 = vand.u32 %v1652, 4294901760
    %1654 = vmatpush2.msra.mxu0 %v1653
    %1655 = vmatprep.subr.mxu0 0.0
    %v1656 = vand.u32 %v92, 4294901760
    %v1657 = vsub.f32 %v92, %v1656
    %v1658 = vand.u32 %v1657, 4294901760
    %1659 = vmatpush2.msra.mxu0 %v1658
    %1660 = vmatprep.subr.mxu0 0.0
    %v1661 = vand.u32 %v91, 4294901760
    %v1662 = vsub.f32 %v91, %v1661
    %v1663 = vand.u32 %v1662, 4294901760
    %1664 = vmatpush2.msra.mxu0 %v1663
    %1665 = vmatprep.subr.mxu0 0.0
    %v1666 = vand.u32 %v90, 4294901760
    %v1667 = vsub.f32 %v90, %v1666
    %v1668 = vand.u32 %v1667, 4294901760
    %1669 = vmatpush2.msra.mxu0 %v1668
    %1670 = vmatprep.subr.mxu0 0.0
    %v1671 = vand.u32 %v89, 4294901760
    %v1672 = vsub.f32 %v89, %v1671
    %v1673 = vand.u32 %v1672, 4294901760
    %1674 = vmatpush2.msra.mxu0 %v1673
    %1675 = vmatprep.subr.mxu0 0.0
    %v1676 = vand.u32 %v88, 4294901760
    %v1677 = vsub.f32 %v88, %v1676
    %v1678 = vand.u32 %v1677, 4294901760
    %1679 = vmatpush2.msra.mxu0 %v1678
    %1680 = vmatprep.subr.mxu0 0.0
    %v1681 = vand.u32 %v87, 4294901760
    %v1682 = vsub.f32 %v87, %v1681
    %v1683 = vand.u32 %v1682, 4294901760
    %1684 = vmatpush2.msra.mxu0 %v1683
    %1685 = vmatprep.subr.mxu0 0.0
    %v1686 = vand.u32 %v86, 4294901760
    %v1687 = vsub.f32 %v86, %v1686
    %v1688 = vand.u32 %v1687, 4294901760
    %1689 = vmatpush2.msra.mxu0 %v1688
    %1690 = vmatprep.subr.mxu0 0.0
    %v1691 = vand.u32 %v85, 4294901760
    %v1692 = vsub.f32 %v85, %v1691
    %v1693 = vand.u32 %v1692, 4294901760
    %1694 = vmatpush2.msra.mxu0 %v1693
    %1695 = vmatprep.subr.mxu0 0.0
    %v1696 = vand.u32 %v84, 4294901760
    %v1697 = vsub.f32 %v84, %v1696
    %v1698 = vand.u32 %v1697, 4294901760
    %1699 = vmatpush2.msra.mxu0 %v1698
    %1700 = vmatprep.subr.mxu0 0.0
    %v1701 = vand.u32 %v83, 4294901760
    %v1702 = vsub.f32 %v83, %v1701
    %v1703 = vand.u32 %v1702, 4294901760
    %1704 = vmatpush2.msra.mxu0 %v1703
    %1705 = vmatprep.subr.mxu0 0.0
    %v1706 = vand.u32 %v82, 4294901760
    %v1707 = vsub.f32 %v82, %v1706
    %v1708 = vand.u32 %v1707, 4294901760
    %1709 = vmatpush2.msra.mxu0 %v1708
    %v1710 = vand.u32 %v33, 4294901760
    %1711 = vmatprep.mubr.f32.mxu0 %v1710
    %v1712 = vand.u32 %v32, 4294901760
    %1713 = vmatmul.mubr.f32.gmra.mxu0 %v1712
    %v1714 = vpop.f32.mrf.mxu0
    %v1715 = vadd.f32 %v1547, %v1714
    %v1716 = vpop.f32.mrf.mxu0
    %1717 = vdwg.mxu0
    %1718 = vmatprep.subr.mxu0 0.0
    %v1719 = vand.u32 %v81, 4294901760
    %1720 = vmatpush1.msra.mxu0 %v1719
    %1721 = vmatprep.subr.mxu0 0.0
    %v1722 = vand.u32 %v80, 4294901760
    %1723 = vmatpush1.msra.mxu0 %v1722
    %1724 = vmatprep.subr.mxu0 0.0
    %v1725 = vand.u32 %v79, 4294901760
    %1726 = vmatpush1.msra.mxu0 %v1725
    %1727 = vmatprep.subr.mxu0 0.0
    %v1728 = vand.u32 %v78, 4294901760
    %1729 = vmatpush1.msra.mxu0 %v1728
    %1730 = vmatprep.subr.mxu0 0.0
    %v1731 = vand.u32 %v77, 4294901760
    %1732 = vmatpush1.msra.mxu0 %v1731
    %1733 = vmatprep.subr.mxu0 0.0
    %v1734 = vand.u32 %v76, 4294901760
    %1735 = vmatpush1.msra.mxu0 %v1734
    %1736 = vmatprep.subr.mxu0 0.0
    %v1737 = vand.u32 %v75, 4294901760
    %1738 = vmatpush1.msra.mxu0 %v1737
    %1739 = vmatprep.subr.mxu0 0.0
    %v1740 = vand.u32 %v74, 4294901760
    %1741 = vmatpush1.msra.mxu0 %v1740
    %1742 = vmatprep.subr.mxu0 0.0
    %v1743 = vand.u32 %v73, 4294901760
    %1744 = vmatpush1.msra.mxu0 %v1743
    %1745 = vmatprep.subr.mxu0 0.0
    %v1746 = vand.u32 %v72, 4294901760
    %1747 = vmatpush1.msra.mxu0 %v1746
    %1748 = vmatprep.subr.mxu0 0.0
    %v1749 = vand.u32 %v71, 4294901760
    %1750 = vmatpush1.msra.mxu0 %v1749
    %1751 = vmatprep.subr.mxu0 0.0
    %v1752 = vand.u32 %v70, 4294901760
    %1753 = vmatpush1.msra.mxu0 %v1752
    %1754 = vmatprep.subr.mxu0 0.0
    %v1755 = vand.u32 %v69, 4294901760
    %1756 = vmatpush1.msra.mxu0 %v1755
    %1757 = vmatprep.subr.mxu0 0.0
    %v1758 = vand.u32 %v68, 4294901760
    %1759 = vmatpush1.msra.mxu0 %v1758
    %1760 = vmatprep.subr.mxu0 0.0
    %v1761 = vand.u32 %v67, 4294901760
    %1762 = vmatpush1.msra.mxu0 %v1761
    %1763 = vmatprep.subr.mxu0 0.0
    %v1764 = vand.u32 %v66, 4294901760
    %1765 = vmatpush1.msra.mxu0 %v1764
    %1766 = vmatprep.subr.mxu0 0.0
    %v1767 = vand.u32 %v97, 4294901760
    %1768 = vmatpush2.msra.mxu0 %v1767
    %1769 = vmatprep.subr.mxu0 0.0
    %v1770 = vand.u32 %v96, 4294901760
    %1771 = vmatpush2.msra.mxu0 %v1770
    %1772 = vmatprep.subr.mxu0 0.0
    %v1773 = vand.u32 %v95, 4294901760
    %1774 = vmatpush2.msra.mxu0 %v1773
    %1775 = vmatprep.subr.mxu0 0.0
    %v1776 = vand.u32 %v94, 4294901760
    %1777 = vmatpush2.msra.mxu0 %v1776
    %1778 = vmatprep.subr.mxu0 0.0
    %v1779 = vand.u32 %v93, 4294901760
    %1780 = vmatpush2.msra.mxu0 %v1779
    %1781 = vmatprep.subr.mxu0 0.0
    %v1782 = vand.u32 %v92, 4294901760
    %1783 = vmatpush2.msra.mxu0 %v1782
    %1784 = vmatprep.subr.mxu0 0.0
    %v1785 = vand.u32 %v91, 4294901760
    %1786 = vmatpush2.msra.mxu0 %v1785
    %1787 = vmatprep.subr.mxu0 0.0
    %v1788 = vand.u32 %v90, 4294901760
    %1789 = vmatpush2.msra.mxu0 %v1788
    %1790 = vmatprep.subr.mxu0 0.0
    %v1791 = vand.u32 %v89, 4294901760
    %1792 = vmatpush2.msra.mxu0 %v1791
    %1793 = vmatprep.subr.mxu0 0.0
    %v1794 = vand.u32 %v88, 4294901760
    %1795 = vmatpush2.msra.mxu0 %v1794
    %1796 = vmatprep.subr.mxu0 0.0
    %v1797 = vand.u32 %v87, 4294901760
    %1798 = vmatpush2.msra.mxu0 %v1797
    %1799 = vmatprep.subr.mxu0 0.0
    %v1800 = vand.u32 %v86, 4294901760
    %1801 = vmatpush2.msra.mxu0 %v1800
    %1802 = vmatprep.subr.mxu0 0.0
    %v1803 = vand.u32 %v85, 4294901760
    %1804 = vmatpush2.msra.mxu0 %v1803
    %1805 = vmatprep.subr.mxu0 0.0
    %v1806 = vand.u32 %v84, 4294901760
    %1807 = vmatpush2.msra.mxu0 %v1806
    %1808 = vmatprep.subr.mxu0 0.0
    %v1809 = vand.u32 %v83, 4294901760
    %1810 = vmatpush2.msra.mxu0 %v1809
    %1811 = vmatprep.subr.mxu0 0.0
    %v1812 = vand.u32 %v82, 4294901760
    %1813 = vmatpush2.msra.mxu0 %v1812
    %v1814 = vand.u32 %v33, 4294901760
    %1815 = vmatprep.mubr.f32.mxu0 %v1814
    %v1816 = vand.u32 %v32, 4294901760
    %1817 = vmatmul.mubr.f32.gmra.mxu0 %v1816
    %v1818 = vpop.f32.mrf.mxu0
    %v1819 = vadd.f32 %v1715, %v1818
    %v1820 = vpop.f32.mrf.mxu0
    %1821 = vdwg.mxu0
    %v1822 = vmul.f32 %v30, %v30
    %v1823 = vmul.f32 %v31, %v31
    %v1824 = vmul.f32 %v32, %v32
    %v1825 = vmul.f32 %v33, %v33
    %1826 = vmatprep.subr.mxu0 0.0
    %v1827 = vand.u32 %v49, 4294901760
    %1828 = vmatpush1.msra.mxu0 %v1827
    %1829 = vmatprep.subr.mxu0 0.0
    %v1830 = vand.u32 %v48, 4294901760
    %1831 = vmatpush1.msra.mxu0 %v1830
    %1832 = vmatprep.subr.mxu0 0.0
    %v1833 = vand.u32 %v47, 4294901760
    %1834 = vmatpush1.msra.mxu0 %v1833
    %1835 = vmatprep.subr.mxu0 0.0
    %v1836 = vand.u32 %v46, 4294901760
    %1837 = vmatpush1.msra.mxu0 %v1836
    %1838 = vmatprep.subr.mxu0 0.0
    %v1839 = vand.u32 %v45, 4294901760
    %1840 = vmatpush1.msra.mxu0 %v1839
    %1841 = vmatprep.subr.mxu0 0.0
    %v1842 = vand.u32 %v44, 4294901760
    %1843 = vmatpush1.msra.mxu0 %v1842
    %1844 = vmatprep.subr.mxu0 0.0
    %v1845 = vand.u32 %v43, 4294901760
    %1846 = vmatpush1.msra.mxu0 %v1845
    %1847 = vmatprep.subr.mxu0 0.0
    %v1848 = vand.u32 %v42, 4294901760
    %1849 = vmatpush1.msra.mxu0 %v1848
    %1850 = vmatprep.subr.mxu0 0.0
    %v1851 = vand.u32 %v41, 4294901760
    %1852 = vmatpush1.msra.mxu0 %v1851
    %1853 = vmatprep.subr.mxu0 0.0
    %v1854 = vand.u32 %v40, 4294901760
    %1855 = vmatpush1.msra.mxu0 %v1854
    %1856 = vmatprep.subr.mxu0 0.0
    %v1857 = vand.u32 %v39, 4294901760
    %1858 = vmatpush1.msra.mxu0 %v1857
    %1859 = vmatprep.subr.mxu0 0.0
    %v1860 = vand.u32 %v38, 4294901760
    %1861 = vmatpush1.msra.mxu0 %v1860
    %1862 = vmatprep.subr.mxu0 0.0
    %v1863 = vand.u32 %v37, 4294901760
    %1864 = vmatpush1.msra.mxu0 %v1863
    %1865 = vmatprep.subr.mxu0 0.0
    %v1866 = vand.u32 %v36, 4294901760
    %1867 = vmatpush1.msra.mxu0 %v1866
    %1868 = vmatprep.subr.mxu0 0.0
    %v1869 = vand.u32 %v35, 4294901760
    %1870 = vmatpush1.msra.mxu0 %v1869
    %1871 = vmatprep.subr.mxu0 0.0
    %v1872 = vand.u32 %v34, 4294901760
    %1873 = vmatpush1.msra.mxu0 %v1872
    %1874 = vmatprep.subr.mxu0 0.0
    %v1875 = vand.u32 %v65, 4294901760
    %1876 = vmatpush2.msra.mxu0 %v1875
    %1877 = vmatprep.subr.mxu0 0.0
    %v1878 = vand.u32 %v64, 4294901760
    %1879 = vmatpush2.msra.mxu0 %v1878
    %1880 = vmatprep.subr.mxu0 0.0
    %v1881 = vand.u32 %v63, 4294901760
    %1882 = vmatpush2.msra.mxu0 %v1881
    %1883 = vmatprep.subr.mxu0 0.0
    %v1884 = vand.u32 %v62, 4294901760
    %1885 = vmatpush2.msra.mxu0 %v1884
    %1886 = vmatprep.subr.mxu0 0.0
    %v1887 = vand.u32 %v61, 4294901760
    %1888 = vmatpush2.msra.mxu0 %v1887
    %1889 = vmatprep.subr.mxu0 0.0
    %v1890 = vand.u32 %v60, 4294901760
    %1891 = vmatpush2.msra.mxu0 %v1890
    %1892 = vmatprep.subr.mxu0 0.0
    %v1893 = vand.u32 %v59, 4294901760
    %1894 = vmatpush2.msra.mxu0 %v1893
    %1895 = vmatprep.subr.mxu0 0.0
    %v1896 = vand.u32 %v58, 4294901760
    %1897 = vmatpush2.msra.mxu0 %v1896
    %1898 = vmatprep.subr.mxu0 0.0
    %v1899 = vand.u32 %v57, 4294901760
    %1900 = vmatpush2.msra.mxu0 %v1899
    %1901 = vmatprep.subr.mxu0 0.0
    %v1902 = vand.u32 %v56, 4294901760
    %1903 = vmatpush2.msra.mxu0 %v1902
    %1904 = vmatprep.subr.mxu0 0.0
    %v1905 = vand.u32 %v55, 4294901760
    %1906 = vmatpush2.msra.mxu0 %v1905
    %1907 = vmatprep.subr.mxu0 0.0
    %v1908 = vand.u32 %v54, 4294901760
    %1909 = vmatpush2.msra.mxu0 %v1908
    %1910 = vmatprep.subr.mxu0 0.0
    %v1911 = vand.u32 %v53, 4294901760
    %1912 = vmatpush2.msra.mxu0 %v1911
    %1913 = vmatprep.subr.mxu0 0.0
    %v1914 = vand.u32 %v52, 4294901760
    %1915 = vmatpush2.msra.mxu0 %v1914
    %1916 = vmatprep.subr.mxu0 0.0
    %v1917 = vand.u32 %v51, 4294901760
    %1918 = vmatpush2.msra.mxu0 %v1917
    %1919 = vmatprep.subr.mxu0 0.0
    %v1920 = vand.u32 %v50, 4294901760
    %1921 = vmatpush2.msra.mxu0 %v1920
    %v1922 = vand.u32 %v1823, 4294901760
    %v1923 = vsub.f32 %v1823, %v1922
    %v1924 = vand.u32 %v1923, 4294901760
    %v1925 = vsub.f32 %v1923, %v1924
    %v1926 = vand.u32 %v1925, 4294901760
    %1927 = vmatprep.mubr.f32.mxu0 %v1926
    %v1928 = vand.u32 %v1822, 4294901760
    %v1929 = vsub.f32 %v1822, %v1928
    %v1930 = vand.u32 %v1929, 4294901760
    %v1931 = vsub.f32 %v1929, %v1930
    %v1932 = vand.u32 %v1931, 4294901760
    %1933 = vmatmul.mubr.f32.gmra.mxu0 %v1932
    %v1934 = vpop.f32.mrf.mxu0
    %v1935 = vadd.f32 0.0, %v1934
    %v1936 = vpop.f32.mrf.mxu0
    %1937 = vdwg.mxu0
    %1938 = vmatprep.subr.mxu0 0.0
    %v1939 = vand.u32 %v49, 4294901760
    %v1940 = vsub.f32 %v49, %v1939
    %v1941 = vand.u32 %v1940, 4294901760
    %v1942 = vsub.f32 %v1940, %v1941
    %v1943 = vand.u32 %v1942, 4294901760
    %1944 = vmatpush1.msra.mxu0 %v1943
    %1945 = vmatprep.subr.mxu0 0.0
    %v1946 = vand.u32 %v48, 4294901760
    %v1947 = vsub.f32 %v48, %v1946
    %v1948 = vand.u32 %v1947, 4294901760
    %v1949 = vsub.f32 %v1947, %v1948
    %v1950 = vand.u32 %v1949, 4294901760
    %1951 = vmatpush1.msra.mxu0 %v1950
    %1952 = vmatprep.subr.mxu0 0.0
    %v1953 = vand.u32 %v47, 4294901760
    %v1954 = vsub.f32 %v47, %v1953
    %v1955 = vand.u32 %v1954, 4294901760
    %v1956 = vsub.f32 %v1954, %v1955
    %v1957 = vand.u32 %v1956, 4294901760
    %1958 = vmatpush1.msra.mxu0 %v1957
    %1959 = vmatprep.subr.mxu0 0.0
    %v1960 = vand.u32 %v46, 4294901760
    %v1961 = vsub.f32 %v46, %v1960
    %v1962 = vand.u32 %v1961, 4294901760
    %v1963 = vsub.f32 %v1961, %v1962
    %v1964 = vand.u32 %v1963, 4294901760
    %1965 = vmatpush1.msra.mxu0 %v1964
    %1966 = vmatprep.subr.mxu0 0.0
    %v1967 = vand.u32 %v45, 4294901760
    %v1968 = vsub.f32 %v45, %v1967
    %v1969 = vand.u32 %v1968, 4294901760
    %v1970 = vsub.f32 %v1968, %v1969
    %v1971 = vand.u32 %v1970, 4294901760
    %1972 = vmatpush1.msra.mxu0 %v1971
    %1973 = vmatprep.subr.mxu0 0.0
    %v1974 = vand.u32 %v44, 4294901760
    %v1975 = vsub.f32 %v44, %v1974
    %v1976 = vand.u32 %v1975, 4294901760
    %v1977 = vsub.f32 %v1975, %v1976
    %v1978 = vand.u32 %v1977, 4294901760
    %1979 = vmatpush1.msra.mxu0 %v1978
    %1980 = vmatprep.subr.mxu0 0.0
    %v1981 = vand.u32 %v43, 4294901760
    %v1982 = vsub.f32 %v43, %v1981
    %v1983 = vand.u32 %v1982, 4294901760
    %v1984 = vsub.f32 %v1982, %v1983
    %v1985 = vand.u32 %v1984, 4294901760
    %1986 = vmatpush1.msra.mxu0 %v1985
    %1987 = vmatprep.subr.mxu0 0.0
    %v1988 = vand.u32 %v42, 4294901760
    %v1989 = vsub.f32 %v42, %v1988
    %v1990 = vand.u32 %v1989, 4294901760
    %v1991 = vsub.f32 %v1989, %v1990
    %v1992 = vand.u32 %v1991, 4294901760
    %1993 = vmatpush1.msra.mxu0 %v1992
    %1994 = vmatprep.subr.mxu0 0.0
    %v1995 = vand.u32 %v41, 4294901760
    %v1996 = vsub.f32 %v41, %v1995
    %v1997 = vand.u32 %v1996, 4294901760
    %v1998 = vsub.f32 %v1996, %v1997
    %v1999 = vand.u32 %v1998, 4294901760
    %2000 = vmatpush1.msra.mxu0 %v1999
    %2001 = vmatprep.subr.mxu0 0.0
    %v2002 = vand.u32 %v40, 4294901760
    %v2003 = vsub.f32 %v40, %v2002
    %v2004 = vand.u32 %v2003, 4294901760
    %v2005 = vsub.f32 %v2003, %v2004
    %v2006 = vand.u32 %v2005, 4294901760
    %2007 = vmatpush1.msra.mxu0 %v2006
    %2008 = vmatprep.subr.mxu0 0.0
    %v2009 = vand.u32 %v39, 4294901760
    %v2010 = vsub.f32 %v39, %v2009
    %v2011 = vand.u32 %v2010, 4294901760
    %v2012 = vsub.f32 %v2010, %v2011
    %v2013 = vand.u32 %v2012, 4294901760
    %2014 = vmatpush1.msra.mxu0 %v2013
    %2015 = vmatprep.subr.mxu0 0.0
    %v2016 = vand.u32 %v38, 4294901760
    %v2017 = vsub.f32 %v38, %v2016
    %v2018 = vand.u32 %v2017, 4294901760
    %v2019 = vsub.f32 %v2017, %v2018
    %v2020 = vand.u32 %v2019, 4294901760
    %2021 = vmatpush1.msra.mxu0 %v2020
    %2022 = vmatprep.subr.mxu0 0.0
    %v2023 = vand.u32 %v37, 4294901760
    %v2024 = vsub.f32 %v37, %v2023
    %v2025 = vand.u32 %v2024, 4294901760
    %v2026 = vsub.f32 %v2024, %v2025
    %v2027 = vand.u32 %v2026, 4294901760
    %2028 = vmatpush1.msra.mxu0 %v2027
    %2029 = vmatprep.subr.mxu0 0.0
    %v2030 = vand.u32 %v36, 4294901760
    %v2031 = vsub.f32 %v36, %v2030
    %v2032 = vand.u32 %v2031, 4294901760
    %v2033 = vsub.f32 %v2031, %v2032
    %v2034 = vand.u32 %v2033, 4294901760
    %2035 = vmatpush1.msra.mxu0 %v2034
    %2036 = vmatprep.subr.mxu0 0.0
    %v2037 = vand.u32 %v35, 4294901760
    %v2038 = vsub.f32 %v35, %v2037
    %v2039 = vand.u32 %v2038, 4294901760
    %v2040 = vsub.f32 %v2038, %v2039
    %v2041 = vand.u32 %v2040, 4294901760
    %2042 = vmatpush1.msra.mxu0 %v2041
    %2043 = vmatprep.subr.mxu0 0.0
    %v2044 = vand.u32 %v34, 4294901760
    %v2045 = vsub.f32 %v34, %v2044
    %v2046 = vand.u32 %v2045, 4294901760
    %v2047 = vsub.f32 %v2045, %v2046
    %v2048 = vand.u32 %v2047, 4294901760
    %2049 = vmatpush1.msra.mxu0 %v2048
    %2050 = vmatprep.subr.mxu0 0.0
    %v2051 = vand.u32 %v65, 4294901760
    %v2052 = vsub.f32 %v65, %v2051
    %v2053 = vand.u32 %v2052, 4294901760
    %v2054 = vsub.f32 %v2052, %v2053
    %v2055 = vand.u32 %v2054, 4294901760
    %2056 = vmatpush2.msra.mxu0 %v2055
    %2057 = vmatprep.subr.mxu0 0.0
    %v2058 = vand.u32 %v64, 4294901760
    %v2059 = vsub.f32 %v64, %v2058
    %v2060 = vand.u32 %v2059, 4294901760
    %v2061 = vsub.f32 %v2059, %v2060
    %v2062 = vand.u32 %v2061, 4294901760
    %2063 = vmatpush2.msra.mxu0 %v2062
    %2064 = vmatprep.subr.mxu0 0.0
    %v2065 = vand.u32 %v63, 4294901760
    %v2066 = vsub.f32 %v63, %v2065
    %v2067 = vand.u32 %v2066, 4294901760
    %v2068 = vsub.f32 %v2066, %v2067
    %v2069 = vand.u32 %v2068, 4294901760
    %2070 = vmatpush2.msra.mxu0 %v2069
    %2071 = vmatprep.subr.mxu0 0.0
    %v2072 = vand.u32 %v62, 4294901760
    %v2073 = vsub.f32 %v62, %v2072
    %v2074 = vand.u32 %v2073, 4294901760
    %v2075 = vsub.f32 %v2073, %v2074
    %v2076 = vand.u32 %v2075, 4294901760
    %2077 = vmatpush2.msra.mxu0 %v2076
    %2078 = vmatprep.subr.mxu0 0.0
    %v2079 = vand.u32 %v61, 4294901760
    %v2080 = vsub.f32 %v61, %v2079
    %v2081 = vand.u32 %v2080, 4294901760
    %v2082 = vsub.f32 %v2080, %v2081
    %v2083 = vand.u32 %v2082, 4294901760
    %2084 = vmatpush2.msra.mxu0 %v2083
    %2085 = vmatprep.subr.mxu0 0.0
    %v2086 = vand.u32 %v60, 4294901760
    %v2087 = vsub.f32 %v60, %v2086
    %v2088 = vand.u32 %v2087, 4294901760
    %v2089 = vsub.f32 %v2087, %v2088
    %v2090 = vand.u32 %v2089, 4294901760
    %2091 = vmatpush2.msra.mxu0 %v2090
    %2092 = vmatprep.subr.mxu0 0.0
    %v2093 = vand.u32 %v59, 4294901760
    %v2094 = vsub.f32 %v59, %v2093
    %v2095 = vand.u32 %v2094, 4294901760
    %v2096 = vsub.f32 %v2094, %v2095
    %v2097 = vand.u32 %v2096, 4294901760
    %2098 = vmatpush2.msra.mxu0 %v2097
    %2099 = vmatprep.subr.mxu0 0.0
    %v2100 = vand.u32 %v58, 4294901760
    %v2101 = vsub.f32 %v58, %v2100
    %v2102 = vand.u32 %v2101, 4294901760
    %v2103 = vsub.f32 %v2101, %v2102
    %v2104 = vand.u32 %v2103, 4294901760
    %2105 = vmatpush2.msra.mxu0 %v2104
    %2106 = vmatprep.subr.mxu0 0.0
    %v2107 = vand.u32 %v57, 4294901760
    %v2108 = vsub.f32 %v57, %v2107
    %v2109 = vand.u32 %v2108, 4294901760
    %v2110 = vsub.f32 %v2108, %v2109
    %v2111 = vand.u32 %v2110, 4294901760
    %2112 = vmatpush2.msra.mxu0 %v2111
    %2113 = vmatprep.subr.mxu0 0.0
    %v2114 = vand.u32 %v56, 4294901760
    %v2115 = vsub.f32 %v56, %v2114
    %v2116 = vand.u32 %v2115, 4294901760
    %v2117 = vsub.f32 %v2115, %v2116
    %v2118 = vand.u32 %v2117, 4294901760
    %2119 = vmatpush2.msra.mxu0 %v2118
    %2120 = vmatprep.subr.mxu0 0.0
    %v2121 = vand.u32 %v55, 4294901760
    %v2122 = vsub.f32 %v55, %v2121
    %v2123 = vand.u32 %v2122, 4294901760
    %v2124 = vsub.f32 %v2122, %v2123
    %v2125 = vand.u32 %v2124, 4294901760
    %2126 = vmatpush2.msra.mxu0 %v2125
    %2127 = vmatprep.subr.mxu0 0.0
    %v2128 = vand.u32 %v54, 4294901760
    %v2129 = vsub.f32 %v54, %v2128
    %v2130 = vand.u32 %v2129, 4294901760
    %v2131 = vsub.f32 %v2129, %v2130
    %v2132 = vand.u32 %v2131, 4294901760
    %2133 = vmatpush2.msra.mxu0 %v2132
    %2134 = vmatprep.subr.mxu0 0.0
    %v2135 = vand.u32 %v53, 4294901760
    %v2136 = vsub.f32 %v53, %v2135
    %v2137 = vand.u32 %v2136, 4294901760
    %v2138 = vsub.f32 %v2136, %v2137
    %v2139 = vand.u32 %v2138, 4294901760
    %2140 = vmatpush2.msra.mxu0 %v2139
    %2141 = vmatprep.subr.mxu0 0.0
    %v2142 = vand.u32 %v52, 4294901760
    %v2143 = vsub.f32 %v52, %v2142
    %v2144 = vand.u32 %v2143, 4294901760
    %v2145 = vsub.f32 %v2143, %v2144
    %v2146 = vand.u32 %v2145, 4294901760
    %2147 = vmatpush2.msra.mxu0 %v2146
    %2148 = vmatprep.subr.mxu0 0.0
    %v2149 = vand.u32 %v51, 4294901760
    %v2150 = vsub.f32 %v51, %v2149
    %v2151 = vand.u32 %v2150, 4294901760
    %v2152 = vsub.f32 %v2150, %v2151
    %v2153 = vand.u32 %v2152, 4294901760
    %2154 = vmatpush2.msra.mxu0 %v2153
    %2155 = vmatprep.subr.mxu0 0.0
    %v2156 = vand.u32 %v50, 4294901760
    %v2157 = vsub.f32 %v50, %v2156
    %v2158 = vand.u32 %v2157, 4294901760
    %v2159 = vsub.f32 %v2157, %v2158
    %v2160 = vand.u32 %v2159, 4294901760
    %2161 = vmatpush2.msra.mxu0 %v2160
    %v2162 = vand.u32 %v1823, 4294901760
    %2163 = vmatprep.mubr.f32.mxu0 %v2162
    %v2164 = vand.u32 %v1822, 4294901760
    %2165 = vmatmul.mubr.f32.gmra.mxu0 %v2164
    %v2166 = vpop.f32.mrf.mxu0
    %v2167 = vadd.f32 %v1935, %v2166
    %v2168 = vpop.f32.mrf.mxu0
    %2169 = vdwg.mxu0
    %2170 = vmatprep.subr.mxu0 0.0
    %v2171 = vand.u32 %v49, 4294901760
    %v2172 = vsub.f32 %v49, %v2171
    %2173 = vmatpush1.msra.mxu0 %v2172
    %2174 = vmatprep.subr.mxu0 0.0
    %v2175 = vand.u32 %v48, 4294901760
    %v2176 = vsub.f32 %v48, %v2175
    %2177 = vmatpush1.msra.mxu0 %v2176
    %2178 = vmatprep.subr.mxu0 0.0
    %v2179 = vand.u32 %v47, 4294901760
    %v2180 = vsub.f32 %v47, %v2179
    %2181 = vmatpush1.msra.mxu0 %v2180
    %2182 = vmatprep.subr.mxu0 0.0
    %v2183 = vand.u32 %v46, 4294901760
    %v2184 = vsub.f32 %v46, %v2183
    %2185 = vmatpush1.msra.mxu0 %v2184
    %2186 = vmatprep.subr.mxu0 0.0
    %v2187 = vand.u32 %v45, 4294901760
    %v2188 = vsub.f32 %v45, %v2187
    %2189 = vmatpush1.msra.mxu0 %v2188
    %2190 = vmatprep.subr.mxu0 0.0
    %v2191 = vand.u32 %v44, 4294901760
    %v2192 = vsub.f32 %v44, %v2191
    %2193 = vmatpush1.msra.mxu0 %v2192
    %2194 = vmatprep.subr.mxu0 0.0
    %v2195 = vand.u32 %v43, 4294901760
    %v2196 = vsub.f32 %v43, %v2195
    %2197 = vmatpush1.msra.mxu0 %v2196
    %2198 = vmatprep.subr.mxu0 0.0
    %v2199 = vand.u32 %v42, 4294901760
    %v2200 = vsub.f32 %v42, %v2199
    %2201 = vmatpush1.msra.mxu0 %v2200
    %2202 = vmatprep.subr.mxu0 0.0
    %v2203 = vand.u32 %v41, 4294901760
    %v2204 = vsub.f32 %v41, %v2203
    %2205 = vmatpush1.msra.mxu0 %v2204
    %2206 = vmatprep.subr.mxu0 0.0
    %v2207 = vand.u32 %v40, 4294901760
    %v2208 = vsub.f32 %v40, %v2207
    %2209 = vmatpush1.msra.mxu0 %v2208
    %2210 = vmatprep.subr.mxu0 0.0
    %v2211 = vand.u32 %v39, 4294901760
    %v2212 = vsub.f32 %v39, %v2211
    %2213 = vmatpush1.msra.mxu0 %v2212
    %2214 = vmatprep.subr.mxu0 0.0
    %v2215 = vand.u32 %v38, 4294901760
    %v2216 = vsub.f32 %v38, %v2215
    %2217 = vmatpush1.msra.mxu0 %v2216
    %2218 = vmatprep.subr.mxu0 0.0
    %v2219 = vand.u32 %v37, 4294901760
    %v2220 = vsub.f32 %v37, %v2219
    %2221 = vmatpush1.msra.mxu0 %v2220
    %2222 = vmatprep.subr.mxu0 0.0
    %v2223 = vand.u32 %v36, 4294901760
    %v2224 = vsub.f32 %v36, %v2223
    %2225 = vmatpush1.msra.mxu0 %v2224
    %2226 = vmatprep.subr.mxu0 0.0
    %v2227 = vand.u32 %v35, 4294901760
    %v2228 = vsub.f32 %v35, %v2227
    %2229 = vmatpush1.msra.mxu0 %v2228
    %2230 = vmatprep.subr.mxu0 0.0
    %v2231 = vand.u32 %v34, 4294901760
    %v2232 = vsub.f32 %v34, %v2231
    %2233 = vmatpush1.msra.mxu0 %v2232
    %2234 = vmatprep.subr.mxu0 0.0
    %v2235 = vand.u32 %v65, 4294901760
    %v2236 = vsub.f32 %v65, %v2235
    %2237 = vmatpush2.msra.mxu0 %v2236
    %2238 = vmatprep.subr.mxu0 0.0
    %v2239 = vand.u32 %v64, 4294901760
    %v2240 = vsub.f32 %v64, %v2239
    %2241 = vmatpush2.msra.mxu0 %v2240
    %2242 = vmatprep.subr.mxu0 0.0
    %v2243 = vand.u32 %v63, 4294901760
    %v2244 = vsub.f32 %v63, %v2243
    %2245 = vmatpush2.msra.mxu0 %v2244
    %2246 = vmatprep.subr.mxu0 0.0
    %v2247 = vand.u32 %v62, 4294901760
    %v2248 = vsub.f32 %v62, %v2247
    %2249 = vmatpush2.msra.mxu0 %v2248
    %2250 = vmatprep.subr.mxu0 0.0
    %v2251 = vand.u32 %v61, 4294901760
    %v2252 = vsub.f32 %v61, %v2251
    %2253 = vmatpush2.msra.mxu0 %v2252
    %2254 = vmatprep.subr.mxu0 0.0
    %v2255 = vand.u32 %v60, 4294901760
    %v2256 = vsub.f32 %v60, %v2255
    %2257 = vmatpush2.msra.mxu0 %v2256
    %2258 = vmatprep.subr.mxu0 0.0
    %v2259 = vand.u32 %v59, 4294901760
    %v2260 = vsub.f32 %v59, %v2259
    %2261 = vmatpush2.msra.mxu0 %v2260
    %2262 = vmatprep.subr.mxu0 0.0
    %v2263 = vand.u32 %v58, 4294901760
    %v2264 = vsub.f32 %v58, %v2263
    %2265 = vmatpush2.msra.mxu0 %v2264
    %2266 = vmatprep.subr.mxu0 0.0
    %v2267 = vand.u32 %v57, 4294901760
    %v2268 = vsub.f32 %v57, %v2267
    %2269 = vmatpush2.msra.mxu0 %v2268
    %2270 = vmatprep.subr.mxu0 0.0
    %v2271 = vand.u32 %v56, 4294901760
    %v2272 = vsub.f32 %v56, %v2271
    %2273 = vmatpush2.msra.mxu0 %v2272
    %2274 = vmatprep.subr.mxu0 0.0
    %v2275 = vand.u32 %v55, 4294901760
    %v2276 = vsub.f32 %v55, %v2275
    %2277 = vmatpush2.msra.mxu0 %v2276
    %2278 = vmatprep.subr.mxu0 0.0
    %v2279 = vand.u32 %v54, 4294901760
    %v2280 = vsub.f32 %v54, %v2279
    %2281 = vmatpush2.msra.mxu0 %v2280
    %2282 = vmatprep.subr.mxu0 0.0
    %v2283 = vand.u32 %v53, 4294901760
    %v2284 = vsub.f32 %v53, %v2283
    %2285 = vmatpush2.msra.mxu0 %v2284
    %2286 = vmatprep.subr.mxu0 0.0
    %v2287 = vand.u32 %v52, 4294901760
    %v2288 = vsub.f32 %v52, %v2287
    %2289 = vmatpush2.msra.mxu0 %v2288
    %2290 = vmatprep.subr.mxu0 0.0
    %v2291 = vand.u32 %v51, 4294901760
    %v2292 = vsub.f32 %v51, %v2291
    %2293 = vmatpush2.msra.mxu0 %v2292
    %2294 = vmatprep.subr.mxu0 0.0
    %v2295 = vand.u32 %v50, 4294901760
    %v2296 = vsub.f32 %v50, %v2295
    %2297 = vmatpush2.msra.mxu0 %v2296
    %v2298 = vand.u32 %v1823, 4294901760
    %v2299 = vsub.f32 %v1823, %v2298
    %2300 = vmatprep.mubr.f32.mxu0 %v2299
    %v2301 = vand.u32 %v1822, 4294901760
    %v2302 = vsub.f32 %v1822, %v2301
    %2303 = vmatmul.mubr.f32.gmra.mxu0 %v2302
    %v2304 = vpop.f32.mrf.mxu0
    %v2305 = vadd.f32 %v2167, %v2304
    %v2306 = vpop.f32.mrf.mxu0
    %2307 = vdwg.mxu0
    %2308 = vmatprep.subr.mxu0 0.0
    %v2309 = vand.u32 %v49, 4294901760
    %2310 = vmatpush1.msra.mxu0 %v2309
    %2311 = vmatprep.subr.mxu0 0.0
    %v2312 = vand.u32 %v48, 4294901760
    %2313 = vmatpush1.msra.mxu0 %v2312
    %2314 = vmatprep.subr.mxu0 0.0
    %v2315 = vand.u32 %v47, 4294901760
    %2316 = vmatpush1.msra.mxu0 %v2315
    %2317 = vmatprep.subr.mxu0 0.0
    %v2318 = vand.u32 %v46, 4294901760
    %2319 = vmatpush1.msra.mxu0 %v2318
    %2320 = vmatprep.subr.mxu0 0.0
    %v2321 = vand.u32 %v45, 4294901760
    %2322 = vmatpush1.msra.mxu0 %v2321
    %2323 = vmatprep.subr.mxu0 0.0
    %v2324 = vand.u32 %v44, 4294901760
    %2325 = vmatpush1.msra.mxu0 %v2324
    %2326 = vmatprep.subr.mxu0 0.0
    %v2327 = vand.u32 %v43, 4294901760
    %2328 = vmatpush1.msra.mxu0 %v2327
    %2329 = vmatprep.subr.mxu0 0.0
    %v2330 = vand.u32 %v42, 4294901760
    %2331 = vmatpush1.msra.mxu0 %v2330
    %2332 = vmatprep.subr.mxu0 0.0
    %v2333 = vand.u32 %v41, 4294901760
    %2334 = vmatpush1.msra.mxu0 %v2333
    %2335 = vmatprep.subr.mxu0 0.0
    %v2336 = vand.u32 %v40, 4294901760
    %2337 = vmatpush1.msra.mxu0 %v2336
    %2338 = vmatprep.subr.mxu0 0.0
    %v2339 = vand.u32 %v39, 4294901760
    %2340 = vmatpush1.msra.mxu0 %v2339
    %2341 = vmatprep.subr.mxu0 0.0
    %v2342 = vand.u32 %v38, 4294901760
    %2343 = vmatpush1.msra.mxu0 %v2342
    %2344 = vmatprep.subr.mxu0 0.0
    %v2345 = vand.u32 %v37, 4294901760
    %2346 = vmatpush1.msra.mxu0 %v2345
    %2347 = vmatprep.subr.mxu0 0.0
    %v2348 = vand.u32 %v36, 4294901760
    %2349 = vmatpush1.msra.mxu0 %v2348
    %2350 = vmatprep.subr.mxu0 0.0
    %v2351 = vand.u32 %v35, 4294901760
    %2352 = vmatpush1.msra.mxu0 %v2351
    %2353 = vmatprep.subr.mxu0 0.0
    %v2354 = vand.u32 %v34, 4294901760
    %2355 = vmatpush1.msra.mxu0 %v2354
    %2356 = vmatprep.subr.mxu0 0.0
    %v2357 = vand.u32 %v65, 4294901760
    %2358 = vmatpush2.msra.mxu0 %v2357
    %2359 = vmatprep.subr.mxu0 0.0
    %v2360 = vand.u32 %v64, 4294901760
    %2361 = vmatpush2.msra.mxu0 %v2360
    %2362 = vmatprep.subr.mxu0 0.0
    %v2363 = vand.u32 %v63, 4294901760
    %2364 = vmatpush2.msra.mxu0 %v2363
    %2365 = vmatprep.subr.mxu0 0.0
    %v2366 = vand.u32 %v62, 4294901760
    %2367 = vmatpush2.msra.mxu0 %v2366
    %2368 = vmatprep.subr.mxu0 0.0
    %v2369 = vand.u32 %v61, 4294901760
    %2370 = vmatpush2.msra.mxu0 %v2369
    %2371 = vmatprep.subr.mxu0 0.0
    %v2372 = vand.u32 %v60, 4294901760
    %2373 = vmatpush2.msra.mxu0 %v2372
    %2374 = vmatprep.subr.mxu0 0.0
    %v2375 = vand.u32 %v59, 4294901760
    %2376 = vmatpush2.msra.mxu0 %v2375
    %2377 = vmatprep.subr.mxu0 0.0
    %v2378 = vand.u32 %v58, 4294901760
    %2379 = vmatpush2.msra.mxu0 %v2378
    %2380 = vmatprep.subr.mxu0 0.0
    %v2381 = vand.u32 %v57, 4294901760
    %2382 = vmatpush2.msra.mxu0 %v2381
    %2383 = vmatprep.subr.mxu0 0.0
    %v2384 = vand.u32 %v56, 4294901760
    %2385 = vmatpush2.msra.mxu0 %v2384
    %2386 = vmatprep.subr.mxu0 0.0
    %v2387 = vand.u32 %v55, 4294901760
    %2388 = vmatpush2.msra.mxu0 %v2387
    %2389 = vmatprep.subr.mxu0 0.0
    %v2390 = vand.u32 %v54, 4294901760
    %2391 = vmatpush2.msra.mxu0 %v2390
    %2392 = vmatprep.subr.mxu0 0.0
    %v2393 = vand.u32 %v53, 4294901760
    %2394 = vmatpush2.msra.mxu0 %v2393
    %2395 = vmatprep.subr.mxu0 0.0
    %v2396 = vand.u32 %v52, 4294901760
    %2397 = vmatpush2.msra.mxu0 %v2396
    %2398 = vmatprep.subr.mxu0 0.0
    %v2399 = vand.u32 %v51, 4294901760
    %2400 = vmatpush2.msra.mxu0 %v2399
    %2401 = vmatprep.subr.mxu0 0.0
    %v2402 = vand.u32 %v50, 4294901760
    %2403 = vmatpush2.msra.mxu0 %v2402
    %v2404 = vand.u32 %v1823, 4294901760
    %v2405 = vsub.f32 %v1823, %v2404
    %v2406 = vand.u32 %v2405, 4294901760
    %2407 = vmatprep.mubr.f32.mxu0 %v2406
    %v2408 = vand.u32 %v1822, 4294901760
    %v2409 = vsub.f32 %v1822, %v2408
    %v2410 = vand.u32 %v2409, 4294901760
    %2411 = vmatmul.mubr.f32.gmra.mxu0 %v2410
    %v2412 = vpop.f32.mrf.mxu0
    %v2413 = vadd.f32 %v2305, %v2412
    %v2414 = vpop.f32.mrf.mxu0
    %2415 = vdwg.mxu0
    %2416 = vmatprep.subr.mxu0 0.0
    %v2417 = vand.u32 %v49, 4294901760
    %v2418 = vsub.f32 %v49, %v2417
    %v2419 = vand.u32 %v2418, 4294901760
    %2420 = vmatpush1.msra.mxu0 %v2419
    %2421 = vmatprep.subr.mxu0 0.0
    %v2422 = vand.u32 %v48, 4294901760
    %v2423 = vsub.f32 %v48, %v2422
    %v2424 = vand.u32 %v2423, 4294901760
    %2425 = vmatpush1.msra.mxu0 %v2424
    %2426 = vmatprep.subr.mxu0 0.0
    %v2427 = vand.u32 %v47, 4294901760
    %v2428 = vsub.f32 %v47, %v2427
    %v2429 = vand.u32 %v2428, 4294901760
    %2430 = vmatpush1.msra.mxu0 %v2429
    %2431 = vmatprep.subr.mxu0 0.0
    %v2432 = vand.u32 %v46, 4294901760
    %v2433 = vsub.f32 %v46, %v2432
    %v2434 = vand.u32 %v2433, 4294901760
    %2435 = vmatpush1.msra.mxu0 %v2434
    %2436 = vmatprep.subr.mxu0 0.0
    %v2437 = vand.u32 %v45, 4294901760
    %v2438 = vsub.f32 %v45, %v2437
    %v2439 = vand.u32 %v2438, 4294901760
    %2440 = vmatpush1.msra.mxu0 %v2439
    %2441 = vmatprep.subr.mxu0 0.0
    %v2442 = vand.u32 %v44, 4294901760
    %v2443 = vsub.f32 %v44, %v2442
    %v2444 = vand.u32 %v2443, 4294901760
    %2445 = vmatpush1.msra.mxu0 %v2444
    %2446 = vmatprep.subr.mxu0 0.0
    %v2447 = vand.u32 %v43, 4294901760
    %v2448 = vsub.f32 %v43, %v2447
    %v2449 = vand.u32 %v2448, 4294901760
    %2450 = vmatpush1.msra.mxu0 %v2449
    %2451 = vmatprep.subr.mxu0 0.0
    %v2452 = vand.u32 %v42, 4294901760
    %v2453 = vsub.f32 %v42, %v2452
    %v2454 = vand.u32 %v2453, 4294901760
    %2455 = vmatpush1.msra.mxu0 %v2454
    %2456 = vmatprep.subr.mxu0 0.0
    %v2457 = vand.u32 %v41, 4294901760
    %v2458 = vsub.f32 %v41, %v2457
    %v2459 = vand.u32 %v2458, 4294901760
    %2460 = vmatpush1.msra.mxu0 %v2459
    %2461 = vmatprep.subr.mxu0 0.0
    %v2462 = vand.u32 %v40, 4294901760
    %v2463 = vsub.f32 %v40, %v2462
    %v2464 = vand.u32 %v2463, 4294901760
    %2465 = vmatpush1.msra.mxu0 %v2464
    %2466 = vmatprep.subr.mxu0 0.0
    %v2467 = vand.u32 %v39, 4294901760
    %v2468 = vsub.f32 %v39, %v2467
    %v2469 = vand.u32 %v2468, 4294901760
    %2470 = vmatpush1.msra.mxu0 %v2469
    %2471 = vmatprep.subr.mxu0 0.0
    %v2472 = vand.u32 %v38, 4294901760
    %v2473 = vsub.f32 %v38, %v2472
    %v2474 = vand.u32 %v2473, 4294901760
    %2475 = vmatpush1.msra.mxu0 %v2474
    %2476 = vmatprep.subr.mxu0 0.0
    %v2477 = vand.u32 %v37, 4294901760
    %v2478 = vsub.f32 %v37, %v2477
    %v2479 = vand.u32 %v2478, 4294901760
    %2480 = vmatpush1.msra.mxu0 %v2479
    %2481 = vmatprep.subr.mxu0 0.0
    %v2482 = vand.u32 %v36, 4294901760
    %v2483 = vsub.f32 %v36, %v2482
    %v2484 = vand.u32 %v2483, 4294901760
    %2485 = vmatpush1.msra.mxu0 %v2484
    %2486 = vmatprep.subr.mxu0 0.0
    %v2487 = vand.u32 %v35, 4294901760
    %v2488 = vsub.f32 %v35, %v2487
    %v2489 = vand.u32 %v2488, 4294901760
    %2490 = vmatpush1.msra.mxu0 %v2489
    %2491 = vmatprep.subr.mxu0 0.0
    %v2492 = vand.u32 %v34, 4294901760
    %v2493 = vsub.f32 %v34, %v2492
    %v2494 = vand.u32 %v2493, 4294901760
    %2495 = vmatpush1.msra.mxu0 %v2494
    %2496 = vmatprep.subr.mxu0 0.0
    %v2497 = vand.u32 %v65, 4294901760
    %v2498 = vsub.f32 %v65, %v2497
    %v2499 = vand.u32 %v2498, 4294901760
    %2500 = vmatpush2.msra.mxu0 %v2499
    %2501 = vmatprep.subr.mxu0 0.0
    %v2502 = vand.u32 %v64, 4294901760
    %v2503 = vsub.f32 %v64, %v2502
    %v2504 = vand.u32 %v2503, 4294901760
    %2505 = vmatpush2.msra.mxu0 %v2504
    %2506 = vmatprep.subr.mxu0 0.0
    %v2507 = vand.u32 %v63, 4294901760
    %v2508 = vsub.f32 %v63, %v2507
    %v2509 = vand.u32 %v2508, 4294901760
    %2510 = vmatpush2.msra.mxu0 %v2509
    %2511 = vmatprep.subr.mxu0 0.0
    %v2512 = vand.u32 %v62, 4294901760
    %v2513 = vsub.f32 %v62, %v2512
    %v2514 = vand.u32 %v2513, 4294901760
    %2515 = vmatpush2.msra.mxu0 %v2514
    %2516 = vmatprep.subr.mxu0 0.0
    %v2517 = vand.u32 %v61, 4294901760
    %v2518 = vsub.f32 %v61, %v2517
    %v2519 = vand.u32 %v2518, 4294901760
    %2520 = vmatpush2.msra.mxu0 %v2519
    %2521 = vmatprep.subr.mxu0 0.0
    %v2522 = vand.u32 %v60, 4294901760
    %v2523 = vsub.f32 %v60, %v2522
    %v2524 = vand.u32 %v2523, 4294901760
    %2525 = vmatpush2.msra.mxu0 %v2524
    %2526 = vmatprep.subr.mxu0 0.0
    %v2527 = vand.u32 %v59, 4294901760
    %v2528 = vsub.f32 %v59, %v2527
    %v2529 = vand.u32 %v2528, 4294901760
    %2530 = vmatpush2.msra.mxu0 %v2529
    %2531 = vmatprep.subr.mxu0 0.0
    %v2532 = vand.u32 %v58, 4294901760
    %v2533 = vsub.f32 %v58, %v2532
    %v2534 = vand.u32 %v2533, 4294901760
    %2535 = vmatpush2.msra.mxu0 %v2534
    %2536 = vmatprep.subr.mxu0 0.0
    %v2537 = vand.u32 %v57, 4294901760
    %v2538 = vsub.f32 %v57, %v2537
    %v2539 = vand.u32 %v2538, 4294901760
    %2540 = vmatpush2.msra.mxu0 %v2539
    %2541 = vmatprep.subr.mxu0 0.0
    %v2542 = vand.u32 %v56, 4294901760
    %v2543 = vsub.f32 %v56, %v2542
    %v2544 = vand.u32 %v2543, 4294901760
    %2545 = vmatpush2.msra.mxu0 %v2544
    %2546 = vmatprep.subr.mxu0 0.0
    %v2547 = vand.u32 %v55, 4294901760
    %v2548 = vsub.f32 %v55, %v2547
    %v2549 = vand.u32 %v2548, 4294901760
    %2550 = vmatpush2.msra.mxu0 %v2549
    %2551 = vmatprep.subr.mxu0 0.0
    %v2552 = vand.u32 %v54, 4294901760
    %v2553 = vsub.f32 %v54, %v2552
    %v2554 = vand.u32 %v2553, 4294901760
    %2555 = vmatpush2.msra.mxu0 %v2554
    %2556 = vmatprep.subr.mxu0 0.0
    %v2557 = vand.u32 %v53, 4294901760
    %v2558 = vsub.f32 %v53, %v2557
    %v2559 = vand.u32 %v2558, 4294901760
    %2560 = vmatpush2.msra.mxu0 %v2559
    %2561 = vmatprep.subr.mxu0 0.0
    %v2562 = vand.u32 %v52, 4294901760
    %v2563 = vsub.f32 %v52, %v2562
    %v2564 = vand.u32 %v2563, 4294901760
    %2565 = vmatpush2.msra.mxu0 %v2564
    %2566 = vmatprep.subr.mxu0 0.0
    %v2567 = vand.u32 %v51, 4294901760
    %v2568 = vsub.f32 %v51, %v2567
    %v2569 = vand.u32 %v2568, 4294901760
    %2570 = vmatpush2.msra.mxu0 %v2569
    %2571 = vmatprep.subr.mxu0 0.0
    %v2572 = vand.u32 %v50, 4294901760
    %v2573 = vsub.f32 %v50, %v2572
    %v2574 = vand.u32 %v2573, 4294901760
    %2575 = vmatpush2.msra.mxu0 %v2574
    %v2576 = vand.u32 %v1823, 4294901760
    %2577 = vmatprep.mubr.f32.mxu0 %v2576
    %v2578 = vand.u32 %v1822, 4294901760
    %2579 = vmatmul.mubr.f32.gmra.mxu0 %v2578
    %v2580 = vpop.f32.mrf.mxu0
    %v2581 = vadd.f32 %v2413, %v2580
    %v2582 = vpop.f32.mrf.mxu0
    %2583 = vdwg.mxu0
    %2584 = vmatprep.subr.mxu0 0.0
    %v2585 = vand.u32 %v49, 4294901760
    %2586 = vmatpush1.msra.mxu0 %v2585
    %2587 = vmatprep.subr.mxu0 0.0
    %v2588 = vand.u32 %v48, 4294901760
    %2589 = vmatpush1.msra.mxu0 %v2588
    %2590 = vmatprep.subr.mxu0 0.0
    %v2591 = vand.u32 %v47, 4294901760
    %2592 = vmatpush1.msra.mxu0 %v2591
    %2593 = vmatprep.subr.mxu0 0.0
    %v2594 = vand.u32 %v46, 4294901760
    %2595 = vmatpush1.msra.mxu0 %v2594
    %2596 = vmatprep.subr.mxu0 0.0
    %v2597 = vand.u32 %v45, 4294901760
    %2598 = vmatpush1.msra.mxu0 %v2597
    %2599 = vmatprep.subr.mxu0 0.0
    %v2600 = vand.u32 %v44, 4294901760
    %2601 = vmatpush1.msra.mxu0 %v2600
    %2602 = vmatprep.subr.mxu0 0.0
    %v2603 = vand.u32 %v43, 4294901760
    %2604 = vmatpush1.msra.mxu0 %v2603
    %2605 = vmatprep.subr.mxu0 0.0
    %v2606 = vand.u32 %v42, 4294901760
    %2607 = vmatpush1.msra.mxu0 %v2606
    %2608 = vmatprep.subr.mxu0 0.0
    %v2609 = vand.u32 %v41, 4294901760
    %2610 = vmatpush1.msra.mxu0 %v2609
    %2611 = vmatprep.subr.mxu0 0.0
    %v2612 = vand.u32 %v40, 4294901760
    %2613 = vmatpush1.msra.mxu0 %v2612
    %2614 = vmatprep.subr.mxu0 0.0
    %v2615 = vand.u32 %v39, 4294901760
    %2616 = vmatpush1.msra.mxu0 %v2615
    %2617 = vmatprep.subr.mxu0 0.0
    %v2618 = vand.u32 %v38, 4294901760
    %2619 = vmatpush1.msra.mxu0 %v2618
    %2620 = vmatprep.subr.mxu0 0.0
    %v2621 = vand.u32 %v37, 4294901760
    %2622 = vmatpush1.msra.mxu0 %v2621
    %2623 = vmatprep.subr.mxu0 0.0
    %v2624 = vand.u32 %v36, 4294901760
    %2625 = vmatpush1.msra.mxu0 %v2624
    %2626 = vmatprep.subr.mxu0 0.0
    %v2627 = vand.u32 %v35, 4294901760
    %2628 = vmatpush1.msra.mxu0 %v2627
    %2629 = vmatprep.subr.mxu0 0.0
    %v2630 = vand.u32 %v34, 4294901760
    %2631 = vmatpush1.msra.mxu0 %v2630
    %2632 = vmatprep.subr.mxu0 0.0
    %v2633 = vand.u32 %v65, 4294901760
    %2634 = vmatpush2.msra.mxu0 %v2633
    %2635 = vmatprep.subr.mxu0 0.0
    %v2636 = vand.u32 %v64, 4294901760
    %2637 = vmatpush2.msra.mxu0 %v2636
    %2638 = vmatprep.subr.mxu0 0.0
    %v2639 = vand.u32 %v63, 4294901760
    %2640 = vmatpush2.msra.mxu0 %v2639
    %2641 = vmatprep.subr.mxu0 0.0
    %v2642 = vand.u32 %v62, 4294901760
    %2643 = vmatpush2.msra.mxu0 %v2642
    %2644 = vmatprep.subr.mxu0 0.0
    %v2645 = vand.u32 %v61, 4294901760
    %2646 = vmatpush2.msra.mxu0 %v2645
    %2647 = vmatprep.subr.mxu0 0.0
    %v2648 = vand.u32 %v60, 4294901760
    %2649 = vmatpush2.msra.mxu0 %v2648
    %2650 = vmatprep.subr.mxu0 0.0
    %v2651 = vand.u32 %v59, 4294901760
    %2652 = vmatpush2.msra.mxu0 %v2651
    %2653 = vmatprep.subr.mxu0 0.0
    %v2654 = vand.u32 %v58, 4294901760
    %2655 = vmatpush2.msra.mxu0 %v2654
    %2656 = vmatprep.subr.mxu0 0.0
    %v2657 = vand.u32 %v57, 4294901760
    %2658 = vmatpush2.msra.mxu0 %v2657
    %2659 = vmatprep.subr.mxu0 0.0
    %v2660 = vand.u32 %v56, 4294901760
    %2661 = vmatpush2.msra.mxu0 %v2660
    %2662 = vmatprep.subr.mxu0 0.0
    %v2663 = vand.u32 %v55, 4294901760
    %2664 = vmatpush2.msra.mxu0 %v2663
    %2665 = vmatprep.subr.mxu0 0.0
    %v2666 = vand.u32 %v54, 4294901760
    %2667 = vmatpush2.msra.mxu0 %v2666
    %2668 = vmatprep.subr.mxu0 0.0
    %v2669 = vand.u32 %v53, 4294901760
    %2670 = vmatpush2.msra.mxu0 %v2669
    %2671 = vmatprep.subr.mxu0 0.0
    %v2672 = vand.u32 %v52, 4294901760
    %2673 = vmatpush2.msra.mxu0 %v2672
    %2674 = vmatprep.subr.mxu0 0.0
    %v2675 = vand.u32 %v51, 4294901760
    %2676 = vmatpush2.msra.mxu0 %v2675
    %2677 = vmatprep.subr.mxu0 0.0
    %v2678 = vand.u32 %v50, 4294901760
    %2679 = vmatpush2.msra.mxu0 %v2678
    %v2680 = vand.u32 %v1823, 4294901760
    %2681 = vmatprep.mubr.f32.mxu0 %v2680
    %v2682 = vand.u32 %v1822, 4294901760
    %2683 = vmatmul.mubr.f32.gmra.mxu0 %v2682
    %v2684 = vpop.f32.mrf.mxu0
    %v2685 = vadd.f32 %v2581, %v2684
    %v2686 = vpop.f32.mrf.mxu0
    %2687 = vdwg.mxu0
    %2688 = vmatprep.subr.mxu0 0.0
    %v2689 = vand.u32 %v81, 4294901760
    %2690 = vmatpush1.msra.mxu0 %v2689
    %2691 = vmatprep.subr.mxu0 0.0
    %v2692 = vand.u32 %v80, 4294901760
    %2693 = vmatpush1.msra.mxu0 %v2692
    %2694 = vmatprep.subr.mxu0 0.0
    %v2695 = vand.u32 %v79, 4294901760
    %2696 = vmatpush1.msra.mxu0 %v2695
    %2697 = vmatprep.subr.mxu0 0.0
    %v2698 = vand.u32 %v78, 4294901760
    %2699 = vmatpush1.msra.mxu0 %v2698
    %2700 = vmatprep.subr.mxu0 0.0
    %v2701 = vand.u32 %v77, 4294901760
    %2702 = vmatpush1.msra.mxu0 %v2701
    %2703 = vmatprep.subr.mxu0 0.0
    %v2704 = vand.u32 %v76, 4294901760
    %2705 = vmatpush1.msra.mxu0 %v2704
    %2706 = vmatprep.subr.mxu0 0.0
    %v2707 = vand.u32 %v75, 4294901760
    %2708 = vmatpush1.msra.mxu0 %v2707
    %2709 = vmatprep.subr.mxu0 0.0
    %v2710 = vand.u32 %v74, 4294901760
    %2711 = vmatpush1.msra.mxu0 %v2710
    %2712 = vmatprep.subr.mxu0 0.0
    %v2713 = vand.u32 %v73, 4294901760
    %2714 = vmatpush1.msra.mxu0 %v2713
    %2715 = vmatprep.subr.mxu0 0.0
    %v2716 = vand.u32 %v72, 4294901760
    %2717 = vmatpush1.msra.mxu0 %v2716
    %2718 = vmatprep.subr.mxu0 0.0
    %v2719 = vand.u32 %v71, 4294901760
    %2720 = vmatpush1.msra.mxu0 %v2719
    %2721 = vmatprep.subr.mxu0 0.0
    %v2722 = vand.u32 %v70, 4294901760
    %2723 = vmatpush1.msra.mxu0 %v2722
    %2724 = vmatprep.subr.mxu0 0.0
    %v2725 = vand.u32 %v69, 4294901760
    %2726 = vmatpush1.msra.mxu0 %v2725
    %2727 = vmatprep.subr.mxu0 0.0
    %v2728 = vand.u32 %v68, 4294901760
    %2729 = vmatpush1.msra.mxu0 %v2728
    %2730 = vmatprep.subr.mxu0 0.0
    %v2731 = vand.u32 %v67, 4294901760
    %2732 = vmatpush1.msra.mxu0 %v2731
    %2733 = vmatprep.subr.mxu0 0.0
    %v2734 = vand.u32 %v66, 4294901760
    %2735 = vmatpush1.msra.mxu0 %v2734
    %2736 = vmatprep.subr.mxu0 0.0
    %v2737 = vand.u32 %v97, 4294901760
    %2738 = vmatpush2.msra.mxu0 %v2737
    %2739 = vmatprep.subr.mxu0 0.0
    %v2740 = vand.u32 %v96, 4294901760
    %2741 = vmatpush2.msra.mxu0 %v2740
    %2742 = vmatprep.subr.mxu0 0.0
    %v2743 = vand.u32 %v95, 4294901760
    %2744 = vmatpush2.msra.mxu0 %v2743
    %2745 = vmatprep.subr.mxu0 0.0
    %v2746 = vand.u32 %v94, 4294901760
    %2747 = vmatpush2.msra.mxu0 %v2746
    %2748 = vmatprep.subr.mxu0 0.0
    %v2749 = vand.u32 %v93, 4294901760
    %2750 = vmatpush2.msra.mxu0 %v2749
    %2751 = vmatprep.subr.mxu0 0.0
    %v2752 = vand.u32 %v92, 4294901760
    %2753 = vmatpush2.msra.mxu0 %v2752
    %2754 = vmatprep.subr.mxu0 0.0
    %v2755 = vand.u32 %v91, 4294901760
    %2756 = vmatpush2.msra.mxu0 %v2755
    %2757 = vmatprep.subr.mxu0 0.0
    %v2758 = vand.u32 %v90, 4294901760
    %2759 = vmatpush2.msra.mxu0 %v2758
    %2760 = vmatprep.subr.mxu0 0.0
    %v2761 = vand.u32 %v89, 4294901760
    %2762 = vmatpush2.msra.mxu0 %v2761
    %2763 = vmatprep.subr.mxu0 0.0
    %v2764 = vand.u32 %v88, 4294901760
    %2765 = vmatpush2.msra.mxu0 %v2764
    %2766 = vmatprep.subr.mxu0 0.0
    %v2767 = vand.u32 %v87, 4294901760
    %2768 = vmatpush2.msra.mxu0 %v2767
    %2769 = vmatprep.subr.mxu0 0.0
    %v2770 = vand.u32 %v86, 4294901760
    %2771 = vmatpush2.msra.mxu0 %v2770
    %2772 = vmatprep.subr.mxu0 0.0
    %v2773 = vand.u32 %v85, 4294901760
    %2774 = vmatpush2.msra.mxu0 %v2773
    %2775 = vmatprep.subr.mxu0 0.0
    %v2776 = vand.u32 %v84, 4294901760
    %2777 = vmatpush2.msra.mxu0 %v2776
    %2778 = vmatprep.subr.mxu0 0.0
    %v2779 = vand.u32 %v83, 4294901760
    %2780 = vmatpush2.msra.mxu0 %v2779
    %2781 = vmatprep.subr.mxu0 0.0
    %v2782 = vand.u32 %v82, 4294901760
    %2783 = vmatpush2.msra.mxu0 %v2782
    %v2784 = vand.u32 %v1825, 4294901760
    %v2785 = vsub.f32 %v1825, %v2784
    %v2786 = vand.u32 %v2785, 4294901760
    %v2787 = vsub.f32 %v2785, %v2786
    %v2788 = vand.u32 %v2787, 4294901760
    %2789 = vmatprep.mubr.f32.mxu0 %v2788
    %v2790 = vand.u32 %v1824, 4294901760
    %v2791 = vsub.f32 %v1824, %v2790
    %v2792 = vand.u32 %v2791, 4294901760
    %v2793 = vsub.f32 %v2791, %v2792
    %v2794 = vand.u32 %v2793, 4294901760
    %2795 = vmatmul.mubr.f32.gmra.mxu0 %v2794
    %v2796 = vpop.f32.mrf.mxu0
    %v2797 = vadd.f32 %v2685, %v2796
    %v2798 = vpop.f32.mrf.mxu0
    %2799 = vdwg.mxu0
    %2800 = vmatprep.subr.mxu0 0.0
    %v2801 = vand.u32 %v81, 4294901760
    %v2802 = vsub.f32 %v81, %v2801
    %v2803 = vand.u32 %v2802, 4294901760
    %v2804 = vsub.f32 %v2802, %v2803
    %v2805 = vand.u32 %v2804, 4294901760
    %2806 = vmatpush1.msra.mxu0 %v2805
    %2807 = vmatprep.subr.mxu0 0.0
    %v2808 = vand.u32 %v80, 4294901760
    %v2809 = vsub.f32 %v80, %v2808
    %v2810 = vand.u32 %v2809, 4294901760
    %v2811 = vsub.f32 %v2809, %v2810
    %v2812 = vand.u32 %v2811, 4294901760
    %2813 = vmatpush1.msra.mxu0 %v2812
    %2814 = vmatprep.subr.mxu0 0.0
    %v2815 = vand.u32 %v79, 4294901760
    %v2816 = vsub.f32 %v79, %v2815
    %v2817 = vand.u32 %v2816, 4294901760
    %v2818 = vsub.f32 %v2816, %v2817
    %v2819 = vand.u32 %v2818, 4294901760
    %2820 = vmatpush1.msra.mxu0 %v2819
    %2821 = vmatprep.subr.mxu0 0.0
    %v2822 = vand.u32 %v78, 4294901760
    %v2823 = vsub.f32 %v78, %v2822
    %v2824 = vand.u32 %v2823, 4294901760
    %v2825 = vsub.f32 %v2823, %v2824
    %v2826 = vand.u32 %v2825, 4294901760
    %2827 = vmatpush1.msra.mxu0 %v2826
    %2828 = vmatprep.subr.mxu0 0.0
    %v2829 = vand.u32 %v77, 4294901760
    %v2830 = vsub.f32 %v77, %v2829
    %v2831 = vand.u32 %v2830, 4294901760
    %v2832 = vsub.f32 %v2830, %v2831
    %v2833 = vand.u32 %v2832, 4294901760
    %2834 = vmatpush1.msra.mxu0 %v2833
    %2835 = vmatprep.subr.mxu0 0.0
    %v2836 = vand.u32 %v76, 4294901760
    %v2837 = vsub.f32 %v76, %v2836
    %v2838 = vand.u32 %v2837, 4294901760
    %v2839 = vsub.f32 %v2837, %v2838
    %v2840 = vand.u32 %v2839, 4294901760
    %2841 = vmatpush1.msra.mxu0 %v2840
    %2842 = vmatprep.subr.mxu0 0.0
    %v2843 = vand.u32 %v75, 4294901760
    %v2844 = vsub.f32 %v75, %v2843
    %v2845 = vand.u32 %v2844, 4294901760
    %v2846 = vsub.f32 %v2844, %v2845
    %v2847 = vand.u32 %v2846, 4294901760
    %2848 = vmatpush1.msra.mxu0 %v2847
    %2849 = vmatprep.subr.mxu0 0.0
    %v2850 = vand.u32 %v74, 4294901760
    %v2851 = vsub.f32 %v74, %v2850
    %v2852 = vand.u32 %v2851, 4294901760
    %v2853 = vsub.f32 %v2851, %v2852
    %v2854 = vand.u32 %v2853, 4294901760
    %2855 = vmatpush1.msra.mxu0 %v2854
    %2856 = vmatprep.subr.mxu0 0.0
    %v2857 = vand.u32 %v73, 4294901760
    %v2858 = vsub.f32 %v73, %v2857
    %v2859 = vand.u32 %v2858, 4294901760
    %v2860 = vsub.f32 %v2858, %v2859
    %v2861 = vand.u32 %v2860, 4294901760
    %2862 = vmatpush1.msra.mxu0 %v2861
    %2863 = vmatprep.subr.mxu0 0.0
    %v2864 = vand.u32 %v72, 4294901760
    %v2865 = vsub.f32 %v72, %v2864
    %v2866 = vand.u32 %v2865, 4294901760
    %v2867 = vsub.f32 %v2865, %v2866
    %v2868 = vand.u32 %v2867, 4294901760
    %2869 = vmatpush1.msra.mxu0 %v2868
    %2870 = vmatprep.subr.mxu0 0.0
    %v2871 = vand.u32 %v71, 4294901760
    %v2872 = vsub.f32 %v71, %v2871
    %v2873 = vand.u32 %v2872, 4294901760
    %v2874 = vsub.f32 %v2872, %v2873
    %v2875 = vand.u32 %v2874, 4294901760
    %2876 = vmatpush1.msra.mxu0 %v2875
    %2877 = vmatprep.subr.mxu0 0.0
    %v2878 = vand.u32 %v70, 4294901760
    %v2879 = vsub.f32 %v70, %v2878
    %v2880 = vand.u32 %v2879, 4294901760
    %v2881 = vsub.f32 %v2879, %v2880
    %v2882 = vand.u32 %v2881, 4294901760
    %2883 = vmatpush1.msra.mxu0 %v2882
    %2884 = vmatprep.subr.mxu0 0.0
    %v2885 = vand.u32 %v69, 4294901760
    %v2886 = vsub.f32 %v69, %v2885
    %v2887 = vand.u32 %v2886, 4294901760
    %v2888 = vsub.f32 %v2886, %v2887
    %v2889 = vand.u32 %v2888, 4294901760
    %2890 = vmatpush1.msra.mxu0 %v2889
    %2891 = vmatprep.subr.mxu0 0.0
    %v2892 = vand.u32 %v68, 4294901760
    %v2893 = vsub.f32 %v68, %v2892
    %v2894 = vand.u32 %v2893, 4294901760
    %v2895 = vsub.f32 %v2893, %v2894
    %v2896 = vand.u32 %v2895, 4294901760
    %2897 = vmatpush1.msra.mxu0 %v2896
    %2898 = vmatprep.subr.mxu0 0.0
    %v2899 = vand.u32 %v67, 4294901760
    %v2900 = vsub.f32 %v67, %v2899
    %v2901 = vand.u32 %v2900, 4294901760
    %v2902 = vsub.f32 %v2900, %v2901
    %v2903 = vand.u32 %v2902, 4294901760
    %2904 = vmatpush1.msra.mxu0 %v2903
    %2905 = vmatprep.subr.mxu0 0.0
    %v2906 = vand.u32 %v66, 4294901760
    %v2907 = vsub.f32 %v66, %v2906
    %v2908 = vand.u32 %v2907, 4294901760
    %v2909 = vsub.f32 %v2907, %v2908
    %v2910 = vand.u32 %v2909, 4294901760
    %2911 = vmatpush1.msra.mxu0 %v2910
    %2912 = vmatprep.subr.mxu0 0.0
    %v2913 = vand.u32 %v97, 4294901760
    %v2914 = vsub.f32 %v97, %v2913
    %v2915 = vand.u32 %v2914, 4294901760
    %v2916 = vsub.f32 %v2914, %v2915
    %v2917 = vand.u32 %v2916, 4294901760
    %2918 = vmatpush2.msra.mxu0 %v2917
    %2919 = vmatprep.subr.mxu0 0.0
    %v2920 = vand.u32 %v96, 4294901760
    %v2921 = vsub.f32 %v96, %v2920
    %v2922 = vand.u32 %v2921, 4294901760
    %v2923 = vsub.f32 %v2921, %v2922
    %v2924 = vand.u32 %v2923, 4294901760
    %2925 = vmatpush2.msra.mxu0 %v2924
    %2926 = vmatprep.subr.mxu0 0.0
    %v2927 = vand.u32 %v95, 4294901760
    %v2928 = vsub.f32 %v95, %v2927
    %v2929 = vand.u32 %v2928, 4294901760
    %v2930 = vsub.f32 %v2928, %v2929
    %v2931 = vand.u32 %v2930, 4294901760
    %2932 = vmatpush2.msra.mxu0 %v2931
    %2933 = vmatprep.subr.mxu0 0.0
    %v2934 = vand.u32 %v94, 4294901760
    %v2935 = vsub.f32 %v94, %v2934
    %v2936 = vand.u32 %v2935, 4294901760
    %v2937 = vsub.f32 %v2935, %v2936
    %v2938 = vand.u32 %v2937, 4294901760
    %2939 = vmatpush2.msra.mxu0 %v2938
    %2940 = vmatprep.subr.mxu0 0.0
    %v2941 = vand.u32 %v93, 4294901760
    %v2942 = vsub.f32 %v93, %v2941
    %v2943 = vand.u32 %v2942, 4294901760
    %v2944 = vsub.f32 %v2942, %v2943
    %v2945 = vand.u32 %v2944, 4294901760
    %2946 = vmatpush2.msra.mxu0 %v2945
    %2947 = vmatprep.subr.mxu0 0.0
    %v2948 = vand.u32 %v92, 4294901760
    %v2949 = vsub.f32 %v92, %v2948
    %v2950 = vand.u32 %v2949, 4294901760
    %v2951 = vsub.f32 %v2949, %v2950
    %v2952 = vand.u32 %v2951, 4294901760
    %2953 = vmatpush2.msra.mxu0 %v2952
    %2954 = vmatprep.subr.mxu0 0.0
    %v2955 = vand.u32 %v91, 4294901760
    %v2956 = vsub.f32 %v91, %v2955
    %v2957 = vand.u32 %v2956, 4294901760
    %v2958 = vsub.f32 %v2956, %v2957
    %v2959 = vand.u32 %v2958, 4294901760
    %2960 = vmatpush2.msra.mxu0 %v2959
    %2961 = vmatprep.subr.mxu0 0.0
    %v2962 = vand.u32 %v90, 4294901760
    %v2963 = vsub.f32 %v90, %v2962
    %v2964 = vand.u32 %v2963, 4294901760
    %v2965 = vsub.f32 %v2963, %v2964
    %v2966 = vand.u32 %v2965, 4294901760
    %2967 = vmatpush2.msra.mxu0 %v2966
    %2968 = vmatprep.subr.mxu0 0.0
    %v2969 = vand.u32 %v89, 4294901760
    %v2970 = vsub.f32 %v89, %v2969
    %v2971 = vand.u32 %v2970, 4294901760
    %v2972 = vsub.f32 %v2970, %v2971
    %v2973 = vand.u32 %v2972, 4294901760
    %2974 = vmatpush2.msra.mxu0 %v2973
    %2975 = vmatprep.subr.mxu0 0.0
    %v2976 = vand.u32 %v88, 4294901760
    %v2977 = vsub.f32 %v88, %v2976
    %v2978 = vand.u32 %v2977, 4294901760
    %v2979 = vsub.f32 %v2977, %v2978
    %v2980 = vand.u32 %v2979, 4294901760
    %2981 = vmatpush2.msra.mxu0 %v2980
    %2982 = vmatprep.subr.mxu0 0.0
    %v2983 = vand.u32 %v87, 4294901760
    %v2984 = vsub.f32 %v87, %v2983
    %v2985 = vand.u32 %v2984, 4294901760
    %v2986 = vsub.f32 %v2984, %v2985
    %v2987 = vand.u32 %v2986, 4294901760
    %2988 = vmatpush2.msra.mxu0 %v2987
    %2989 = vmatprep.subr.mxu0 0.0
    %v2990 = vand.u32 %v86, 4294901760
    %v2991 = vsub.f32 %v86, %v2990
    %v2992 = vand.u32 %v2991, 4294901760
    %v2993 = vsub.f32 %v2991, %v2992
    %v2994 = vand.u32 %v2993, 4294901760
    %2995 = vmatpush2.msra.mxu0 %v2994
    %2996 = vmatprep.subr.mxu0 0.0
    %v2997 = vand.u32 %v85, 4294901760
    %v2998 = vsub.f32 %v85, %v2997
    %v2999 = vand.u32 %v2998, 4294901760
    %v3000 = vsub.f32 %v2998, %v2999
    %v3001 = vand.u32 %v3000, 4294901760
    %3002 = vmatpush2.msra.mxu0 %v3001
    %3003 = vmatprep.subr.mxu0 0.0
    %v3004 = vand.u32 %v84, 4294901760
    %v3005 = vsub.f32 %v84, %v3004
    %v3006 = vand.u32 %v3005, 4294901760
    %v3007 = vsub.f32 %v3005, %v3006
    %v3008 = vand.u32 %v3007, 4294901760
    %3009 = vmatpush2.msra.mxu0 %v3008
    %3010 = vmatprep.subr.mxu0 0.0
    %v3011 = vand.u32 %v83, 4294901760
    %v3012 = vsub.f32 %v83, %v3011
    %v3013 = vand.u32 %v3012, 4294901760
    %v3014 = vsub.f32 %v3012, %v3013
    %v3015 = vand.u32 %v3014, 4294901760
    %3016 = vmatpush2.msra.mxu0 %v3015
    %3017 = vmatprep.subr.mxu0 0.0
    %v3018 = vand.u32 %v82, 4294901760
    %v3019 = vsub.f32 %v82, %v3018
    %v3020 = vand.u32 %v3019, 4294901760
    %v3021 = vsub.f32 %v3019, %v3020
    %v3022 = vand.u32 %v3021, 4294901760
    %3023 = vmatpush2.msra.mxu0 %v3022
    %v3024 = vand.u32 %v1825, 4294901760
    %3025 = vmatprep.mubr.f32.mxu0 %v3024
    %v3026 = vand.u32 %v1824, 4294901760
    %3027 = vmatmul.mubr.f32.gmra.mxu0 %v3026
    %v3028 = vpop.f32.mrf.mxu0
    %v3029 = vadd.f32 %v2797, %v3028
    %v3030 = vpop.f32.mrf.mxu0
    %3031 = vdwg.mxu0
    %3032 = vmatprep.subr.mxu0 0.0
    %v3033 = vand.u32 %v81, 4294901760
    %v3034 = vsub.f32 %v81, %v3033
    %3035 = vmatpush1.msra.mxu0 %v3034
    %3036 = vmatprep.subr.mxu0 0.0
    %v3037 = vand.u32 %v80, 4294901760
    %v3038 = vsub.f32 %v80, %v3037
    %3039 = vmatpush1.msra.mxu0 %v3038
    %3040 = vmatprep.subr.mxu0 0.0
    %v3041 = vand.u32 %v79, 4294901760
    %v3042 = vsub.f32 %v79, %v3041
    %3043 = vmatpush1.msra.mxu0 %v3042
    %3044 = vmatprep.subr.mxu0 0.0
    %v3045 = vand.u32 %v78, 4294901760
    %v3046 = vsub.f32 %v78, %v3045
    %3047 = vmatpush1.msra.mxu0 %v3046
    %3048 = vmatprep.subr.mxu0 0.0
    %v3049 = vand.u32 %v77, 4294901760
    %v3050 = vsub.f32 %v77, %v3049
    %3051 = vmatpush1.msra.mxu0 %v3050
    %3052 = vmatprep.subr.mxu0 0.0
    %v3053 = vand.u32 %v76, 4294901760
    %v3054 = vsub.f32 %v76, %v3053
    %3055 = vmatpush1.msra.mxu0 %v3054
    %3056 = vmatprep.subr.mxu0 0.0
    %v3057 = vand.u32 %v75, 4294901760
    %v3058 = vsub.f32 %v75, %v3057
    %3059 = vmatpush1.msra.mxu0 %v3058
    %3060 = vmatprep.subr.mxu0 0.0
    %v3061 = vand.u32 %v74, 4294901760
    %v3062 = vsub.f32 %v74, %v3061
    %3063 = vmatpush1.msra.mxu0 %v3062
    %3064 = vmatprep.subr.mxu0 0.0
    %v3065 = vand.u32 %v73, 4294901760
    %v3066 = vsub.f32 %v73, %v3065
    %3067 = vmatpush1.msra.mxu0 %v3066
    %3068 = vmatprep.subr.mxu0 0.0
    %v3069 = vand.u32 %v72, 4294901760
    %v3070 = vsub.f32 %v72, %v3069
    %3071 = vmatpush1.msra.mxu0 %v3070
    %3072 = vmatprep.subr.mxu0 0.0
    %v3073 = vand.u32 %v71, 4294901760
    %v3074 = vsub.f32 %v71, %v3073
    %3075 = vmatpush1.msra.mxu0 %v3074
    %3076 = vmatprep.subr.mxu0 0.0
    %v3077 = vand.u32 %v70, 4294901760
    %v3078 = vsub.f32 %v70, %v3077
    %3079 = vmatpush1.msra.mxu0 %v3078
    %3080 = vmatprep.subr.mxu0 0.0
    %v3081 = vand.u32 %v69, 4294901760
    %v3082 = vsub.f32 %v69, %v3081
    %3083 = vmatpush1.msra.mxu0 %v3082
    %3084 = vmatprep.subr.mxu0 0.0
    %v3085 = vand.u32 %v68, 4294901760
    %v3086 = vsub.f32 %v68, %v3085
    %3087 = vmatpush1.msra.mxu0 %v3086
    %3088 = vmatprep.subr.mxu0 0.0
    %v3089 = vand.u32 %v67, 4294901760
    %v3090 = vsub.f32 %v67, %v3089
    %3091 = vmatpush1.msra.mxu0 %v3090
    %3092 = vmatprep.subr.mxu0 0.0
    %v3093 = vand.u32 %v66, 4294901760
    %v3094 = vsub.f32 %v66, %v3093
    %3095 = vmatpush1.msra.mxu0 %v3094
    %3096 = vmatprep.subr.mxu0 0.0
    %v3097 = vand.u32 %v97, 4294901760
    %v3098 = vsub.f32 %v97, %v3097
    %3099 = vmatpush2.msra.mxu0 %v3098
    %3100 = vmatprep.subr.mxu0 0.0
    %v3101 = vand.u32 %v96, 4294901760
    %v3102 = vsub.f32 %v96, %v3101
    %3103 = vmatpush2.msra.mxu0 %v3102
    %3104 = vmatprep.subr.mxu0 0.0
    %v3105 = vand.u32 %v95, 4294901760
    %v3106 = vsub.f32 %v95, %v3105
    %3107 = vmatpush2.msra.mxu0 %v3106
    %3108 = vmatprep.subr.mxu0 0.0
    %v3109 = vand.u32 %v94, 4294901760
    %v3110 = vsub.f32 %v94, %v3109
    %3111 = vmatpush2.msra.mxu0 %v3110
    %3112 = vmatprep.subr.mxu0 0.0
    %v3113 = vand.u32 %v93, 4294901760
    %v3114 = vsub.f32 %v93, %v3113
    %3115 = vmatpush2.msra.mxu0 %v3114
    %3116 = vmatprep.subr.mxu0 0.0
    %v3117 = vand.u32 %v92, 4294901760
    %v3118 = vsub.f32 %v92, %v3117
    %3119 = vmatpush2.msra.mxu0 %v3118
    %3120 = vmatprep.subr.mxu0 0.0
    %v3121 = vand.u32 %v91, 4294901760
    %v3122 = vsub.f32 %v91, %v3121
    %3123 = vmatpush2.msra.mxu0 %v3122
    %3124 = vmatprep.subr.mxu0 0.0
    %v3125 = vand.u32 %v90, 4294901760
    %v3126 = vsub.f32 %v90, %v3125
    %3127 = vmatpush2.msra.mxu0 %v3126
    %3128 = vmatprep.subr.mxu0 0.0
    %v3129 = vand.u32 %v89, 4294901760
    %v3130 = vsub.f32 %v89, %v3129
    %3131 = vmatpush2.msra.mxu0 %v3130
    %3132 = vmatprep.subr.mxu0 0.0
    %v3133 = vand.u32 %v88, 4294901760
    %v3134 = vsub.f32 %v88, %v3133
    %3135 = vmatpush2.msra.mxu0 %v3134
    %3136 = vmatprep.subr.mxu0 0.0
    %v3137 = vand.u32 %v87, 4294901760
    %v3138 = vsub.f32 %v87, %v3137
    %3139 = vmatpush2.msra.mxu0 %v3138
    %3140 = vmatprep.subr.mxu0 0.0
    %v3141 = vand.u32 %v86, 4294901760
    %v3142 = vsub.f32 %v86, %v3141
    %3143 = vmatpush2.msra.mxu0 %v3142
    %3144 = vmatprep.subr.mxu0 0.0
    %v3145 = vand.u32 %v85, 4294901760
    %v3146 = vsub.f32 %v85, %v3145
    %3147 = vmatpush2.msra.mxu0 %v3146
    %3148 = vmatprep.subr.mxu0 0.0
    %v3149 = vand.u32 %v84, 4294901760
    %v3150 = vsub.f32 %v84, %v3149
    %3151 = vmatpush2.msra.mxu0 %v3150
    %3152 = vmatprep.subr.mxu0 0.0
    %v3153 = vand.u32 %v83, 4294901760
    %v3154 = vsub.f32 %v83, %v3153
    %3155 = vmatpush2.msra.mxu0 %v3154
    %3156 = vmatprep.subr.mxu0 0.0
    %v3157 = vand.u32 %v82, 4294901760
    %v3158 = vsub.f32 %v82, %v3157
    %3159 = vmatpush2.msra.mxu0 %v3158
    %v3160 = vand.u32 %v1825, 4294901760
    %v3161 = vsub.f32 %v1825, %v3160
    %3162 = vmatprep.mubr.f32.mxu0 %v3161
    %v3163 = vand.u32 %v1824, 4294901760
    %v3164 = vsub.f32 %v1824, %v3163
    %3165 = vmatmul.mubr.f32.gmra.mxu0 %v3164
    %v3166 = vpop.f32.mrf.mxu0
    %v3167 = vadd.f32 %v3029, %v3166
    %v3168 = vpop.f32.mrf.mxu0
    %3169 = vdwg.mxu0
    %3170 = vmatprep.subr.mxu0 0.0
    %v3171 = vand.u32 %v81, 4294901760
    %3172 = vmatpush1.msra.mxu0 %v3171
    %3173 = vmatprep.subr.mxu0 0.0
    %v3174 = vand.u32 %v80, 4294901760
    %3175 = vmatpush1.msra.mxu0 %v3174
    %3176 = vmatprep.subr.mxu0 0.0
    %v3177 = vand.u32 %v79, 4294901760
    %3178 = vmatpush1.msra.mxu0 %v3177
    %3179 = vmatprep.subr.mxu0 0.0
    %v3180 = vand.u32 %v78, 4294901760
    %3181 = vmatpush1.msra.mxu0 %v3180
    %3182 = vmatprep.subr.mxu0 0.0
    %v3183 = vand.u32 %v77, 4294901760
    %3184 = vmatpush1.msra.mxu0 %v3183
    %3185 = vmatprep.subr.mxu0 0.0
    %v3186 = vand.u32 %v76, 4294901760
    %3187 = vmatpush1.msra.mxu0 %v3186
    %3188 = vmatprep.subr.mxu0 0.0
    %v3189 = vand.u32 %v75, 4294901760
    %3190 = vmatpush1.msra.mxu0 %v3189
    %3191 = vmatprep.subr.mxu0 0.0
    %v3192 = vand.u32 %v74, 4294901760
    %3193 = vmatpush1.msra.mxu0 %v3192
    %3194 = vmatprep.subr.mxu0 0.0
    %v3195 = vand.u32 %v73, 4294901760
    %3196 = vmatpush1.msra.mxu0 %v3195
    %3197 = vmatprep.subr.mxu0 0.0
    %v3198 = vand.u32 %v72, 4294901760
    %3199 = vmatpush1.msra.mxu0 %v3198
    %3200 = vmatprep.subr.mxu0 0.0
    %v3201 = vand.u32 %v71, 4294901760
    %3202 = vmatpush1.msra.mxu0 %v3201
    %3203 = vmatprep.subr.mxu0 0.0
    %v3204 = vand.u32 %v70, 4294901760
    %3205 = vmatpush1.msra.mxu0 %v3204
    %3206 = vmatprep.subr.mxu0 0.0
    %v3207 = vand.u32 %v69, 4294901760
    %3208 = vmatpush1.msra.mxu0 %v3207
    %3209 = vmatprep.subr.mxu0 0.0
    %v3210 = vand.u32 %v68, 4294901760
    %3211 = vmatpush1.msra.mxu0 %v3210
    %3212 = vmatprep.subr.mxu0 0.0
    %v3213 = vand.u32 %v67, 4294901760
    %3214 = vmatpush1.msra.mxu0 %v3213
    %3215 = vmatprep.subr.mxu0 0.0
    %v3216 = vand.u32 %v66, 4294901760
    %3217 = vmatpush1.msra.mxu0 %v3216
    %3218 = vmatprep.subr.mxu0 0.0
    %v3219 = vand.u32 %v97, 4294901760
    %3220 = vmatpush2.msra.mxu0 %v3219
    %3221 = vmatprep.subr.mxu0 0.0
    %v3222 = vand.u32 %v96, 4294901760
    %3223 = vmatpush2.msra.mxu0 %v3222
    %3224 = vmatprep.subr.mxu0 0.0
    %v3225 = vand.u32 %v95, 4294901760
    %3226 = vmatpush2.msra.mxu0 %v3225
    %3227 = vmatprep.subr.mxu0 0.0
    %v3228 = vand.u32 %v94, 4294901760
    %3229 = vmatpush2.msra.mxu0 %v3228
    %3230 = vmatprep.subr.mxu0 0.0
    %v3231 = vand.u32 %v93, 4294901760
    %3232 = vmatpush2.msra.mxu0 %v3231
    %3233 = vmatprep.subr.mxu0 0.0
    %v3234 = vand.u32 %v92, 4294901760
    %3235 = vmatpush2.msra.mxu0 %v3234
    %3236 = vmatprep.subr.mxu0 0.0
    %v3237 = vand.u32 %v91, 4294901760
    %3238 = vmatpush2.msra.mxu0 %v3237
    %3239 = vmatprep.subr.mxu0 0.0
    %v3240 = vand.u32 %v90, 4294901760
    %3241 = vmatpush2.msra.mxu0 %v3240
    %3242 = vmatprep.subr.mxu0 0.0
    %v3243 = vand.u32 %v89, 4294901760
    %3244 = vmatpush2.msra.mxu0 %v3243
    %3245 = vmatprep.subr.mxu0 0.0
    %v3246 = vand.u32 %v88, 4294901760
    %3247 = vmatpush2.msra.mxu0 %v3246
    %3248 = vmatprep.subr.mxu0 0.0
    %v3249 = vand.u32 %v87, 4294901760
    %3250 = vmatpush2.msra.mxu0 %v3249
    %3251 = vmatprep.subr.mxu0 0.0
    %v3252 = vand.u32 %v86, 4294901760
    %3253 = vmatpush2.msra.mxu0 %v3252
    %3254 = vmatprep.subr.mxu0 0.0
    %v3255 = vand.u32 %v85, 4294901760
    %3256 = vmatpush2.msra.mxu0 %v3255
    %3257 = vmatprep.subr.mxu0 0.0
    %v3258 = vand.u32 %v84, 4294901760
    %3259 = vmatpush2.msra.mxu0 %v3258
    %3260 = vmatprep.subr.mxu0 0.0
    %v3261 = vand.u32 %v83, 4294901760
    %3262 = vmatpush2.msra.mxu0 %v3261
    %3263 = vmatprep.subr.mxu0 0.0
    %v3264 = vand.u32 %v82, 4294901760
    %3265 = vmatpush2.msra.mxu0 %v3264
    %v3266 = vand.u32 %v1825, 4294901760
    %v3267 = vsub.f32 %v1825, %v3266
    %v3268 = vand.u32 %v3267, 4294901760
    %3269 = vmatprep.mubr.f32.mxu0 %v3268
    %v3270 = vand.u32 %v1824, 4294901760
    %v3271 = vsub.f32 %v1824, %v3270
    %v3272 = vand.u32 %v3271, 4294901760
    %3273 = vmatmul.mubr.f32.gmra.mxu0 %v3272
    %v3274 = vpop.f32.mrf.mxu0
    %v3275 = vadd.f32 %v3167, %v3274
    %v3276 = vpop.f32.mrf.mxu0
    %3277 = vdwg.mxu0
    %3278 = vmatprep.subr.mxu0 0.0
    %v3279 = vand.u32 %v81, 4294901760
    %v3280 = vsub.f32 %v81, %v3279
    %v3281 = vand.u32 %v3280, 4294901760
    %3282 = vmatpush1.msra.mxu0 %v3281
    %3283 = vmatprep.subr.mxu0 0.0
    %v3284 = vand.u32 %v80, 4294901760
    %v3285 = vsub.f32 %v80, %v3284
    %v3286 = vand.u32 %v3285, 4294901760
    %3287 = vmatpush1.msra.mxu0 %v3286
    %3288 = vmatprep.subr.mxu0 0.0
    %v3289 = vand.u32 %v79, 4294901760
    %v3290 = vsub.f32 %v79, %v3289
    %v3291 = vand.u32 %v3290, 4294901760
    %3292 = vmatpush1.msra.mxu0 %v3291
    %3293 = vmatprep.subr.mxu0 0.0
    %v3294 = vand.u32 %v78, 4294901760
    %v3295 = vsub.f32 %v78, %v3294
    %v3296 = vand.u32 %v3295, 4294901760
    %3297 = vmatpush1.msra.mxu0 %v3296
    %3298 = vmatprep.subr.mxu0 0.0
    %v3299 = vand.u32 %v77, 4294901760
    %v3300 = vsub.f32 %v77, %v3299
    %v3301 = vand.u32 %v3300, 4294901760
    %3302 = vmatpush1.msra.mxu0 %v3301
    %3303 = vmatprep.subr.mxu0 0.0
    %v3304 = vand.u32 %v76, 4294901760
    %v3305 = vsub.f32 %v76, %v3304
    %v3306 = vand.u32 %v3305, 4294901760
    %3307 = vmatpush1.msra.mxu0 %v3306
    %3308 = vmatprep.subr.mxu0 0.0
    %v3309 = vand.u32 %v75, 4294901760
    %v3310 = vsub.f32 %v75, %v3309
    %v3311 = vand.u32 %v3310, 4294901760
    %3312 = vmatpush1.msra.mxu0 %v3311
    %3313 = vmatprep.subr.mxu0 0.0
    %v3314 = vand.u32 %v74, 4294901760
    %v3315 = vsub.f32 %v74, %v3314
    %v3316 = vand.u32 %v3315, 4294901760
    %3317 = vmatpush1.msra.mxu0 %v3316
    %3318 = vmatprep.subr.mxu0 0.0
    %v3319 = vand.u32 %v73, 4294901760
    %v3320 = vsub.f32 %v73, %v3319
    %v3321 = vand.u32 %v3320, 4294901760
    %3322 = vmatpush1.msra.mxu0 %v3321
    %3323 = vmatprep.subr.mxu0 0.0
    %v3324 = vand.u32 %v72, 4294901760
    %v3325 = vsub.f32 %v72, %v3324
    %v3326 = vand.u32 %v3325, 4294901760
    %3327 = vmatpush1.msra.mxu0 %v3326
    %3328 = vmatprep.subr.mxu0 0.0
    %v3329 = vand.u32 %v71, 4294901760
    %v3330 = vsub.f32 %v71, %v3329
    %v3331 = vand.u32 %v3330, 4294901760
    %3332 = vmatpush1.msra.mxu0 %v3331
    %3333 = vmatprep.subr.mxu0 0.0
    %v3334 = vand.u32 %v70, 4294901760
    %v3335 = vsub.f32 %v70, %v3334
    %v3336 = vand.u32 %v3335, 4294901760
    %3337 = vmatpush1.msra.mxu0 %v3336
    %3338 = vmatprep.subr.mxu0 0.0
    %v3339 = vand.u32 %v69, 4294901760
    %v3340 = vsub.f32 %v69, %v3339
    %v3341 = vand.u32 %v3340, 4294901760
    %3342 = vmatpush1.msra.mxu0 %v3341
    %3343 = vmatprep.subr.mxu0 0.0
    %v3344 = vand.u32 %v68, 4294901760
    %v3345 = vsub.f32 %v68, %v3344
    %v3346 = vand.u32 %v3345, 4294901760
    %3347 = vmatpush1.msra.mxu0 %v3346
    %3348 = vmatprep.subr.mxu0 0.0
    %v3349 = vand.u32 %v67, 4294901760
    %v3350 = vsub.f32 %v67, %v3349
    %v3351 = vand.u32 %v3350, 4294901760
    %3352 = vmatpush1.msra.mxu0 %v3351
    %3353 = vmatprep.subr.mxu0 0.0
    %v3354 = vand.u32 %v66, 4294901760
    %v3355 = vsub.f32 %v66, %v3354
    %v3356 = vand.u32 %v3355, 4294901760
    %3357 = vmatpush1.msra.mxu0 %v3356
    %3358 = vmatprep.subr.mxu0 0.0
    %v3359 = vand.u32 %v97, 4294901760
    %v3360 = vsub.f32 %v97, %v3359
    %v3361 = vand.u32 %v3360, 4294901760
    %3362 = vmatpush2.msra.mxu0 %v3361
    %3363 = vmatprep.subr.mxu0 0.0
    %v3364 = vand.u32 %v96, 4294901760
    %v3365 = vsub.f32 %v96, %v3364
    %v3366 = vand.u32 %v3365, 4294901760
    %3367 = vmatpush2.msra.mxu0 %v3366
    %3368 = vmatprep.subr.mxu0 0.0
    %v3369 = vand.u32 %v95, 4294901760
    %v3370 = vsub.f32 %v95, %v3369
    %v3371 = vand.u32 %v3370, 4294901760
    %3372 = vmatpush2.msra.mxu0 %v3371
    %3373 = vmatprep.subr.mxu0 0.0
    %v3374 = vand.u32 %v94, 4294901760
    %v3375 = vsub.f32 %v94, %v3374
    %v3376 = vand.u32 %v3375, 4294901760
    %3377 = vmatpush2.msra.mxu0 %v3376
    %3378 = vmatprep.subr.mxu0 0.0
    %v3379 = vand.u32 %v93, 4294901760
    %v3380 = vsub.f32 %v93, %v3379
    %v3381 = vand.u32 %v3380, 4294901760
    %3382 = vmatpush2.msra.mxu0 %v3381
    %3383 = vmatprep.subr.mxu0 0.0
    %v3384 = vand.u32 %v92, 4294901760
    %v3385 = vsub.f32 %v92, %v3384
    %v3386 = vand.u32 %v3385, 4294901760
    %3387 = vmatpush2.msra.mxu0 %v3386
    %3388 = vmatprep.subr.mxu0 0.0
    %v3389 = vand.u32 %v91, 4294901760
    %v3390 = vsub.f32 %v91, %v3389
    %v3391 = vand.u32 %v3390, 4294901760
    %3392 = vmatpush2.msra.mxu0 %v3391
    %3393 = vmatprep.subr.mxu0 0.0
    %v3394 = vand.u32 %v90, 4294901760
    %v3395 = vsub.f32 %v90, %v3394
    %v3396 = vand.u32 %v3395, 4294901760
    %3397 = vmatpush2.msra.mxu0 %v3396
    %3398 = vmatprep.subr.mxu0 0.0
    %v3399 = vand.u32 %v89, 4294901760
    %v3400 = vsub.f32 %v89, %v3399
    %v3401 = vand.u32 %v3400, 4294901760
    %3402 = vmatpush2.msra.mxu0 %v3401
    %3403 = vmatprep.subr.mxu0 0.0
    %v3404 = vand.u32 %v88, 4294901760
    %v3405 = vsub.f32 %v88, %v3404
    %v3406 = vand.u32 %v3405, 4294901760
    %3407 = vmatpush2.msra.mxu0 %v3406
    %3408 = vmatprep.subr.mxu0 0.0
    %v3409 = vand.u32 %v87, 4294901760
    %v3410 = vsub.f32 %v87, %v3409
    %v3411 = vand.u32 %v3410, 4294901760
    %3412 = vmatpush2.msra.mxu0 %v3411
    %3413 = vmatprep.subr.mxu0 0.0
    %v3414 = vand.u32 %v86, 4294901760
    %v3415 = vsub.f32 %v86, %v3414
    %v3416 = vand.u32 %v3415, 4294901760
    %3417 = vmatpush2.msra.mxu0 %v3416
    %3418 = vmatprep.subr.mxu0 0.0
    %v3419 = vand.u32 %v85, 4294901760
    %v3420 = vsub.f32 %v85, %v3419
    %v3421 = vand.u32 %v3420, 4294901760
    %3422 = vmatpush2.msra.mxu0 %v3421
    %3423 = vmatprep.subr.mxu0 0.0
    %v3424 = vand.u32 %v84, 4294901760
    %v3425 = vsub.f32 %v84, %v3424
    %v3426 = vand.u32 %v3425, 4294901760
    %3427 = vmatpush2.msra.mxu0 %v3426
    %3428 = vmatprep.subr.mxu0 0.0
    %v3429 = vand.u32 %v83, 4294901760
    %v3430 = vsub.f32 %v83, %v3429
    %v3431 = vand.u32 %v3430, 4294901760
    %3432 = vmatpush2.msra.mxu0 %v3431
    %3433 = vmatprep.subr.mxu0 0.0
    %v3434 = vand.u32 %v82, 4294901760
    %v3435 = vsub.f32 %v82, %v3434
    %v3436 = vand.u32 %v3435, 4294901760
    %3437 = vmatpush2.msra.mxu0 %v3436
    %v3438 = vand.u32 %v1825, 4294901760
    %3439 = vmatprep.mubr.f32.mxu0 %v3438
    %v3440 = vand.u32 %v1824, 4294901760
    %3441 = vmatmul.mubr.f32.gmra.mxu0 %v3440
    %v3442 = vpop.f32.mrf.mxu0
    %v3443 = vadd.f32 %v3275, %v3442
    %v3444 = vpop.f32.mrf.mxu0
    %3445 = vdwg.mxu0
    %3446 = vmatprep.subr.mxu0 0.0
    %v3447 = vand.u32 %v81, 4294901760
    %3448 = vmatpush1.msra.mxu0 %v3447
    %3449 = vmatprep.subr.mxu0 0.0
    %v3450 = vand.u32 %v80, 4294901760
    %3451 = vmatpush1.msra.mxu0 %v3450
    %3452 = vmatprep.subr.mxu0 0.0
    %v3453 = vand.u32 %v79, 4294901760
    %3454 = vmatpush1.msra.mxu0 %v3453
    %3455 = vmatprep.subr.mxu0 0.0
    %v3456 = vand.u32 %v78, 4294901760
    %3457 = vmatpush1.msra.mxu0 %v3456
    %3458 = vmatprep.subr.mxu0 0.0
    %v3459 = vand.u32 %v77, 4294901760
    %3460 = vmatpush1.msra.mxu0 %v3459
    %3461 = vmatprep.subr.mxu0 0.0
    %v3462 = vand.u32 %v76, 4294901760
    %3463 = vmatpush1.msra.mxu0 %v3462
    %3464 = vmatprep.subr.mxu0 0.0
    %v3465 = vand.u32 %v75, 4294901760
    %3466 = vmatpush1.msra.mxu0 %v3465
    %3467 = vmatprep.subr.mxu0 0.0
    %v3468 = vand.u32 %v74, 4294901760
    %3469 = vmatpush1.msra.mxu0 %v3468
    %3470 = vmatprep.subr.mxu0 0.0
    %v3471 = vand.u32 %v73, 4294901760
    %3472 = vmatpush1.msra.mxu0 %v3471
    %3473 = vmatprep.subr.mxu0 0.0
    %v3474 = vand.u32 %v72, 4294901760
    %3475 = vmatpush1.msra.mxu0 %v3474
    %3476 = vmatprep.subr.mxu0 0.0
    %v3477 = vand.u32 %v71, 4294901760
    %3478 = vmatpush1.msra.mxu0 %v3477
    %3479 = vmatprep.subr.mxu0 0.0
    %v3480 = vand.u32 %v70, 4294901760
    %3481 = vmatpush1.msra.mxu0 %v3480
    %3482 = vmatprep.subr.mxu0 0.0
    %v3483 = vand.u32 %v69, 4294901760
    %3484 = vmatpush1.msra.mxu0 %v3483
    %3485 = vmatprep.subr.mxu0 0.0
    %v3486 = vand.u32 %v68, 4294901760
    %3487 = vmatpush1.msra.mxu0 %v3486
    %3488 = vmatprep.subr.mxu0 0.0
    %v3489 = vand.u32 %v67, 4294901760
    %3490 = vmatpush1.msra.mxu0 %v3489
    %3491 = vmatprep.subr.mxu0 0.0
    %v3492 = vand.u32 %v66, 4294901760
    %3493 = vmatpush1.msra.mxu0 %v3492
    %3494 = vmatprep.subr.mxu0 0.0
    %v3495 = vand.u32 %v97, 4294901760
    %3496 = vmatpush2.msra.mxu0 %v3495
    %3497 = vmatprep.subr.mxu0 0.0
    %v3498 = vand.u32 %v96, 4294901760
    %3499 = vmatpush2.msra.mxu0 %v3498
    %3500 = vmatprep.subr.mxu0 0.0
    %v3501 = vand.u32 %v95, 4294901760
    %3502 = vmatpush2.msra.mxu0 %v3501
    %3503 = vmatprep.subr.mxu0 0.0
    %v3504 = vand.u32 %v94, 4294901760
    %3505 = vmatpush2.msra.mxu0 %v3504
    %3506 = vmatprep.subr.mxu0 0.0
    %v3507 = vand.u32 %v93, 4294901760
    %3508 = vmatpush2.msra.mxu0 %v3507
    %3509 = vmatprep.subr.mxu0 0.0
    %v3510 = vand.u32 %v92, 4294901760
    %3511 = vmatpush2.msra.mxu0 %v3510
    %3512 = vmatprep.subr.mxu0 0.0
    %v3513 = vand.u32 %v91, 4294901760
    %3514 = vmatpush2.msra.mxu0 %v3513
    %3515 = vmatprep.subr.mxu0 0.0
    %v3516 = vand.u32 %v90, 4294901760
    %3517 = vmatpush2.msra.mxu0 %v3516
    %3518 = vmatprep.subr.mxu0 0.0
    %v3519 = vand.u32 %v89, 4294901760
    %3520 = vmatpush2.msra.mxu0 %v3519
    %3521 = vmatprep.subr.mxu0 0.0
    %v3522 = vand.u32 %v88, 4294901760
    %3523 = vmatpush2.msra.mxu0 %v3522
    %3524 = vmatprep.subr.mxu0 0.0
    %v3525 = vand.u32 %v87, 4294901760
    %3526 = vmatpush2.msra.mxu0 %v3525
    %3527 = vmatprep.subr.mxu0 0.0
    %v3528 = vand.u32 %v86, 4294901760
    %3529 = vmatpush2.msra.mxu0 %v3528
    %3530 = vmatprep.subr.mxu0 0.0
    %v3531 = vand.u32 %v85, 4294901760
    %3532 = vmatpush2.msra.mxu0 %v3531
    %3533 = vmatprep.subr.mxu0 0.0
    %v3534 = vand.u32 %v84, 4294901760
    %3535 = vmatpush2.msra.mxu0 %v3534
    %3536 = vmatprep.subr.mxu0 0.0
    %v3537 = vand.u32 %v83, 4294901760
    %3538 = vmatpush2.msra.mxu0 %v3537
    %3539 = vmatprep.subr.mxu0 0.0
    %v3540 = vand.u32 %v82, 4294901760
    %3541 = vmatpush2.msra.mxu0 %v3540
    %v3542 = vand.u32 %v1825, 4294901760
    %3543 = vmatprep.mubr.f32.mxu0 %v3542
    %v3544 = vand.u32 %v1824, 4294901760
    %3545 = vmatmul.mubr.f32.gmra.mxu0 %v3544
    %v3546 = vpop.f32.mrf.mxu0
    %v3547 = vadd.f32 %v3443, %v3546
    %v3548 = vpop.f32.mrf.mxu0
    %3549 = vdwg.mxu0
    %v3550 = vmul.f32 %v1819, %v1819
    %v3551 = vrcp.pop %v3550
    %v3552 = vmul.f32 %v3547, %v3551
    %v3553 = vstv %s28
    %v3554 = vmul.f32 %v3553, %v3552
    %v3555 = vstv %s29
    %v3556 = vadd.f32 %v3554, %v3555
    %vm3557 = vcmask 261120
    %3558 = vst.msk [vmem:[#allocation5] sm:$0xff] %vm3557, %v3556
    // Predicated region
    $region18: #{tpu_custom_call.1} parent=1 // pred_check
      _
    $region19: #{tpu_custom_call.1} parent=1 // pred_check_branch
      %3560 = sbr.rel (0) target = $region21
    $region20: #{tpu_custom_call.1} parent=1 // pred_region
      %s3562 = ssub.s32 128, 128
      %3563 = vsyncadd [#allocation3], %s3562
      %s3565 = sshll.u32 [#allocation5], 4
      %s3566 = int_to_ptr.vmem [resolvable:$true] %s3565
      %3568 = dma.vmem_to_hbm [thread:$0]  %s3566, 128, %s3, [#allocation3]
    $region21: #{tpu_custom_call.1} parent=1 // pred_fallthru
      _
    // Predicated region
    $region22: #{tpu_custom_call.1} parent=1 // pred_check
      _
    $region23: #{tpu_custom_call.1} parent=1 // pred_check_branch
      %3570 = sbr.rel (0) target = $region25
    $region24: #{tpu_custom_call.1} parent=1 // pred_region
      %3571 = dma.done [#allocation3], 128
    $region25: #{tpu_custom_call.1} parent=1 // pred_fallthru
      _
    %3572 = vsyncpa [#allocation3], 1
    %3573 = vsyncpa [#allocation4], 1

</llo_original>
